<compile_context>
chip_gen: v5e
topology: v5e:2x2
jax: 0.10.0
libtpu: 0.0.40
codegen_flags: <defaults>
</compile_context>

<pallas_src>
import jax
import jax.numpy as jnp
from jax import lax
from jax.experimental import pallas as pl
from jax.experimental.pallas import tpu as pltpu

EPS = 1e-5


# ----------------------------------------------------------------------------------
# shared in-kernel helpers
# ----------------------------------------------------------------------------------
def _conv3x3(pad_ref, w_ref):
    """3x3 'SAME' conv on a zero-padded (1, Ho+2, Wo+2, Cin) staging buffer as nine
    shift-and-accumulate MXU matmuls (K = Cin).  Operands are cast to bf16 at the dot,
    accumulation is f32.  Returns a (Ho*Wo, Cout) f32 slab (pre-BN)."""
    _, hp, wp, cin = pad_ref.shape
    ho, wo = hp - 2, wp - 2
    cout = w_ref.shape[-1]
    acc = jnp.zeros((ho * wo, cout), jnp.float32)
    for j in range(9):
        ky, kx = divmod(j, 3)
        win = pad_ref[:, ky:ky + ho, kx:kx + wo, :].reshape(ho * wo, cin)
        acc = acc + jnp.dot(win.astype(jnp.bfloat16), w_ref[j],
                            preferred_element_type=jnp.float32)
    return acc


def _bn_scale_shift(sum_ref, ssq_ref, g_ref, be_ref, inv_r):
    """Fused training-mode BatchNorm scale/shift from global per-image partials."""
    mu = jnp.sum(sum_ref[...], axis=0) * inv_r        # (1, C) f32
    ex2 = jnp.sum(ssq_ref[...], axis=0) * inv_r
    var = jnp.maximum(ex2 - mu * mu, 0.0)             # clamp: single-pass var can cancel
    scale = g_ref[...] * lax.rsqrt(var + EPS)
    shift = be_ref[...] - mu * scale
    return scale, shift


# ----------------------------------------------------------------------------------
# pass 1: maxpool(2) + conv1 (pre-BN) + per-image BN1 partial statistics
# ----------------------------------------------------------------------------------
def pool_conv1_kernel(x_ref, w1_ref, y1_ref, sum1_ref, ssq1_ref, pad_ref):
    _, h, w, _ = x_ref.shape
    ho, wo = h // 2, w // 2
    cmid = w1_ref.shape[-1]

    # MaxPool2d(2): four strided taps straight from the NHWC block (no pre-gather).
    t00 = x_ref[:, pl.ds(0, ho, stride=2), pl.ds(0, wo, stride=2), :]
    t01 = x_ref[:, pl.ds(0, ho, stride=2), pl.ds(1, wo, stride=2), :]
    t10 = x_ref[:, pl.ds(1, ho, stride=2), pl.ds(0, wo, stride=2), :]
    t11 = x_ref[:, pl.ds(1, ho, stride=2), pl.ds(1, wo, stride=2), :]
    pooled = jnp.maximum(jnp.maximum(t00, t01), jnp.maximum(t10, t11))   # (1,ho,wo,Cin)

    # Zero-padded staging buffer.  Re-zeroed every step (trivial at this tile size and
    # correct when the parallel grid axis is split across cores); production tiles
    # would zero only the 1-pixel border.
    pad_ref[...] = jnp.zeros_like(pad_ref)
    pad_ref[:, 1:ho + 1, 1:wo + 1, :] = pooled

    acc = _conv3x3(pad_ref, w1_ref)                    # (ho*wo, cmid) f32, pre-BN
    y1_ref[...] = acc.reshape(1, ho, wo, cmid)
    # per-image BatchNorm partials; combined globally in the next pass
    sum1_ref[...] = jnp.sum(acc, axis=0, keepdims=True).reshape(1, 1, cmid)
    ssq1_ref[...] = jnp.sum(acc * acc, axis=0, keepdims=True).reshape(1, 1, cmid)


# ----------------------------------------------------------------------------------
# pass 2: BN1 (global stats) + ReLU + conv2 (pre-BN) + per-image BN2 partials
# ----------------------------------------------------------------------------------
def bn1_conv2_kernel(y1_ref, sum1_ref, ssq1_ref, g1_ref, be1_ref, w2_ref,
                     y2_ref, sum2_ref, ssq2_ref, pad_ref):
    _, ho, wo, _ = y1_ref.shape
    cout = w2_ref.shape[-1]
    # stats blocks are un-tiled, spatial block is the full pooled image -> exact mean
    inv_r = 1.0 / float(sum1_ref.shape[0] * ho * wo)

    scale, shift = _bn_scale_shift(sum1_ref, ssq1_ref, g1_ref, be1_ref, inv_r)
    h1 = jnp.maximum(y1_ref[...] * scale + shift, 0.0)          # BN1 + ReLU (f32)

    pad_ref[...] = jnp.zeros_like(pad_ref)
    pad_ref[:, 1:ho + 1, 1:wo + 1, :] = h1

    acc = _conv3x3(pad_ref, w2_ref)                             # (ho*wo, cout) f32
    y2_ref[...] = acc.reshape(1, ho, wo, cout)
    sum2_ref[...] = jnp.sum(acc, axis=0, keepdims=True).reshape(1, 1, cout)
    ssq2_ref[...] = jnp.sum(acc * acc, axis=0, keepdims=True).reshape(1, 1, cout)


# ----------------------------------------------------------------------------------
# pass 3: BN2 (global stats) + ReLU
# ----------------------------------------------------------------------------------
def bn2_relu_kernel(y2_ref, sum2_ref, ssq2_ref, g2_ref, be2_ref, o_ref):
    _, ho, wo, _ = y2_ref.shape
    inv_r = 1.0 / float(sum2_ref.shape[0] * ho * wo)
    scale, shift = _bn_scale_shift(sum2_ref, ssq2_ref, g2_ref, be2_ref, inv_r)
    o_ref[...] = jnp.maximum(y2_ref[...] * scale + shift, 0.0)


# ----------------------------------------------------------------------------------
# host-side wrapper
# ----------------------------------------------------------------------------------
def _vmem_limit_bytes():
    cap = 128 * 1024 * 1024
    try:
        cap = int(pltpu.get_tpu_info().vmem_capacity_bytes)
    except Exception:
        pass
    # ~96-100 MiB on v5e/v6e (128 MiB physical), ~48 MiB on v7x (64 MiB physical).
    return int(min(cap * 3 // 4, 100 * 1024 * 1024))


def down_forward(x_nchw, params):
    w1, b1, g1, be1, w2, b2, g2, be2 = params
    del b1, b2   # conv bias cancels exactly under training-mode (mean-subtracting) BN
    N, Cin, H, W = x_nchw.shape
    Ho, Wo = H // 2, W // 2
    Cmid, Cout = w1.shape[0], w2.shape[0]

    x = jnp.transpose(x_nchw, (0, 2, 3, 1)).astype(jnp.float32)          # NHWC
    # PyTorch (Cout, Cin, 3, 3) -> tap-major (9, Cin, Cout) bf16 MXU operands.
    w1k = jnp.transpose(w1, (2, 3, 1, 0)).reshape(9, Cin, Cmid).astype(jnp.bfloat16)
    w2k = jnp.transpose(w2, (2, 3, 1, 0)).reshape(9, Cmid, Cout).astype(jnp.bfloat16)
    row = lambda v: v.reshape(1, -1).astype(jnp.float32)

    cparams = pltpu.CompilerParams(
        dimension_semantics=("parallel",),          # batch grid axis -> megacore-shardable
        vmem_limit_bytes=_vmem_limit_bytes())

    # ---- pass 1: maxpool + conv1 (pre-BN) + per-image BN1 partials ----
    y1, sum1, ssq1 = pl.pallas_call(
        pool_conv1_kernel,
        grid=(N,),
        in_specs=[
            pl.BlockSpec((1, H, W, Cin), lambda b: (b, 0, 0, 0)),
            pl.BlockSpec((9, Cin, Cmid), lambda b: (0, 0, 0)),
        ],
        out_specs=(
            pl.BlockSpec((1, Ho, Wo, Cmid), lambda b: (b, 0, 0, 0)),
            pl.BlockSpec((1, 1, Cmid), lambda b: (b, 0, 0)),
            pl.BlockSpec((1, 1, Cmid), lambda b: (b, 0, 0)),
        ),
        out_shape=(
            jax.ShapeDtypeStruct((N, Ho, Wo, Cmid), jnp.float32),
            jax.ShapeDtypeStruct((N, 1, Cmid), jnp.float32),
            jax.ShapeDtypeStruct((N, 1, Cmid), jnp.float32),
        ),
        scratch_shapes=[pltpu.VMEM((1, Ho + 2, Wo + 2, Cin), jnp.float32)],
        compiler_params=cparams,
    )(x, w1k)

    # ---- pass 2: BN1 (global stats) + ReLU + conv2 (pre-BN) + BN2 partials ----
    y2, sum2, ssq2 = pl.pallas_call(
        bn1_conv2_kernel,
        grid=(N,),
        in_specs=[
            pl.BlockSpec((1, Ho, Wo, Cmid), lambda b: (b, 0, 0, 0)),
            pl.BlockSpec((N, 1, Cmid), lambda b: (0, 0, 0)),
            pl.BlockSpec((N, 1, Cmid), lambda b: (0, 0, 0)),
            pl.BlockSpec((1, Cmid), lambda b: (0, 0)),
            pl.BlockSpec((1, Cmid), lambda b: (0, 0)),
            pl.BlockSpec((9, Cmid, Cout), lambda b: (0, 0, 0)),
        ],
        out_specs=(
            pl.BlockSpec((1, Ho, Wo, Cout), lambda b: (b, 0, 0, 0)),
            pl.BlockSpec((1, 1, Cout), lambda b: (b, 0, 0)),
            pl.BlockSpec((1, 1, Cout), lambda b: (b, 0, 0)),
        ),
        out_shape=(
            jax.ShapeDtypeStruct((N, Ho, Wo, Cout), jnp.float32),
            jax.ShapeDtypeStruct((N, 1, Cout), jnp.float32),
            jax.ShapeDtypeStruct((N, 1, Cout), jnp.float32),
        ),
        scratch_shapes=[pltpu.VMEM((1, Ho + 2, Wo + 2, Cmid), jnp.float32)],
        compiler_params=cparams,
    )(y1, sum1, ssq1, row(g1), row(be1), w2k)

    # ---- pass 3: BN2 (global stats) + ReLU ----
    out = pl.pallas_call(
        bn2_relu_kernel,
        grid=(N,),
        in_specs=[
            pl.BlockSpec((1, Ho, Wo, Cout), lambda b: (b, 0, 0, 0)),
            pl.BlockSpec((N, 1, Cout), lambda b: (0, 0, 0)),
            pl.BlockSpec((N, 1, Cout), lambda b: (0, 0, 0)),
            pl.BlockSpec((1, Cout), lambda b: (0, 0)),
            pl.BlockSpec((1, Cout), lambda b: (0, 0)),
        ],
        out_specs=pl.BlockSpec((1, Ho, Wo, Cout), lambda b: (b, 0, 0, 0)),
        out_shape=jax.ShapeDtypeStruct((N, Ho, Wo, Cout), jnp.float32),
        compiler_params=cparams,
    )(y2, sum2, ssq2, row(g2), row(be2))

    return jnp.transpose(out, (0, 3, 1, 2))                              # NCHW


def down_reference(x_nchw, params):
    """Pure-JAX f32 reference (mirrors PyTorch Down.forward in training mode)."""
    w1, b1, g1, be1, w2, b2, g2, be2 = params
    x = jnp.transpose(x_nchw, (0, 2, 3, 1)).astype(jnp.float32)
    pooled = lax.reduce_window(x, -jnp.inf, lax.max,
                               (1, 2, 2, 1), (1, 2, 2, 1), "VALID")

    def conv_bn_relu(h, w, b, g, be):
        y = lax.conv_general_dilated(
            h, jnp.transpose(w, (2, 3, 1, 0)).astype(jnp.float32),  # HWIO
            window_strides=(1, 1), padding="SAME",
            dimension_numbers=("NHWC", "HWIO", "NHWC"))
        y = y + b.reshape(1, 1, 1, -1)
        mu = jnp.mean(y, axis=(0, 1, 2), keepdims=True)
        var = jnp.mean((y - mu) ** 2, axis=(0, 1, 2), keepdims=True)
        y = (y - mu) * lax.rsqrt(var + EPS) * g.reshape(1, 1, 1, -1) \
            + be.reshape(1, 1, 1, -1)
        return jnp.maximum(y, 0.0)

    h = conv_bn_relu(pooled, w1, b1, g1, be1)
    h = conv_bn_relu(h, w2, b2, g2, be2)
    return jnp.transpose(h, (0, 3, 1, 2))


if __name__ == "__main__":
    # Down(in_channels=4, out_channels=8) applied to x of shape (2, 4, 16, 16)
    N, Cin, H, W = 2, 4, 16, 16
    Cout = 8
    Cmid = Cout

    key = jax.random.PRNGKey(0)
    ks = jax.random.split(key, 9)
    x = jax.random.normal(ks[0], (N, Cin, H, W), jnp.float32)

    w1 = 0.3 * jax.random.normal(ks[1], (Cmid, Cin, 3, 3), jnp.float32)
    b1 = 0.1 * jax.random.normal(ks[2], (Cmid,), jnp.float32)
    g1 = 1.0 + 0.1 * jax.random.normal(ks[3], (Cmid,), jnp.float32)
    be1 = 0.1 * jax.random.normal(ks[4], (Cmid,), jnp.float32)
    w2 = 0.3 * jax.random.normal(ks[5], (Cout, Cmid, 3, 3), jnp.float32)
    b2 = 0.1 * jax.random.normal(ks[6], (Cout,), jnp.float32)
    g2 = 1.0 + 0.1 * jax.random.normal(ks[7], (Cout,), jnp.float32)
    be2 = 0.1 * jax.random.normal(ks[8], (Cout,), jnp.float32)
    params = (w1, b1, g1, be1, w2, b2, g2, be2)

    out = jax.block_until_ready(jax.jit(down_forward)(x, params))
    ref = jax.block_until_ready(down_reference(x, params))

    assert out.shape == (N, Cout, H // 2, W // 2), out.shape
    # bf16 MXU operands (f32 accumulation) vs. the pure-f32 reference: post-BN outputs
    # are unit-variance, so agreement to a few 1e-2 absolute is the expected regime.
    err = float(jnp.max(jnp.abs(out - ref)))
    assert jnp.allclose(out, ref, rtol=5e-2, atol=5e-2), err
    print("KERNEL_OK")
</pallas_src>

<mosaic_0001>
module attributes {stable_mosaic.version = 11 : i64} {
  func.func @pool_conv1_kernel(%arg0: i32, %arg1: memref<1x16x16x4xf32, #tpu.memory_space<vmem>>, %arg2: memref<9x4x8xbf16, #tpu.memory_space<vmem>>, %arg3: memref<1x8x8x8xf32, #tpu.memory_space<vmem>>, %arg4: memref<1x1x8xf32, #tpu.memory_space<vmem>>, %arg5: memref<1x1x8xf32, #tpu.memory_space<vmem>>, %arg6: memref<1x10x10x4xf32, #tpu.memory_space<vmem>>) attributes {dimension_semantics = [#tpu.dimension_semantics<parallel>], iteration_bounds = array<i64: 2>, scalar_prefetch = 0 : i64, scratch_operands = 1 : i64, tpu.core_type = #tpu.core_type<tc>, window_params = [{transform_indices = @transform_0, window_bounds = array<i64: 1, 16, 16, 4>}, {pipeline_mode = #tpu.pipeline_mode<synchronous>, transform_indices = @transform_1, window_bounds = array<i64: 9, 4, 8>}, {transform_indices = @transform_2, window_bounds = array<i64: 1, 8, 8, 8>}, {transform_indices = @transform_3, window_bounds = array<i64: 1, 1, 8>}, {transform_indices = @transform_4, window_bounds = array<i64: 1, 1, 8>}]} {
    %c0 = arith.constant 0 : index
    %c0_0 = arith.constant 0 : index
    %c0_1 = arith.constant 0 : index
    %c0_2 = arith.constant 0 : index
    %0 = tpu.strided_load %arg1[%c0, %c0_0, %c0_1, %c0_2] {strides = array<i32: 1, 2, 2, 1>} : memref<1x16x16x4xf32, #tpu.memory_space<vmem>>, vector<1x8x8x4xf32>
    %c0_3 = arith.constant 0 : index
    %c0_4 = arith.constant 0 : index
    %c1 = arith.constant 1 : index
    %c0_5 = arith.constant 0 : index
    %1 = tpu.strided_load %arg1[%c0_3, %c0_4, %c1, %c0_5] {strides = array<i32: 1, 2, 2, 1>} : memref<1x16x16x4xf32, #tpu.memory_space<vmem>>, vector<1x8x8x4xf32>
    %c0_6 = arith.constant 0 : index
    %c1_7 = arith.constant 1 : index
    %c0_8 = arith.constant 0 : index
    %c0_9 = arith.constant 0 : index
    %2 = tpu.strided_load %arg1[%c0_6, %c1_7, %c0_8, %c0_9] {strides = array<i32: 1, 2, 2, 1>} : memref<1x16x16x4xf32, #tpu.memory_space<vmem>>, vector<1x8x8x4xf32>
    %c0_10 = arith.constant 0 : index
    %c1_11 = arith.constant 1 : index
    %c1_12 = arith.constant 1 : index
    %c0_13 = arith.constant 0 : index
    %3 = tpu.strided_load %arg1[%c0_10, %c1_11, %c1_12, %c0_13] {strides = array<i32: 1, 2, 2, 1>} : memref<1x16x16x4xf32, #tpu.memory_space<vmem>>, vector<1x8x8x4xf32>
    %4 = arith.maximumf %0, %1 : vector<1x8x8x4xf32>
    %5 = arith.maximumf %2, %3 : vector<1x8x8x4xf32>
    %6 = arith.maximumf %4, %5 : vector<1x8x8x4xf32>
    %cst = arith.constant 0.000000e+00 : f32
    %7 = vector.broadcast %cst : f32 to vector<1x10x10x4xf32>
    %c0_14 = arith.constant 0 : index
    %c0_15 = arith.constant 0 : index
    %c0_16 = arith.constant 0 : index
    %c0_17 = arith.constant 0 : index
    %8 = vector.load %arg6[%c0_14, %c0_15, %c0_16, %c0_17] : memref<1x10x10x4xf32, #tpu.memory_space<vmem>>, vector<1x10x10x4xf32>
    tpu.vector_store %arg6[%c0_14, %c0_15, %c0_16, %c0_17], %7 {strides = array<i32>} : memref<1x10x10x4xf32, #tpu.memory_space<vmem>>, vector<1x10x10x4xf32>,
    %c0_18 = arith.constant 0 : index
    %c1_19 = arith.constant 1 : index
    %c1_20 = arith.constant 1 : index
    %c0_21 = arith.constant 0 : index
    %9 = vector.load %arg6[%c0_18, %c1_19, %c1_20, %c0_21] : memref<1x10x10x4xf32, #tpu.memory_space<vmem>>, vector<1x8x8x4xf32>
    tpu.vector_store %arg6[%c0_18, %c1_19, %c1_20, %c0_21], %6 {strides = array<i32>} : memref<1x10x10x4xf32, #tpu.memory_space<vmem>>, vector<1x8x8x4xf32>,
    %cst_22 = arith.constant 0.000000e+00 : f32
    %10 = vector.broadcast %cst_22 : f32 to vector<64x8xf32>
    %c0_23 = arith.constant 0 : index
    %c0_24 = arith.constant 0 : index
    %c0_25 = arith.constant 0 : index
    %c0_26 = arith.constant 0 : index
    %11 = vector.load %arg6[%c0_23, %c0_24, %c0_25, %c0_26] : memref<1x10x10x4xf32, #tpu.memory_space<vmem>>, vector<1x8x8x4xf32>
    %12 = vector.shape_cast %11 : vector<1x8x8x4xf32> to vector<64x4xf32>
    %13 = arith.truncf %12 : vector<64x4xf32> to vector<64x4xbf16>
    %c0_27 = arith.constant 0 : index
    %c0_28 = arith.constant 0 : index
    %c0_29 = arith.constant 0 : index
    %14 = vector.load %arg2[%c0_27, %c0_28, %c0_29] : memref<9x4x8xbf16, #tpu.memory_space<vmem>>, vector<1x4x8xbf16>
    %15 = vector.shape_cast %14 : vector<1x4x8xbf16> to vector<4x8xbf16>
    %cst_30 = arith.constant dense<0.000000e+00> : vector<64x8xf32>
    %16 = tpu.matmul %13, %15, %cst_30 {dimension_numbers = #tpu.dot_dimension_numbers<[1], [0], [0], [1], [0, 0, 1, 1], [], []>} : vector<64x4xbf16>, vector<4x8xbf16>, vector<64x8xf32> -> vector<64x8xf32>
    %17 = arith.addf %10, %16 : vector<64x8xf32>
    %c0_31 = arith.constant 0 : index
    %c0_32 = arith.constant 0 : index
    %c1_33 = arith.constant 1 : index
    %c0_34 = arith.constant 0 : index
    %18 = vector.load %arg6[%c0_31, %c0_32, %c1_33, %c0_34] : memref<1x10x10x4xf32, #tpu.memory_space<vmem>>, vector<1x8x8x4xf32>
    %19 = vector.shape_cast %18 : vector<1x8x8x4xf32> to vector<64x4xf32>
    %20 = arith.truncf %19 : vector<64x4xf32> to vector<64x4xbf16>
    %c1_35 = arith.constant 1 : index
    %c0_36 = arith.constant 0 : index
    %c0_37 = arith.constant 0 : index
    %21 = vector.load %arg2[%c1_35, %c0_36, %c0_37] : memref<9x4x8xbf16, #tpu.memory_space<vmem>>, vector<1x4x8xbf16>
    %22 = vector.shape_cast %21 : vector<1x4x8xbf16> to vector<4x8xbf16>
    %cst_38 = arith.constant dense<0.000000e+00> : vector<64x8xf32>
    %23 = tpu.matmul %20, %22, %cst_38 {dimension_numbers = #tpu.dot_dimension_numbers<[1], [0], [0], [1], [0, 0, 1, 1], [], []>} : vector<64x4xbf16>, vector<4x8xbf16>, vector<64x8xf32> -> vector<64x8xf32>
    %24 = arith.addf %17, %23 : vector<64x8xf32>
    %c0_39 = arith.constant 0 : index
    %c0_40 = arith.constant 0 : index
    %c2 = arith.constant 2 : index
    %c0_41 = arith.constant 0 : index
    %25 = vector.load %arg6[%c0_39, %c0_40, %c2, %c0_41] : memref<1x10x10x4xf32, #tpu.memory_space<vmem>>, vector<1x8x8x4xf32>
    %26 = vector.shape_cast %25 : vector<1x8x8x4xf32> to vector<64x4xf32>
    %27 = arith.truncf %26 : vector<64x4xf32> to vector<64x4xbf16>
    %c2_42 = arith.constant 2 : index
    %c0_43 = arith.constant 0 : index
    %c0_44 = arith.constant 0 : index
    %28 = vector.load %arg2[%c2_42, %c0_43, %c0_44] : memref<9x4x8xbf16, #tpu.memory_space<vmem>>, vector<1x4x8xbf16>
    %29 = vector.shape_cast %28 : vector<1x4x8xbf16> to vector<4x8xbf16>
    %cst_45 = arith.constant dense<0.000000e+00> : vector<64x8xf32>
    %30 = tpu.matmul %27, %29, %cst_45 {dimension_numbers = #tpu.dot_dimension_numbers<[1], [0], [0], [1], [0, 0, 1, 1], [], []>} : vector<64x4xbf16>, vector<4x8xbf16>, vector<64x8xf32> -> vector<64x8xf32>
    %31 = arith.addf %24, %30 : vector<64x8xf32>
    %c0_46 = arith.constant 0 : index
    %c1_47 = arith.constant 1 : index
    %c0_48 = arith.constant 0 : index
    %c0_49 = arith.constant 0 : index
    %32 = vector.load %arg6[%c0_46, %c1_47, %c0_48, %c0_49] : memref<1x10x10x4xf32, #tpu.memory_space<vmem>>, vector<1x8x8x4xf32>
    %33 = vector.shape_cast %32 : vector<1x8x8x4xf32> to vector<64x4xf32>
    %34 = arith.truncf %33 : vector<64x4xf32> to vector<64x4xbf16>
    %c3 = arith.constant 3 : index
    %c0_50 = arith.constant 0 : index
    %c0_51 = arith.constant 0 : index
    %35 = vector.load %arg2[%c3, %c0_50, %c0_51] : memref<9x4x8xbf16, #tpu.memory_space<vmem>>, vector<1x4x8xbf16>
    %36 = vector.shape_cast %35 : vector<1x4x8xbf16> to vector<4x8xbf16>
    %cst_52 = arith.constant dense<0.000000e+00> : vector<64x8xf32>
    %37 = tpu.matmul %34, %36, %cst_52 {dimension_numbers = #tpu.dot_dimension_numbers<[1], [0], [0], [1], [0, 0, 1, 1], [], []>} : vector<64x4xbf16>, vector<4x8xbf16>, vector<64x8xf32> -> vector<64x8xf32>
    %38 = arith.addf %31, %37 : vector<64x8xf32>
    %c0_53 = arith.constant 0 : index
    %c1_54 = arith.constant 1 : index
    %c1_55 = arith.constant 1 : index
    %c0_56 = arith.constant 0 : index
    %39 = vector.load %arg6[%c0_53, %c1_54, %c1_55, %c0_56] : memref<1x10x10x4xf32, #tpu.memory_space<vmem>>, vector<1x8x8x4xf32>
    %40 = vector.shape_cast %39 : vector<1x8x8x4xf32> to vector<64x4xf32>
    %41 = arith.truncf %40 : vector<64x4xf32> to vector<64x4xbf16>
    %c4 = arith.constant 4 : index
    %c0_57 = arith.constant 0 : index
    %c0_58 = arith.constant 0 : index
    %42 = vector.load %arg2[%c4, %c0_57, %c0_58] : memref<9x4x8xbf16, #tpu.memory_space<vmem>>, vector<1x4x8xbf16>
    %43 = vector.shape_cast %42 : vector<1x4x8xbf16> to vector<4x8xbf16>
    %cst_59 = arith.constant dense<0.000000e+00> : vector<64x8xf32>
    %44 = tpu.matmul %41, %43, %cst_59 {dimension_numbers = #tpu.dot_dimension_numbers<[1], [0], [0], [1], [0, 0, 1, 1], [], []>} : vector<64x4xbf16>, vector<4x8xbf16>, vector<64x8xf32> -> vector<64x8xf32>
    %45 = arith.addf %38, %44 : vector<64x8xf32>
    %c0_60 = arith.constant 0 : index
    %c1_61 = arith.constant 1 : index
    %c2_62 = arith.constant 2 : index
    %c0_63 = arith.constant 0 : index
    %46 = vector.load %arg6[%c0_60, %c1_61, %c2_62, %c0_63] : memref<1x10x10x4xf32, #tpu.memory_space<vmem>>, vector<1x8x8x4xf32>
    %47 = vector.shape_cast %46 : vector<1x8x8x4xf32> to vector<64x4xf32>
    %48 = arith.truncf %47 : vector<64x4xf32> to vector<64x4xbf16>
    %c5 = arith.constant 5 : index
    %c0_64 = arith.constant 0 : index
    %c0_65 = arith.constant 0 : index
    %49 = vector.load %arg2[%c5, %c0_64, %c0_65] : memref<9x4x8xbf16, #tpu.memory_space<vmem>>, vector<1x4x8xbf16>
    %50 = vector.shape_cast %49 : vector<1x4x8xbf16> to vector<4x8xbf16>
    %cst_66 = arith.constant dense<0.000000e+00> : vector<64x8xf32>
    %51 = tpu.matmul %48, %50, %cst_66 {dimension_numbers = #tpu.dot_dimension_numbers<[1], [0], [0], [1], [0, 0, 1, 1], [], []>} : vector<64x4xbf16>, vector<4x8xbf16>, vector<64x8xf32> -> vector<64x8xf32>
    %52 = arith.addf %45, %51 : vector<64x8xf32>
    %c0_67 = arith.constant 0 : index
    %c2_68 = arith.constant 2 : index
    %c0_69 = arith.constant 0 : index
    %c0_70 = arith.constant 0 : index
    %53 = vector.load %arg6[%c0_67, %c2_68, %c0_69, %c0_70] : memref<1x10x10x4xf32, #tpu.memory_space<vmem>>, vector<1x8x8x4xf32>
    %54 = vector.shape_cast %53 : vector<1x8x8x4xf32> to vector<64x4xf32>
    %55 = arith.truncf %54 : vector<64x4xf32> to vector<64x4xbf16>
    %c6 = arith.constant 6 : index
    %c0_71 = arith.constant 0 : index
    %c0_72 = arith.constant 0 : index
    %56 = vector.load %arg2[%c6, %c0_71, %c0_72] : memref<9x4x8xbf16, #tpu.memory_space<vmem>>, vector<1x4x8xbf16>
    %57 = vector.shape_cast %56 : vector<1x4x8xbf16> to vector<4x8xbf16>
    %cst_73 = arith.constant dense<0.000000e+00> : vector<64x8xf32>
    %58 = tpu.matmul %55, %57, %cst_73 {dimension_numbers = #tpu.dot_dimension_numbers<[1], [0], [0], [1], [0, 0, 1, 1], [], []>} : vector<64x4xbf16>, vector<4x8xbf16>, vector<64x8xf32> -> vector<64x8xf32>
    %59 = arith.addf %52, %58 : vector<64x8xf32>
    %c0_74 = arith.constant 0 : index
    %c2_75 = arith.constant 2 : index
    %c1_76 = arith.constant 1 : index
    %c0_77 = arith.constant 0 : index
    %60 = vector.load %arg6[%c0_74, %c2_75, %c1_76, %c0_77] : memref<1x10x10x4xf32, #tpu.memory_space<vmem>>, vector<1x8x8x4xf32>
    %61 = vector.shape_cast %60 : vector<1x8x8x4xf32> to vector<64x4xf32>
    %62 = arith.truncf %61 : vector<64x4xf32> to vector<64x4xbf16>
    %c7 = arith.constant 7 : index
    %c0_78 = arith.constant 0 : index
    %c0_79 = arith.constant 0 : index
    %63 = vector.load %arg2[%c7, %c0_78, %c0_79] : memref<9x4x8xbf16, #tpu.memory_space<vmem>>, vector<1x4x8xbf16>
    %64 = vector.shape_cast %63 : vector<1x4x8xbf16> to vector<4x8xbf16>
    %cst_80 = arith.constant dense<0.000000e+00> : vector<64x8xf32>
    %65 = tpu.matmul %62, %64, %cst_80 {dimension_numbers = #tpu.dot_dimension_numbers<[1], [0], [0], [1], [0, 0, 1, 1], [], []>} : vector<64x4xbf16>, vector<4x8xbf16>, vector<64x8xf32> -> vector<64x8xf32>
    %66 = arith.addf %59, %65 : vector<64x8xf32>
    %c0_81 = arith.constant 0 : index
    %c2_82 = arith.constant 2 : index
    %c2_83 = arith.constant 2 : index
    %c0_84 = arith.constant 0 : index
    %67 = vector.load %arg6[%c0_81, %c2_82, %c2_83, %c0_84] : memref<1x10x10x4xf32, #tpu.memory_space<vmem>>, vector<1x8x8x4xf32>
    %68 = vector.shape_cast %67 : vector<1x8x8x4xf32> to vector<64x4xf32>
    %69 = arith.truncf %68 : vector<64x4xf32> to vector<64x4xbf16>
    %c8 = arith.constant 8 : index
    %c0_85 = arith.constant 0 : index
    %c0_86 = arith.constant 0 : index
    %70 = vector.load %arg2[%c8, %c0_85, %c0_86] : memref<9x4x8xbf16, #tpu.memory_space<vmem>>, vector<1x4x8xbf16>
    %71 = vector.shape_cast %70 : vector<1x4x8xbf16> to vector<4x8xbf16>
    %cst_87 = arith.constant dense<0.000000e+00> : vector<64x8xf32>
    %72 = tpu.matmul %69, %71, %cst_87 {dimension_numbers = #tpu.dot_dimension_numbers<[1], [0], [0], [1], [0, 0, 1, 1], [], []>} : vector<64x4xbf16>, vector<4x8xbf16>, vector<64x8xf32> -> vector<64x8xf32>
    %73 = arith.addf %66, %72 : vector<64x8xf32>
    %74 = vector.shape_cast %73 : vector<64x8xf32> to vector<1x8x8x8xf32>
    %c0_88 = arith.constant 0 : index
    %c0_89 = arith.constant 0 : index
    %c0_90 = arith.constant 0 : index
    %c0_91 = arith.constant 0 : index
    %75 = vector.load %arg3[%c0_88, %c0_89, %c0_90, %c0_91] : memref<1x8x8x8xf32, #tpu.memory_space<vmem>>, vector<1x8x8x8xf32>
    tpu.vector_store %arg3[%c0_88, %c0_89, %c0_90, %c0_91], %74 {strides = array<i32>} : memref<1x8x8x8xf32, #tpu.memory_space<vmem>>, vector<1x8x8x8xf32>,
    %cst_92 = arith.constant dense<0.000000e+00> : vector<8xf32>
    %76 = vector.multi_reduction <add>, %73, %cst_92 [0] : vector<64x8xf32> to vector<8xf32>
    %77 = vector.shape_cast %76 : vector<8xf32> to vector<1x8xf32>
    %78 = vector.shape_cast %77 : vector<1x8xf32> to vector<1x1x8xf32>
    %c0_93 = arith.constant 0 : index
    %c0_94 = arith.constant 0 : index
    %c0_95 = arith.constant 0 : index
    %79 = vector.load %arg4[%c0_93, %c0_94, %c0_95] : memref<1x1x8xf32, #tpu.memory_space<vmem>>, vector<1x1x8xf32>
    tpu.vector_store %arg4[%c0_93, %c0_94, %c0_95], %78 {strides = array<i32>} : memref<1x1x8xf32, #tpu.memory_space<vmem>>, vector<1x1x8xf32>,
    %80 = arith.mulf %73, %73 : vector<64x8xf32>
    %cst_96 = arith.constant dense<0.000000e+00> : vector<8xf32>
    %81 = vector.multi_reduction <add>, %80, %cst_96 [0] : vector<64x8xf32> to vector<8xf32>
    %82 = vector.shape_cast %81 : vector<8xf32> to vector<1x8xf32>
    %83 = vector.shape_cast %82 : vector<1x8xf32> to vector<1x1x8xf32>
    %c0_97 = arith.constant 0 : index
    %c0_98 = arith.constant 0 : index
    %c0_99 = arith.constant 0 : index
    %84 = vector.load %arg5[%c0_97, %c0_98, %c0_99] : memref<1x1x8xf32, #tpu.memory_space<vmem>>, vector<1x1x8xf32>
    tpu.vector_store %arg5[%c0_97, %c0_98, %c0_99], %83 {strides = array<i32>} : memref<1x1x8xf32, #tpu.memory_space<vmem>>, vector<1x1x8xf32>,
    return
  }
  func.func @transform_0(%arg0: i32) -> (i32, i32, i32, i32) {
    %c0_i32 = arith.constant 0 : i32
    %c0_i32_0 = arith.constant 0 : i32
    %c0_i32_1 = arith.constant 0 : i32
    %c0_i32_2 = arith.constant 0 : i32
    return %arg0, %c0_i32, %c0_i32_0, %c0_i32_1 : i32, i32, i32, i32
  }
  func.func @transform_1(%arg0: i32) -> (i32, i32, i32) {
    %c0_i32 = arith.constant 0 : i32
    %c0_i32_0 = arith.constant 0 : i32
    %c0_i32_1 = arith.constant 0 : i32
    %c0_i32_2 = arith.constant 0 : i32
    return %c0_i32, %c0_i32_0, %c0_i32_1 : i32, i32, i32
  }
  func.func @transform_2(%arg0: i32) -> (i32, i32, i32, i32) {
    %c0_i32 = arith.constant 0 : i32
    %c0_i32_0 = arith.constant 0 : i32
    %c0_i32_1 = arith.constant 0 : i32
    %c0_i32_2 = arith.constant 0 : i32
    return %arg0, %c0_i32, %c0_i32_0, %c0_i32_1 : i32, i32, i32, i32
  }
  func.func @transform_3(%arg0: i32) -> (i32, i32, i32) {
    %c0_i32 = arith.constant 0 : i32
    %c0_i32_0 = arith.constant 0 : i32
    %c0_i32_1 = arith.constant 0 : i32
    return %arg0, %c0_i32, %c0_i32_0 : i32, i32, i32
  }
  func.func @transform_4(%arg0: i32) -> (i32, i32, i32) {
    %c0_i32 = arith.constant 0 : i32
    %c0_i32_0 = arith.constant 0 : i32
    %c0_i32_1 = arith.constant 0 : i32
    return %arg0, %c0_i32, %c0_i32_0 : i32, i32, i32
  }
}

module attributes {stable_mosaic.version = 11 : i64} {
  func.func @bn2_relu_kernel(%arg0: i32, %arg1: memref<1x8x8x8xf32, #tpu.memory_space<vmem>>, %arg2: memref<2x1x8xf32, #tpu.memory_space<vmem>>, %arg3: memref<2x1x8xf32, #tpu.memory_space<vmem>>, %arg4: memref<1x8xf32, #tpu.memory_space<vmem>>, %arg5: memref<1x8xf32, #tpu.memory_space<vmem>>, %arg6: memref<1x8x8x8xf32, #tpu.memory_space<vmem>>) attributes {dimension_semantics = [#tpu.dimension_semantics<parallel>], iteration_bounds = array<i64: 2>, scalar_prefetch = 0 : i64, scratch_operands = 0 : i64, tpu.core_type = #tpu.core_type<tc>, window_params = [{transform_indices = @transform_0, window_bounds = array<i64: 1, 8, 8, 8>}, {pipeline_mode = #tpu.pipeline_mode<synchronous>, transform_indices = @transform_1, window_bounds = array<i64: 2, 1, 8>}, {pipeline_mode = #tpu.pipeline_mode<synchronous>, transform_indices = @transform_2, window_bounds = array<i64: 2, 1, 8>}, {pipeline_mode = #tpu.pipeline_mode<synchronous>, transform_indices = @transform_3, window_bounds = array<i64: 1, 8>}, {pipeline_mode = #tpu.pipeline_mode<synchronous>, transform_indices = @transform_4, window_bounds = array<i64: 1, 8>}, {transform_indices = @transform_5, window_bounds = array<i64: 1, 8, 8, 8>}]} {
    %c0 = arith.constant 0 : index
    %c0_0 = arith.constant 0 : index
    %c0_1 = arith.constant 0 : index
    %0 = vector.load %arg2[%c0, %c0_0, %c0_1] : memref<2x1x8xf32, #tpu.memory_space<vmem>>, vector<2x1x8xf32>
    %cst = arith.constant dense<0.000000e+00> : vector<1x8xf32>
    %1 = vector.multi_reduction <add>, %0, %cst [0] : vector<2x1x8xf32> to vector<1x8xf32>
    %cst_2 = arith.constant 7.812500e-03 : f32
    %2 = vector.broadcast %cst_2 : f32 to vector<1x8xf32>
    %3 = arith.mulf %1, %2 : vector<1x8xf32>
    %c0_3 = arith.constant 0 : index
    %c0_4 = arith.constant 0 : index
    %c0_5 = arith.constant 0 : index
    %4 = vector.load %arg3[%c0_3, %c0_4, %c0_5] : memref<2x1x8xf32, #tpu.memory_space<vmem>>, vector<2x1x8xf32>
    %cst_6 = arith.constant dense<0.000000e+00> : vector<1x8xf32>
    %5 = vector.multi_reduction <add>, %4, %cst_6 [0] : vector<2x1x8xf32> to vector<1x8xf32>
    %cst_7 = arith.constant 7.812500e-03 : f32
    %6 = vector.broadcast %cst_7 : f32 to vector<1x8xf32>
    %7 = arith.mulf %5, %6 : vector<1x8xf32>
    %8 = arith.mulf %3, %3 : vector<1x8xf32>
    %9 = arith.subf %7, %8 : vector<1x8xf32>
    %cst_8 = arith.constant 0.000000e+00 : f32
    %10 = vector.broadcast %cst_8 : f32 to vector<1x8xf32>
    %11 = arith.maximumf %9, %10 : vector<1x8xf32>
    %c0_9 = arith.constant 0 : index
    %c0_10 = arith.constant 0 : index
    %12 = vector.load %arg4[%c0_9, %c0_10] : memref<1x8xf32, #tpu.memory_space<vmem>>, vector<1x8xf32>
    %cst_11 = arith.constant 9.99999974E-6 : f32
    %13 = vector.broadcast %cst_11 : f32 to vector<1x8xf32>
    %14 = arith.addf %11, %13 : vector<1x8xf32>
    %15 = math.rsqrt %14 : vector<1x8xf32>
    %16 = arith.mulf %12, %15 : vector<1x8xf32>
    %c0_12 = arith.constant 0 : index
    %c0_13 = arith.constant 0 : index
    %17 = vector.load %arg5[%c0_12, %c0_13] : memref<1x8xf32, #tpu.memory_space<vmem>>, vector<1x8xf32>
    %18 = arith.mulf %3, %16 : vector<1x8xf32>
    %19 = arith.subf %17, %18 : vector<1x8xf32>
    %c0_14 = arith.constant 0 : index
    %c0_15 = arith.constant 0 : index
    %c0_16 = arith.constant 0 : index
    %c0_17 = arith.constant 0 : index
    %20 = vector.load %arg1[%c0_14, %c0_15, %c0_16, %c0_17] : memref<1x8x8x8xf32, #tpu.memory_space<vmem>>, vector<1x8x8x8xf32>
    %21 = vector.shape_cast %16 : vector<1x8xf32> to vector<1x1x1x8xf32>
    %22 = vector.broadcast %21 : vector<1x1x1x8xf32> to vector<1x8x8x8xf32>
    %23 = arith.mulf %20, %22 : vector<1x8x8x8xf32>
    %24 = vector.shape_cast %19 : vector<1x8xf32> to vector<1x1x1x8xf32>
    %25 = vector.broadcast %24 : vector<1x1x1x8xf32> to vector<1x8x8x8xf32>
    %26 = arith.addf %23, %25 : vector<1x8x8x8xf32>
    %cst_18 = arith.constant 0.000000e+00 : f32
    %27 = vector.broadcast %cst_18 : f32 to vector<1x8x8x8xf32>
    %28 = arith.maximumf %26, %27 : vector<1x8x8x8xf32>
    %c0_19 = arith.constant 0 : index
    %c0_20 = arith.constant 0 : index
    %c0_21 = arith.constant 0 : index
    %c0_22 = arith.constant 0 : index
    %29 = vector.load %arg6[%c0_19, %c0_20, %c0_21, %c0_22] : memref<1x8x8x8xf32, #tpu.memory_space<vmem>>, vector<1x8x8x8xf32>
    tpu.vector_store %arg6[%c0_19, %c0_20, %c0_21, %c0_22], %28 {strides = array<i32>} : memref<1x8x8x8xf32, #tpu.memory_space<vmem>>, vector<1x8x8x8xf32>,
    return
  }
  func.func @transform_0(%arg0: i32) -> (i32, i32, i32, i32) {
    %c0_i32 = arith.constant 0 : i32
    %c0_i32_0 = arith.constant 0 : i32
    %c0_i32_1 = arith.constant 0 : i32
    %c0_i32_2 = arith.constant 0 : i32
    return %arg0, %c0_i32, %c0_i32_0, %c0_i32_1 : i32, i32, i32, i32
  }
  func.func @transform_1(%arg0: i32) -> (i32, i32, i32) {
    %c0_i32 = arith.constant 0 : i32
    %c0_i32_0 = arith.constant 0 : i32
    %c0_i32_1 = arith.constant 0 : i32
    %c0_i32_2 = arith.constant 0 : i32
    return %c0_i32, %c0_i32_0, %c0_i32_1 : i32, i32, i32
  }
  func.func @transform_2(%arg0: i32) -> (i32, i32, i32) {
    %c0_i32 = arith.constant 0 : i32
    %c0_i32_0 = arith.constant 0 : i32
    %c0_i32_1 = arith.constant 0 : i32
    %c0_i32_2 = arith.constant 0 : i32
    return %c0_i32, %c0_i32_0, %c0_i32_1 : i32, i32, i32
  }
  func.func @transform_3(%arg0: i32) -> (i32, i32) {
    %c0_i32 = arith.constant 0 : i32
    %c0_i32_0 = arith.constant 0 : i32
    %c0_i32_1 = arith.constant 0 : i32
    return %c0_i32, %c0_i32_0 : i32, i32
  }
  func.func @transform_4(%arg0: i32) -> (i32, i32) {
    %c0_i32 = arith.constant 0 : i32
    %c0_i32_0 = arith.constant 0 : i32
    %c0_i32_1 = arith.constant 0 : i32
    return %c0_i32, %c0_i32_0 : i32, i32
  }
  func.func @transform_5(%arg0: i32) -> (i32, i32, i32, i32) {
    %c0_i32 = arith.constant 0 : i32
    %c0_i32_0 = arith.constant 0 : i32
    %c0_i32_1 = arith.constant 0 : i32
    %c0_i32_2 = arith.constant 0 : i32
    return %arg0, %c0_i32, %c0_i32_0, %c0_i32_1 : i32, i32, i32, i32
  }
}

module attributes {stable_mosaic.version = 11 : i64} {
  func.func @bn1_conv2_kernel(%arg0: i32, %arg1: memref<1x8x8x8xf32, #tpu.memory_space<vmem>>, %arg2: memref<2x1x8xf32, #tpu.memory_space<vmem>>, %arg3: memref<2x1x8xf32, #tpu.memory_space<vmem>>, %arg4: memref<1x8xf32, #tpu.memory_space<vmem>>, %arg5: memref<1x8xf32, #tpu.memory_space<vmem>>, %arg6: memref<9x8x8xbf16, #tpu.memory_space<vmem>>, %arg7: memref<1x8x8x8xf32, #tpu.memory_space<vmem>>, %arg8: memref<1x1x8xf32, #tpu.memory_space<vmem>>, %arg9: memref<1x1x8xf32, #tpu.memory_space<vmem>>, %arg10: memref<1x10x10x8xf32, #tpu.memory_space<vmem>>) attributes {dimension_semantics = [#tpu.dimension_semantics<parallel>], iteration_bounds = array<i64: 2>, scalar_prefetch = 0 : i64, scratch_operands = 1 : i64, tpu.core_type = #tpu.core_type<tc>, window_params = [{transform_indices = @transform_0, window_bounds = array<i64: 1, 8, 8, 8>}, {pipeline_mode = #tpu.pipeline_mode<synchronous>, transform_indices = @transform_1, window_bounds = array<i64: 2, 1, 8>}, {pipeline_mode = #tpu.pipeline_mode<synchronous>, transform_indices = @transform_2, window_bounds = array<i64: 2, 1, 8>}, {pipeline_mode = #tpu.pipeline_mode<synchronous>, transform_indices = @transform_3, window_bounds = array<i64: 1, 8>}, {pipeline_mode = #tpu.pipeline_mode<synchronous>, transform_indices = @transform_4, window_bounds = array<i64: 1, 8>}, {pipeline_mode = #tpu.pipeline_mode<synchronous>, transform_indices = @transform_5, window_bounds = array<i64: 9, 8, 8>}, {transform_indices = @transform_6, window_bounds = array<i64: 1, 8, 8, 8>}, {transform_indices = @transform_7, window_bounds = array<i64: 1, 1, 8>}, {transform_indices = @transform_8, window_bounds = array<i64: 1, 1, 8>}]} {
    %c0 = arith.constant 0 : index
    %c0_0 = arith.constant 0 : index
    %c0_1 = arith.constant 0 : index
    %0 = vector.load %arg2[%c0, %c0_0, %c0_1] : memref<2x1x8xf32, #tpu.memory_space<vmem>>, vector<2x1x8xf32>
    %cst = arith.constant dense<0.000000e+00> : vector<1x8xf32>
    %1 = vector.multi_reduction <add>, %0, %cst [0] : vector<2x1x8xf32> to vector<1x8xf32>
    %cst_2 = arith.constant 7.812500e-03 : f32
    %2 = vector.broadcast %cst_2 : f32 to vector<1x8xf32>
    %3 = arith.mulf %1, %2 : vector<1x8xf32>
    %c0_3 = arith.constant 0 : index
    %c0_4 = arith.constant 0 : index
    %c0_5 = arith.constant 0 : index
    %4 = vector.load %arg3[%c0_3, %c0_4, %c0_5] : memref<2x1x8xf32, #tpu.memory_space<vmem>>, vector<2x1x8xf32>
    %cst_6 = arith.constant dense<0.000000e+00> : vector<1x8xf32>
    %5 = vector.multi_reduction <add>, %4, %cst_6 [0] : vector<2x1x8xf32> to vector<1x8xf32>
    %cst_7 = arith.constant 7.812500e-03 : f32
    %6 = vector.broadcast %cst_7 : f32 to vector<1x8xf32>
    %7 = arith.mulf %5, %6 : vector<1x8xf32>
    %8 = arith.mulf %3, %3 : vector<1x8xf32>
    %9 = arith.subf %7, %8 : vector<1x8xf32>
    %cst_8 = arith.constant 0.000000e+00 : f32
    %10 = vector.broadcast %cst_8 : f32 to vector<1x8xf32>
    %11 = arith.maximumf %9, %10 : vector<1x8xf32>
    %c0_9 = arith.constant 0 : index
    %c0_10 = arith.constant 0 : index
    %12 = vector.load %arg4[%c0_9, %c0_10] : memref<1x8xf32, #tpu.memory_space<vmem>>, vector<1x8xf32>
    %cst_11 = arith.constant 9.99999974E-6 : f32
    %13 = vector.broadcast %cst_11 : f32 to vector<1x8xf32>
    %14 = arith.addf %11, %13 : vector<1x8xf32>
    %15 = math.rsqrt %14 : vector<1x8xf32>
    %16 = arith.mulf %12, %15 : vector<1x8xf32>
    %c0_12 = arith.constant 0 : index
    %c0_13 = arith.constant 0 : index
    %17 = vector.load %arg5[%c0_12, %c0_13] : memref<1x8xf32, #tpu.memory_space<vmem>>, vector<1x8xf32>
    %18 = arith.mulf %3, %16 : vector<1x8xf32>
    %19 = arith.subf %17, %18 : vector<1x8xf32>
    %c0_14 = arith.constant 0 : index
    %c0_15 = arith.constant 0 : index
    %c0_16 = arith.constant 0 : index
    %c0_17 = arith.constant 0 : index
    %20 = vector.load %arg1[%c0_14, %c0_15, %c0_16, %c0_17] : memref<1x8x8x8xf32, #tpu.memory_space<vmem>>, vector<1x8x8x8xf32>
    %21 = vector.shape_cast %16 : vector<1x8xf32> to vector<1x1x1x8xf32>
    %22 = vector.broadcast %21 : vector<1x1x1x8xf32> to vector<1x8x8x8xf32>
    %23 = arith.mulf %20, %22 : vector<1x8x8x8xf32>
    %24 = vector.shape_cast %19 : vector<1x8xf32> to vector<1x1x1x8xf32>
    %25 = vector.broadcast %24 : vector<1x1x1x8xf32> to vector<1x8x8x8xf32>
    %26 = arith.addf %23, %25 : vector<1x8x8x8xf32>
    %cst_18 = arith.constant 0.000000e+00 : f32
    %27 = vector.broadcast %cst_18 : f32 to vector<1x8x8x8xf32>
    %28 = arith.maximumf %26, %27 : vector<1x8x8x8xf32>
    %cst_19 = arith.constant 0.000000e+00 : f32
    %29 = vector.broadcast %cst_19 : f32 to vector<1x10x10x8xf32>
    %c0_20 = arith.constant 0 : index
    %c0_21 = arith.constant 0 : index
    %c0_22 = arith.constant 0 : index
    %c0_23 = arith.constant 0 : index
    %30 = vector.load %arg10[%c0_20, %c0_21, %c0_22, %c0_23] : memref<1x10x10x8xf32, #tpu.memory_space<vmem>>, vector<1x10x10x8xf32>
    tpu.vector_store %arg10[%c0_20, %c0_21, %c0_22, %c0_23], %29 {strides = array<i32>} : memref<1x10x10x8xf32, #tpu.memory_space<vmem>>, vector<1x10x10x8xf32>,
    %c0_24 = arith.constant 0 : index
    %c1 = arith.constant 1 : index
    %c1_25 = arith.constant 1 : index
    %c0_26 = arith.constant 0 : index
    %31 = vector.load %arg10[%c0_24, %c1, %c1_25, %c0_26] : memref<1x10x10x8xf32, #tpu.memory_space<vmem>>, vector<1x8x8x8xf32>
    tpu.vector_store %arg10[%c0_24, %c1, %c1_25, %c0_26], %28 {strides = array<i32>} : memref<1x10x10x8xf32, #tpu.memory_space<vmem>>, vector<1x8x8x8xf32>,
    %cst_27 = arith.constant 0.000000e+00 : f32
    %32 = vector.broadcast %cst_27 : f32 to vector<64x8xf32>
    %c0_28 = arith.constant 0 : index
    %c0_29 = arith.constant 0 : index
    %c0_30 = arith.constant 0 : index
    %c0_31 = arith.constant 0 : index
    %33 = vector.load %arg10[%c0_28, %c0_29, %c0_30, %c0_31] : memref<1x10x10x8xf32, #tpu.memory_space<vmem>>, vector<1x8x8x8xf32>
    %34 = vector.shape_cast %33 : vector<1x8x8x8xf32> to vector<64x8xf32>
    %35 = arith.truncf %34 : vector<64x8xf32> to vector<64x8xbf16>
    %c0_32 = arith.constant 0 : index
    %c0_33 = arith.constant 0 : index
    %c0_34 = arith.constant 0 : index
    %36 = vector.load %arg6[%c0_32, %c0_33, %c0_34] : memref<9x8x8xbf16, #tpu.memory_space<vmem>>, vector<1x8x8xbf16>
    %37 = vector.shape_cast %36 : vector<1x8x8xbf16> to vector<8x8xbf16>
    %cst_35 = arith.constant dense<0.000000e+00> : vector<64x8xf32>
    %38 = tpu.matmul %35, %37, %cst_35 {dimension_numbers = #tpu.dot_dimension_numbers<[1], [0], [0], [1], [0, 0, 1, 1], [], []>} : vector<64x8xbf16>, vector<8x8xbf16>, vector<64x8xf32> -> vector<64x8xf32>
    %39 = arith.addf %32, %38 : vector<64x8xf32>
    %c0_36 = arith.constant 0 : index
    %c0_37 = arith.constant 0 : index
    %c1_38 = arith.constant 1 : index
    %c0_39 = arith.constant 0 : index
    %40 = vector.load %arg10[%c0_36, %c0_37, %c1_38, %c0_39] : memref<1x10x10x8xf32, #tpu.memory_space<vmem>>, vector<1x8x8x8xf32>
    %41 = vector.shape_cast %40 : vector<1x8x8x8xf32> to vector<64x8xf32>
    %42 = arith.truncf %41 : vector<64x8xf32> to vector<64x8xbf16>
    %c1_40 = arith.constant 1 : index
    %c0_41 = arith.constant 0 : index
    %c0_42 = arith.constant 0 : index
    %43 = vector.load %arg6[%c1_40, %c0_41, %c0_42] : memref<9x8x8xbf16, #tpu.memory_space<vmem>>, vector<1x8x8xbf16>
    %44 = vector.shape_cast %43 : vector<1x8x8xbf16> to vector<8x8xbf16>
    %cst_43 = arith.constant dense<0.000000e+00> : vector<64x8xf32>
    %45 = tpu.matmul %42, %44, %cst_43 {dimension_numbers = #tpu.dot_dimension_numbers<[1], [0], [0], [1], [0, 0, 1, 1], [], []>} : vector<64x8xbf16>, vector<8x8xbf16>, vector<64x8xf32> -> vector<64x8xf32>
    %46 = arith.addf %39, %45 : vector<64x8xf32>
    %c0_44 = arith.constant 0 : index
    %c0_45 = arith.constant 0 : index
    %c2 = arith.constant 2 : index
    %c0_46 = arith.constant 0 : index
    %47 = vector.load %arg10[%c0_44, %c0_45, %c2, %c0_46] : memref<1x10x10x8xf32, #tpu.memory_space<vmem>>, vector<1x8x8x8xf32>
    %48 = vector.shape_cast %47 : vector<1x8x8x8xf32> to vector<64x8xf32>
    %49 = arith.truncf %48 : vector<64x8xf32> to vector<64x8xbf16>
    %c2_47 = arith.constant 2 : index
    %c0_48 = arith.constant 0 : index
    %c0_49 = arith.constant 0 : index
    %50 = vector.load %arg6[%c2_47, %c0_48, %c0_49] : memref<9x8x8xbf16, #tpu.memory_space<vmem>>, vector<1x8x8xbf16>
    %51 = vector.shape_cast %50 : vector<1x8x8xbf16> to vector<8x8xbf16>
    %cst_50 = arith.constant dense<0.000000e+00> : vector<64x8xf32>
    %52 = tpu.matmul %49, %51, %cst_50 {dimension_numbers = #tpu.dot_dimension_numbers<[1], [0], [0], [1], [0, 0, 1, 1], [], []>} : vector<64x8xbf16>, vector<8x8xbf16>, vector<64x8xf32> -> vector<64x8xf32>
    %53 = arith.addf %46, %52 : vector<64x8xf32>
    %c0_51 = arith.constant 0 : index
    %c1_52 = arith.constant 1 : index
    %c0_53 = arith.constant 0 : index
    %c0_54 = arith.constant 0 : index
    %54 = vector.load %arg10[%c0_51, %c1_52, %c0_53, %c0_54] : memref<1x10x10x8xf32, #tpu.memory_space<vmem>>, vector<1x8x8x8xf32>
    %55 = vector.shape_cast %54 : vector<1x8x8x8xf32> to vector<64x8xf32>
    %56 = arith.truncf %55 : vector<64x8xf32> to vector<64x8xbf16>
    %c3 = arith.constant 3 : index
    %c0_55 = arith.constant 0 : index
    %c0_56 = arith.constant 0 : index
    %57 = vector.load %arg6[%c3, %c0_55, %c0_56] : memref<9x8x8xbf16, #tpu.memory_space<vmem>>, vector<1x8x8xbf16>
    %58 = vector.shape_cast %57 : vector<1x8x8xbf16> to vector<8x8xbf16>
    %cst_57 = arith.constant dense<0.000000e+00> : vector<64x8xf32>
    %59 = tpu.matmul %56, %58, %cst_57 {dimension_numbers = #tpu.dot_dimension_numbers<[1], [0], [0], [1], [0, 0, 1, 1], [], []>} : vector<64x8xbf16>, vector<8x8xbf16>, vector<64x8xf32> -> vector<64x8xf32>
    %60 = arith.addf %53, %59 : vector<64x8xf32>
    %c0_58 = arith.constant 0 : index
    %c1_59 = arith.constant 1 : index
    %c1_60 = arith.constant 1 : index
    %c0_61 = arith.constant 0 : index
    %61 = vector.load %arg10[%c0_58, %c1_59, %c1_60, %c0_61] : memref<1x10x10x8xf32, #tpu.memory_space<vmem>>, vector<1x8x8x8xf32>
    %62 = vector.shape_cast %61 : vector<1x8x8x8xf32> to vector<64x8xf32>
    %63 = arith.truncf %62 : vector<64x8xf32> to vector<64x8xbf16>
    %c4 = arith.constant 4 : index
    %c0_62 = arith.constant 0 : index
    %c0_63 = arith.constant 0 : index
    %64 = vector.load %arg6[%c4, %c0_62, %c0_63] : memref<9x8x8xbf16, #tpu.memory_space<vmem>>, vector<1x8x8xbf16>
    %65 = vector.shape_cast %64 : vector<1x8x8xbf16> to vector<8x8xbf16>
    %cst_64 = arith.constant dense<0.000000e+00> : vector<64x8xf32>
    %66 = tpu.matmul %63, %65, %cst_64 {dimension_numbers = #tpu.dot_dimension_numbers<[1], [0], [0], [1], [0, 0, 1, 1], [], []>} : vector<64x8xbf16>, vector<8x8xbf16>, vector<64x8xf32> -> vector<64x8xf32>
    %67 = arith.addf %60, %66 : vector<64x8xf32>
    %c0_65 = arith.constant 0 : index
    %c1_66 = arith.constant 1 : index
    %c2_67 = arith.constant 2 : index
    %c0_68 = arith.constant 0 : index
    %68 = vector.load %arg10[%c0_65, %c1_66, %c2_67, %c0_68] : memref<1x10x10x8xf32, #tpu.memory_space<vmem>>, vector<1x8x8x8xf32>
    %69 = vector.shape_cast %68 : vector<1x8x8x8xf32> to vector<64x8xf32>
    %70 = arith.truncf %69 : vector<64x8xf32> to vector<64x8xbf16>
    %c5 = arith.constant 5 : index
    %c0_69 = arith.constant 0 : index
    %c0_70 = arith.constant 0 : index
    %71 = vector.load %arg6[%c5, %c0_69, %c0_70] : memref<9x8x8xbf16, #tpu.memory_space<vmem>>, vector<1x8x8xbf16>
    %72 = vector.shape_cast %71 : vector<1x8x8xbf16> to vector<8x8xbf16>
    %cst_71 = arith.constant dense<0.000000e+00> : vector<64x8xf32>
    %73 = tpu.matmul %70, %72, %cst_71 {dimension_numbers = #tpu.dot_dimension_numbers<[1], [0], [0], [1], [0, 0, 1, 1], [], []>} : vector<64x8xbf16>, vector<8x8xbf16>, vector<64x8xf32> -> vector<64x8xf32>
    %74 = arith.addf %67, %73 : vector<64x8xf32>
    %c0_72 = arith.constant 0 : index
    %c2_73 = arith.constant 2 : index
    %c0_74 = arith.constant 0 : index
    %c0_75 = arith.constant 0 : index
    %75 = vector.load %arg10[%c0_72, %c2_73, %c0_74, %c0_75] : memref<1x10x10x8xf32, #tpu.memory_space<vmem>>, vector<1x8x8x8xf32>
    %76 = vector.shape_cast %75 : vector<1x8x8x8xf32> to vector<64x8xf32>
    %77 = arith.truncf %76 : vector<64x8xf32> to vector<64x8xbf16>
    %c6 = arith.constant 6 : index
    %c0_76 = arith.constant 0 : index
    %c0_77 = arith.constant 0 : index
    %78 = vector.load %arg6[%c6, %c0_76, %c0_77] : memref<9x8x8xbf16, #tpu.memory_space<vmem>>, vector<1x8x8xbf16>
    %79 = vector.shape_cast %78 : vector<1x8x8xbf16> to vector<8x8xbf16>
    %cst_78 = arith.constant dense<0.000000e+00> : vector<64x8xf32>
    %80 = tpu.matmul %77, %79, %cst_78 {dimension_numbers = #tpu.dot_dimension_numbers<[1], [0], [0], [1], [0, 0, 1, 1], [], []>} : vector<64x8xbf16>, vector<8x8xbf16>, vector<64x8xf32> -> vector<64x8xf32>
    %81 = arith.addf %74, %80 : vector<64x8xf32>
    %c0_79 = arith.constant 0 : index
    %c2_80 = arith.constant 2 : index
    %c1_81 = arith.constant 1 : index
    %c0_82 = arith.constant 0 : index
    %82 = vector.load %arg10[%c0_79, %c2_80, %c1_81, %c0_82] : memref<1x10x10x8xf32, #tpu.memory_space<vmem>>, vector<1x8x8x8xf32>
    %83 = vector.shape_cast %82 : vector<1x8x8x8xf32> to vector<64x8xf32>
    %84 = arith.truncf %83 : vector<64x8xf32> to vector<64x8xbf16>
    %c7 = arith.constant 7 : index
    %c0_83 = arith.constant 0 : index
    %c0_84 = arith.constant 0 : index
    %85 = vector.load %arg6[%c7, %c0_83, %c0_84] : memref<9x8x8xbf16, #tpu.memory_space<vmem>>, vector<1x8x8xbf16>
    %86 = vector.shape_cast %85 : vector<1x8x8xbf16> to vector<8x8xbf16>
    %cst_85 = arith.constant dense<0.000000e+00> : vector<64x8xf32>
    %87 = tpu.matmul %84, %86, %cst_85 {dimension_numbers = #tpu.dot_dimension_numbers<[1], [0], [0], [1], [0, 0, 1, 1], [], []>} : vector<64x8xbf16>, vector<8x8xbf16>, vector<64x8xf32> -> vector<64x8xf32>
    %88 = arith.addf %81, %87 : vector<64x8xf32>
    %c0_86 = arith.constant 0 : index
    %c2_87 = arith.constant 2 : index
    %c2_88 = arith.constant 2 : index
    %c0_89 = arith.constant 0 : index
    %89 = vector.load %arg10[%c0_86, %c2_87, %c2_88, %c0_89] : memref<1x10x10x8xf32, #tpu.memory_space<vmem>>, vector<1x8x8x8xf32>
    %90 = vector.shape_cast %89 : vector<1x8x8x8xf32> to vector<64x8xf32>
    %91 = arith.truncf %90 : vector<64x8xf32> to vector<64x8xbf16>
    %c8 = arith.constant 8 : index
    %c0_90 = arith.constant 0 : index
    %c0_91 = arith.constant 0 : index
    %92 = vector.load %arg6[%c8, %c0_90, %c0_91] : memref<9x8x8xbf16, #tpu.memory_space<vmem>>, vector<1x8x8xbf16>
    %93 = vector.shape_cast %92 : vector<1x8x8xbf16> to vector<8x8xbf16>
    %cst_92 = arith.constant dense<0.000000e+00> : vector<64x8xf32>
    %94 = tpu.matmul %91, %93, %cst_92 {dimension_numbers = #tpu.dot_dimension_numbers<[1], [0], [0], [1], [0, 0, 1, 1], [], []>} : vector<64x8xbf16>, vector<8x8xbf16>, vector<64x8xf32> -> vector<64x8xf32>
    %95 = arith.addf %88, %94 : vector<64x8xf32>
    %96 = vector.shape_cast %95 : vector<64x8xf32> to vector<1x8x8x8xf32>
    %c0_93 = arith.constant 0 : index
    %c0_94 = arith.constant 0 : index
    %c0_95 = arith.constant 0 : index
    %c0_96 = arith.constant 0 : index
    %97 = vector.load %arg7[%c0_93, %c0_94, %c0_95, %c0_96] : memref<1x8x8x8xf32, #tpu.memory_space<vmem>>, vector<1x8x8x8xf32>
    tpu.vector_store %arg7[%c0_93, %c0_94, %c0_95, %c0_96], %96 {strides = array<i32>} : memref<1x8x8x8xf32, #tpu.memory_space<vmem>>, vector<1x8x8x8xf32>,
    %cst_97 = arith.constant dense<0.000000e+00> : vector<8xf32>
    %98 = vector.multi_reduction <add>, %95, %cst_97 [0] : vector<64x8xf32> to vector<8xf32>
    %99 = vector.shape_cast %98 : vector<8xf32> to vector<1x8xf32>
    %100 = vector.shape_cast %99 : vector<1x8xf32> to vector<1x1x8xf32>
    %c0_98 = arith.constant 0 : index
    %c0_99 = arith.constant 0 : index
    %c0_100 = arith.constant 0 : index
    %101 = vector.load %arg8[%c0_98, %c0_99, %c0_100] : memref<1x1x8xf32, #tpu.memory_space<vmem>>, vector<1x1x8xf32>
    tpu.vector_store %arg8[%c0_98, %c0_99, %c0_100], %100 {strides = array<i32>} : memref<1x1x8xf32, #tpu.memory_space<vmem>>, vector<1x1x8xf32>,
    %102 = arith.mulf %95, %95 : vector<64x8xf32>
    %cst_101 = arith.constant dense<0.000000e+00> : vector<8xf32>
    %103 = vector.multi_reduction <add>, %102, %cst_101 [0] : vector<64x8xf32> to vector<8xf32>
    %104 = vector.shape_cast %103 : vector<8xf32> to vector<1x8xf32>
    %105 = vector.shape_cast %104 : vector<1x8xf32> to vector<1x1x8xf32>
    %c0_102 = arith.constant 0 : index
    %c0_103 = arith.constant 0 : index
    %c0_104 = arith.constant 0 : index
    %106 = vector.load %arg9[%c0_102, %c0_103, %c0_104] : memref<1x1x8xf32, #tpu.memory_space<vmem>>, vector<1x1x8xf32>
    tpu.vector_store %arg9[%c0_102, %c0_103, %c0_104], %105 {strides = array<i32>} : memref<1x1x8xf32, #tpu.memory_space<vmem>>, vector<1x1x8xf32>,
    return
  }
  func.func @transform_0(%arg0: i32) -> (i32, i32, i32, i32) {
    %c0_i32 = arith.constant 0 : i32
    %c0_i32_0 = arith.constant 0 : i32
    %c0_i32_1 = arith.constant 0 : i32
    %c0_i32_2 = arith.constant 0 : i32
    return %arg0, %c0_i32, %c0_i32_0, %c0_i32_1 : i32, i32, i32, i32
  }
  func.func @transform_1(%arg0: i32) -> (i32, i32, i32) {
    %c0_i32 = arith.constant 0 : i32
    %c0_i32_0 = arith.constant 0 : i32
    %c0_i32_1 = arith.constant 0 : i32
    %c0_i32_2 = arith.constant 0 : i32
    return %c0_i32, %c0_i32_0, %c0_i32_1 : i32, i32, i32
  }
  func.func @transform_2(%arg0: i32) -> (i32, i32, i32) {
    %c0_i32 = arith.constant 0 : i32
    %c0_i32_0 = arith.constant 0 : i32
    %c0_i32_1 = arith.constant 0 : i32
    %c0_i32_2 = arith.constant 0 : i32
    return %c0_i32, %c0_i32_0, %c0_i32_1 : i32, i32, i32
  }
  func.func @transform_3(%arg0: i32) -> (i32, i32) {
    %c0_i32 = arith.constant 0 : i32
    %c0_i32_0 = arith.constant 0 : i32
    %c0_i32_1 = arith.constant 0 : i32
    return %c0_i32, %c0_i32_0 : i32, i32
  }
  func.func @transform_4(%arg0: i32) -> (i32, i32) {
    %c0_i32 = arith.constant 0 : i32
    %c0_i32_0 = arith.constant 0 : i32
    %c0_i32_1 = arith.constant 0 : i32
    return %c0_i32, %c0_i32_0 : i32, i32
  }
  func.func @transform_5(%arg0: i32) -> (i32, i32, i32) {
    %c0_i32 = arith.constant 0 : i32
    %c0_i32_0 = arith.constant 0 : i32
    %c0_i32_1 = arith.constant 0 : i32
    %c0_i32_2 = arith.constant 0 : i32
    return %c0_i32, %c0_i32_0, %c0_i32_1 : i32, i32, i32
  }
  func.func @transform_6(%arg0: i32) -> (i32, i32, i32, i32) {
    %c0_i32 = arith.constant 0 : i32
    %c0_i32_0 = arith.constant 0 : i32
    %c0_i32_1 = arith.constant 0 : i32
    %c0_i32_2 = arith.constant 0 : i32
    return %arg0, %c0_i32, %c0_i32_0, %c0_i32_1 : i32, i32, i32, i32
  }
  func.func @transform_7(%arg0: i32) -> (i32, i32, i32) {
    %c0_i32 = arith.constant 0 : i32
    %c0_i32_0 = arith.constant 0 : i32
    %c0_i32_1 = arith.constant 0 : i32
    return %arg0, %c0_i32, %c0_i32_0 : i32, i32, i32
  }
  func.func @transform_8(%arg0: i32) -> (i32, i32, i32) {
    %c0_i32 = arith.constant 0 : i32
    %c0_i32_0 = arith.constant 0 : i32
    %c0_i32_1 = arith.constant 0 : i32
    return %arg0, %c0_i32, %c0_i32_0 : i32, i32, i32
  }
}

</mosaic_0001>

<llo_original>
// kernel: down_forward.5
$region0: #{down_forward.5}
  #allocation0 [shape = 'u32[]', space=smem, size = 0x4, offset = 0x4, fixed_abs, tag = 'smem constant byte address 0x4 - core index']
  #allocation1 [shape = 'u32[72,128]{1,0:T(1,128)}', space=vmem, size = 0x9000, scoped, tag = 'internal scratch']
  %s0 = inlined_call_operand.vmem [shape: f32[2,8,8,8], index: 0, kind: input, shape index: {}]
  %s1 = inlined_call_operand.vmem [shape: f32[2,1,8], index: 1, kind: input, shape index: {}]
  %s2 = inlined_call_operand.vmem [shape: f32[2,1,8], index: 2, kind: input, shape index: {}]
  %s3 = inlined_call_operand.vmem [shape: f32[1,8], index: 3, kind: input, shape index: {}]
  %s4 = inlined_call_operand.vmem [shape: f32[1,8], index: 4, kind: input, shape index: {}]
  %s5 = inlined_call_operand.vmem [shape: f32[2,8,8,8], index: 5, kind: output, shape index: {}]
  %s6 = sld [smem:[#allocation0]]
  $region53: #{down_forward.5} parent=0
    _
  %s8 = ssub.s32 1, %s6
  %s9 = scalar_select 0, %s8, %s6
  loop: start=0, step=1, limit=4
  $region2: #{down_forward.5} parent=0 // loop_pre_header
    _
  $region3: #{down_forward.5} parent=0 // loop_header
    %s11 = sphi 0, %s15
    %p12 = scmp.ge.s32.totalorder %s11, 4
    %s21 = sphi 0, %s23
    %s24 = sphi 0, %s21
    %s25 = sphi 0, %s24
    %s41 = sphi 0, %s25
    %s45 = sphi 0, %s45
    %s47 = sphi 0, %s45
    %s48 = sphi 0, %s47
    %s62 = sphi 0, %s48
    %s66 = sphi 0, %s66
    %s68 = sphi 0, %s66
    %s69 = sphi 0, %s68
    %s83 = sphi 0, %s69
    %s87 = sphi 0, %s87
    %s89 = sphi 0, %s87
    %s90 = sphi 0, %s89
    %s104 = sphi 0, %s90
    %s108 = sphi 0, %s108
    %s110 = sphi 0, %s108
    %s111 = sphi 0, %s110
    %s125 = sphi 0, %s111
    %s131 = sphi 0, %s133
    %s134 = sphi 0, %s131
    %s135 = sphi 0, %s134
    %s151 = sphi 0, %s135
  $region4: #{down_forward.5} parent=0 // loop_header_branch
    %14 = sbr.rel (%p12) target = $region8
  $region5: #{down_forward.5} parent=0 // loop_body
    %s16 = ssub.s32 %s11, 1
    %s17 = ssub.s32 %s11, 2
    %s18 = sadd.s32 %s11, 1
    %s19 = ssub.s32 %s11, %s18
    %p20 = scmp.eq.s32.totalorder %s19, 0
    %s22 = sadd.s32 %s21, 1
    %s23 = scalar_select %p20, %s21, %s22
    %p26 = pneg %p20
    %p27 = scmp.eq.s32.totalorder %s11, 1
    %p28 = por %p26, %p27
    %p29 = scmp.ne.s32.totalorder %s21, %s24
    %p30 = scmp.eq.s32.totalorder %s11, 0
    %p31 = por %p29, %p30
    %p32 = scmp.ne.s32.totalorder %s21, %s24
    %p33 = scmp.eq.s32.totalorder %s16, 1
    %p34 = por %p32, %p33
    %p35 = scmp.ne.s32.totalorder %s24, %s25
    %p36 = scmp.eq.s32.totalorder %s16, 0
    %p37 = por %p35, %p36
    %p38 = scmp.ne.s32.totalorder %s24, %s25
    %p39 = scmp.eq.s32.totalorder %s17, 1
    %p40 = por %p38, %p39
    %p42 = scmp.ne.s32.totalorder %s25, %s41
    %p43 = scmp.eq.s32.totalorder %s17, 0
    %p44 = por %p42, %p43
    %s46 = sadd.s32 %s45, 1
    %p49 = scmp.eq.s32.totalorder %s11, 1
    %p50 = scmp.ne.s32.totalorder %s45, %s47
    %p51 = scmp.eq.s32.totalorder %s11, 0
    %p52 = por %p50, %p51
    %p53 = scmp.ne.s32.totalorder %s45, %s47
    %p54 = scmp.eq.s32.totalorder %s16, 1
    %p55 = por %p53, %p54
    %p56 = scmp.ne.s32.totalorder %s47, %s48
    %p57 = scmp.eq.s32.totalorder %s16, 0
    %p58 = por %p56, %p57
    %p59 = scmp.ne.s32.totalorder %s47, %s48
    %p60 = scmp.eq.s32.totalorder %s17, 1
    %p61 = por %p59, %p60
    %p63 = scmp.ne.s32.totalorder %s48, %s62
    %p64 = scmp.eq.s32.totalorder %s17, 0
    %p65 = por %p63, %p64
    %s67 = sadd.s32 %s66, 1
    %p70 = scmp.eq.s32.totalorder %s11, 1
    %p71 = scmp.ne.s32.totalorder %s66, %s68
    %p72 = scmp.eq.s32.totalorder %s11, 0
    %p73 = por %p71, %p72
    %p74 = scmp.ne.s32.totalorder %s66, %s68
    %p75 = scmp.eq.s32.totalorder %s16, 1
    %p76 = por %p74, %p75
    %p77 = scmp.ne.s32.totalorder %s68, %s69
    %p78 = scmp.eq.s32.totalorder %s16, 0
    %p79 = por %p77, %p78
    %p80 = scmp.ne.s32.totalorder %s68, %s69
    %p81 = scmp.eq.s32.totalorder %s17, 1
    %p82 = por %p80, %p81
    %p84 = scmp.ne.s32.totalorder %s69, %s83
    %p85 = scmp.eq.s32.totalorder %s17, 0
    %p86 = por %p84, %p85
    %s88 = sadd.s32 %s87, 1
    %p91 = scmp.eq.s32.totalorder %s11, 1
    %p92 = scmp.ne.s32.totalorder %s87, %s89
    %p93 = scmp.eq.s32.totalorder %s11, 0
    %p94 = por %p92, %p93
    %p95 = scmp.ne.s32.totalorder %s87, %s89
    %p96 = scmp.eq.s32.totalorder %s16, 1
    %p97 = por %p95, %p96
    %p98 = scmp.ne.s32.totalorder %s89, %s90
    %p99 = scmp.eq.s32.totalorder %s16, 0
    %p100 = por %p98, %p99
    %p101 = scmp.ne.s32.totalorder %s89, %s90
    %p102 = scmp.eq.s32.totalorder %s17, 1
    %p103 = por %p101, %p102
    %p105 = scmp.ne.s32.totalorder %s90, %s104
    %p106 = scmp.eq.s32.totalorder %s17, 0
    %p107 = por %p105, %p106
    %s109 = sadd.s32 %s108, 1
    %p112 = scmp.eq.s32.totalorder %s11, 1
    %p113 = scmp.ne.s32.totalorder %s108, %s110
    %p114 = scmp.eq.s32.totalorder %s11, 0
    %p115 = por %p113, %p114
    %p116 = scmp.ne.s32.totalorder %s108, %s110
    %p117 = scmp.eq.s32.totalorder %s16, 1
    %p118 = por %p116, %p117
    %p119 = scmp.ne.s32.totalorder %s110, %s111
    %p120 = scmp.eq.s32.totalorder %s16, 0
    %p121 = por %p119, %p120
    %p122 = scmp.ne.s32.totalorder %s110, %s111
    %p123 = scmp.eq.s32.totalorder %s17, 1
    %p124 = por %p122, %p123
    %p126 = scmp.ne.s32.totalorder %s111, %s125
    %p127 = scmp.eq.s32.totalorder %s17, 0
    %p128 = por %p126, %p127
    %s129 = ssub.s32 %s11, %s18
    %p130 = scmp.eq.s32.totalorder %s129, 0
    %s132 = sadd.s32 %s131, 1
    %s133 = scalar_select %p130, %s131, %s132
    %p136 = pneg %p130
    %p137 = scmp.eq.s32.totalorder %s11, 1
    %p138 = por %p136, %p137
    %p139 = scmp.ne.s32.totalorder %s131, %s134
    %p140 = scmp.eq.s32.totalorder %s11, 0
    %p141 = por %p139, %p140
    %p142 = scmp.ne.s32.totalorder %s131, %s134
    %p143 = scmp.eq.s32.totalorder %s16, 1
    %p144 = por %p142, %p143
    %p145 = scmp.ne.s32.totalorder %s134, %s135
    %p146 = scmp.eq.s32.totalorder %s16, 0
    %p147 = por %p145, %p146
    %p148 = scmp.ne.s32.totalorder %s134, %s135
    %p149 = scmp.eq.s32.totalorder %s17, 1
    %p150 = por %p148, %p149
    %p152 = scmp.ne.s32.totalorder %s135, %s151
    %p153 = scmp.eq.s32.totalorder %s17, 0
    %p154 = por %p152, %p153
    %p155 = scmp.le.s32.totalorder 1, %s11
    %p156 = scmp.lt.s32.totalorder %s11, 3
    %p157 = pnand %p155, %p156
    %p158 = pneg %p157
    // Predicated region
    $region9: #{down_forward.5} parent=5 // pred_check
      _
    $region10: #{down_forward.5} parent=5 // pred_check_branch
      %160 = sbr.rel (%p157) target = $region12
    $region11: #{down_forward.5} parent=5 // pred_region
      %s161 = ssub.s32 %s11, 1
      // Predicated region
      $region13: #{down_forward.5} parent=11 // pred_check
        %p162 = pneg %p58
      $region14: #{down_forward.5} parent=11 // pred_check_branch
        %164 = sbr.rel (%p162) target = $region16
      $region15: #{down_forward.5} parent=11 // pred_region
        _
      $region16: #{down_forward.5} parent=11 // pred_fallthru
        _
      // Predicated region
      $region17: #{down_forward.5} parent=11 // pred_check
        %p165 = pneg %p79
      $region18: #{down_forward.5} parent=11 // pred_check_branch
        %167 = sbr.rel (%p165) target = $region20
      $region19: #{down_forward.5} parent=11 // pred_region
        _
      $region20: #{down_forward.5} parent=11 // pred_fallthru
        _
      // Predicated region
      $region21: #{down_forward.5} parent=11 // pred_check
        %p168 = pneg %p100
      $region22: #{down_forward.5} parent=11 // pred_check_branch
        %170 = sbr.rel (%p168) target = $region24
      $region23: #{down_forward.5} parent=11 // pred_region
        _
      $region24: #{down_forward.5} parent=11 // pred_fallthru
        _
      // Predicated region
      $region25: #{down_forward.5} parent=11 // pred_check
        %p171 = pneg %p121
      $region26: #{down_forward.5} parent=11 // pred_check_branch
        %173 = sbr.rel (%p171) target = $region28
      $region27: #{down_forward.5} parent=11 // pred_region
        _
      $region28: #{down_forward.5} parent=11 // pred_fallthru
        _
    $region12: #{down_forward.5} parent=5 // pred_fallthru
      _
    %p174 = scmp.lt.s32.totalorder %s11, 2
    // Predicated region
    $region29: #{down_forward.5} parent=5 // pred_check
      %p175 = pneg %p174
    $region30: #{down_forward.5} parent=5 // pred_check_branch
      %177 = sbr.rel (%p175) target = $region32
    $region31: #{down_forward.5} parent=5 // pred_region
      // Predicated region
      $region33: #{down_forward.5} parent=31 // pred_check
        %p178 = pneg %p31
      $region34: #{down_forward.5} parent=31 // pred_check_branch
        %180 = sbr.rel (%p178) target = $region36
      $region35: #{down_forward.5} parent=31 // pred_region
        %p181 = scmp.lt.s32.totalorder %s11, 1
        %s182 = scalar_select %p181, %s11, 1
        %s183 = smul.addr %s182, 8
        %s184 = smul.addr %s183, 8
        %s185 = scalar_lea.vmem %s0, %s184
      $region36: #{down_forward.5} parent=31 // pred_fallthru
        _
    $region32: #{down_forward.5} parent=5 // pred_fallthru
      _
    %p186 = scmp.le.s32.totalorder 1, %s11
    %p187 = scmp.lt.s32.totalorder %s11, 3
    %p188 = pnand %p186, %p187
    %p189 = pneg %p188
    // Predicated region
    $region37: #{down_forward.5} parent=5 // pred_check
      _
    $region38: #{down_forward.5} parent=5 // pred_check_branch
      %191 = sbr.rel (%p188) target = $region40
    $region39: #{down_forward.5} parent=5 // pred_region
      %s192 = ssub.s32 %s11, 1
      %p193 = scmp.lt.s32.totalorder %s16, 1
      %s194 = scalar_select %p193, %s16, 1
      %s195 = smul.addr %s194, 8
      %s196 = smul.addr %s195, 8
      %s197 = scalar_lea.vmem %s0, %s196
      %p198 = pneg %p37
      %p199 = pneg %p34
      %p200 = pneg %p58
      %p201 = pneg %p55
      %p202 = pneg %p79
      %p203 = pneg %p76
      %p204 = pneg %p100
      %p205 = pneg %p97
      %p206 = pneg %p121
      %p207 = pneg %p118
      %p208 = pneg %p147
      %p209 = pneg %p144
      %p210 = scmp.lt.s32.totalorder %s16, 1
      %s211 = scalar_select %p210, %s16, 1
      %s212 = smul.addr %s211, 8
      %s213 = smul.addr %s212, 8
      %s214 = scalar_lea.vmem %s5, %s213
      %p215 = scmp.lt.s32.totalorder %s16, 1
      %s216 = scalar_select %p215, %s16, 1
      %s217 = smul.addr %s216, 8
      %s218 = smul.addr %s217, 8
      %s219 = scalar_lea.vmem %s0, %s218
      %p220 = scmp.lt.s32.totalorder %s16, 1
      %s221 = scalar_select %p220, %s16, 1
      %s222 = smul.addr %s221, 8
      %s223 = smul.addr %s222, 8
      %s224 = scalar_lea.vmem %s5, %s223
      %v225 = vld [vmem:[%s1] sm:$0x1]
      %v226 = vld [vmem:[%s1 + $0x1] sm:$0x1]
      %vm227 = vcmask 57344
      %v228 = vsel %vm227, %v225, 0.0
      %v229 = vsel %vm227, %v226, 0.0
      %v230 = vadd.f32 %v228, %v229
      %v231 = vmul.f32 %v230, 0.0078125
      %v232 = vld [vmem:[%s2] sm:$0x1]
      %v233 = vld [vmem:[%s2 + $0x1] sm:$0x1]
      %v234 = vsel %vm227, %v232, 0.0
      %v235 = vsel %vm227, %v233, 0.0
      %v236 = vadd.f32 %v234, %v235
      %v237 = vmul.f32 %v236, 0.0078125
      %v238 = vmul.f32 %v231, %v231
      %v239 = vsub.f32 %v237, %v238
      %v240 = vmax.f32 %v239, 0.0
      %v241 = vld [vmem:[%s3] sm:$0x1]
      %v242 = vadd.f32 %v240, 1e-05
      %v243 = vrsqrt.pop %v242
      %v244 = vmul.f32 %v243, %v242
      %v245 = vmul.f32 %v244, %v243
      %v246 = vmul.f32 0.5, %v245
      %v247 = vsub.f32 1.5, %v246
      %v248 = vmul.f32 %v243, %v247
      %vm249 = vweird.f32 %v242
      %vm250 = vweird.f32 %v243
      %vm251 = vmor %vm249, %vm250
      %v252 = vsel %vm251, %v243, %v248
      %v253 = vmul.f32 %v241, %v252
      %v254 = vld [vmem:[%s4] sm:$0x1]
      %v255 = vmul.f32 %v231, %v253
      %v256 = vsub.f32 %v254, %v255
      %v257 = vld [vmem:[%s219] sm:$0xff]
      %v258 = vld [vmem:[%s219 + $0x8] sm:$0xff]
      %v259 = vld [vmem:[%s219 + $0x10] sm:$0xff]
      %v260 = vld [vmem:[%s219 + $0x18] sm:$0xff]
      %v261 = vld [vmem:[%s219 + $0x20] sm:$0xff]
      %v262 = vld [vmem:[%s219 + $0x28] sm:$0xff]
      %v263 = vld [vmem:[%s219 + $0x30] sm:$0xff]
      %v264 = vld [vmem:[%s219 + $0x38] sm:$0xff]
      %v266 = vperm.slane %v253, 0
      %v268 = vmul.f32 %v257, %v266
      %v269 = vmul.f32 %v258, %v266
      %v270 = vmul.f32 %v259, %v266
      %v271 = vmul.f32 %v260, %v266
      %v272 = vmul.f32 %v261, %v266
      %v273 = vmul.f32 %v262, %v266
      %v274 = vmul.f32 %v263, %v266
      %v275 = vmul.f32 %v264, %v266
      %v277 = vperm.slane %v256, 0
      %v279 = vadd.f32 %v268, %v277
      %v280 = vadd.f32 %v269, %v277
      %v281 = vadd.f32 %v270, %v277
      %v282 = vadd.f32 %v271, %v277
      %v283 = vadd.f32 %v272, %v277
      %v284 = vadd.f32 %v273, %v277
      %v285 = vadd.f32 %v274, %v277
      %v286 = vadd.f32 %v275, %v277
      %v287 = vmax.f32 %v279, 0.0
      %v288 = vmax.f32 %v280, 0.0
      %v289 = vmax.f32 %v281, 0.0
      %v290 = vmax.f32 %v282, 0.0
      %v291 = vmax.f32 %v283, 0.0
      %v292 = vmax.f32 %v284, 0.0
      %v293 = vmax.f32 %v285, 0.0
      %v294 = vmax.f32 %v286, 0.0
      %vm295 = vcmask 64512
      %296 = vst.msk [vmem:[%s224] sm:$0xff] %vm295, %v287
      %297 = vst.msk [vmem:[%s224 + $0x8] sm:$0xff] %vm295, %v288
      %298 = vst.msk [vmem:[%s224 + $0x10] sm:$0xff] %vm295, %v289
      %299 = vst.msk [vmem:[%s224 + $0x18] sm:$0xff] %vm295, %v290
      %300 = vst.msk [vmem:[%s224 + $0x20] sm:$0xff] %vm295, %v291
      %301 = vst.msk [vmem:[%s224 + $0x28] sm:$0xff] %vm295, %v292
      %302 = vst.msk [vmem:[%s224 + $0x30] sm:$0xff] %vm295, %v293
      %303 = vst.msk [vmem:[%s224 + $0x38] sm:$0xff] %vm295, %v294
      %p304 = scmp.lt.s32.totalorder %s16, 1
      %s305 = scalar_select %p304, %s16, 1
      %s306 = smul.addr %s305, 8
      %s307 = smul.addr %s306, 8
      %s308 = scalar_lea.vmem %s5, %s307
      // Predicated region
      $region41: #{down_forward.5} parent=39 // pred_check
        %p309 = pneg %p144
      $region42: #{down_forward.5} parent=39 // pred_check_branch
        %311 = sbr.rel (%p309) target = $region44
      $region43: #{down_forward.5} parent=39 // pred_region
        _
      $region44: #{down_forward.5} parent=39 // pred_fallthru
        _
    $region40: #{down_forward.5} parent=5 // pred_fallthru
      _
    %p312 = scmp.le.s32.totalorder 2, %s11
    // Predicated region
    $region45: #{down_forward.5} parent=5 // pred_check
      %p313 = pneg %p312
    $region46: #{down_forward.5} parent=5 // pred_check_branch
      %315 = sbr.rel (%p313) target = $region48
    $region47: #{down_forward.5} parent=5 // pred_region
      %s316 = ssub.s32 %s11, 2
      // Predicated region
      $region49: #{down_forward.5} parent=47 // pred_check
        %p317 = pneg %p150
      $region50: #{down_forward.5} parent=47 // pred_check_branch
        %319 = sbr.rel (%p317) target = $region52
      $region51: #{down_forward.5} parent=47 // pred_region
        %p320 = scmp.lt.s32.totalorder %s17, 1
        %s321 = scalar_select %p320, %s17, 1
        %s322 = smul.addr %s321, 8
        %s323 = smul.addr %s322, 8
        %s324 = scalar_lea.vmem %s5, %s323
      $region52: #{down_forward.5} parent=47 // pred_fallthru
        _
    $region48: #{down_forward.5} parent=5 // pred_fallthru
      _
  $region6: #{down_forward.5} parent=0 // loop_footer
    %s15 = sadd.s32 1, %s11
  $region7: #{down_forward.5} parent=0 // loop_footer_branch
    %10 = sbr.rel target = $region3
  $region8: #{down_forward.5} parent=0 // loop_exit
    _

// kernel: down_forward.3
$region0: #{down_forward.3}
  #allocation0 [shape = 'u32[]', space=smem, size = 0x4, offset = 0x4, fixed_abs, tag = 'smem constant byte address 0x4 - core index']
  #allocation1 [shape = 'u32[72,128]{1,0:T(1,128)}', space=vmem, size = 0x9000, scoped, tag = 'internal scratch']
  #allocation2 [shape = 'f32[1,10,10,4]{3,2,1,0:T(8,128)}', space=vmem, size = 0x14000, scoped, tag = 'scratch operand']
  %s0 = inlined_call_operand.vmem [shape: f32[2,16,16,4], index: 0, kind: input, shape index: {}]
  %s1 = inlined_call_operand.vmem [shape: bf16[9,4,8], index: 1, kind: input, shape index: {}]
  %s2 = inlined_call_operand.vmem [shape: f32[2,8,8,8], index: 2, kind: output, shape index: {0}]
  %s3 = inlined_call_operand.vmem [shape: f32[2,1,8], index: 3, kind: output, shape index: {1}]
  %s4 = inlined_call_operand.vmem [shape: f32[2,1,8], index: 4, kind: output, shape index: {2}]
  %5 = xla_tuple %s2, %s3, %s4
  %s6 = sld [smem:[#allocation0]]
  $region57: #{down_forward.3} parent=0
    _
  %s8 = ssub.s32 1, %s6
  %s9 = scalar_select 0, %s8, %s6
  loop: start=0, step=1, limit=4
  $region2: #{down_forward.3} parent=0 // loop_pre_header
    _
  $region3: #{down_forward.3} parent=0 // loop_header
    %s11 = sphi 0, %s15
    %p12 = scmp.ge.s32.totalorder %s11, 4
    %s21 = sphi 0, %s23
    %s24 = sphi 0, %s21
    %s25 = sphi 0, %s24
    %s41 = sphi 0, %s25
    %s45 = sphi 0, %s45
    %s47 = sphi 0, %s45
    %s48 = sphi 0, %s47
    %s62 = sphi 0, %s48
    %s68 = sphi 0, %s70
    %s71 = sphi 0, %s68
    %s72 = sphi 0, %s71
    %s88 = sphi 0, %s72
    %s94 = sphi 0, %s96
    %s97 = sphi 0, %s94
    %s98 = sphi 0, %s97
    %s114 = sphi 0, %s98
    %s120 = sphi 0, %s122
    %s123 = sphi 0, %s120
    %s124 = sphi 0, %s123
    %s140 = sphi 0, %s124
  $region4: #{down_forward.3} parent=0 // loop_header_branch
    %14 = sbr.rel (%p12) target = $region8
  $region5: #{down_forward.3} parent=0 // loop_body
    %s16 = ssub.s32 %s11, 1
    %s17 = ssub.s32 %s11, 2
    %s18 = sadd.s32 %s11, 1
    %s19 = ssub.s32 %s11, %s18
    %p20 = scmp.eq.s32.totalorder %s19, 0
    %s22 = sadd.s32 %s21, 1
    %s23 = scalar_select %p20, %s21, %s22
    %p26 = pneg %p20
    %p27 = scmp.eq.s32.totalorder %s11, 1
    %p28 = por %p26, %p27
    %p29 = scmp.ne.s32.totalorder %s21, %s24
    %p30 = scmp.eq.s32.totalorder %s11, 0
    %p31 = por %p29, %p30
    %p32 = scmp.ne.s32.totalorder %s21, %s24
    %p33 = scmp.eq.s32.totalorder %s16, 1
    %p34 = por %p32, %p33
    %p35 = scmp.ne.s32.totalorder %s24, %s25
    %p36 = scmp.eq.s32.totalorder %s16, 0
    %p37 = por %p35, %p36
    %p38 = scmp.ne.s32.totalorder %s24, %s25
    %p39 = scmp.eq.s32.totalorder %s17, 1
    %p40 = por %p38, %p39
    %p42 = scmp.ne.s32.totalorder %s25, %s41
    %p43 = scmp.eq.s32.totalorder %s17, 0
    %p44 = por %p42, %p43
    %s46 = sadd.s32 %s45, 1
    %p49 = scmp.eq.s32.totalorder %s11, 1
    %p50 = scmp.ne.s32.totalorder %s45, %s47
    %p51 = scmp.eq.s32.totalorder %s11, 0
    %p52 = por %p50, %p51
    %p53 = scmp.ne.s32.totalorder %s45, %s47
    %p54 = scmp.eq.s32.totalorder %s16, 1
    %p55 = por %p53, %p54
    %p56 = scmp.ne.s32.totalorder %s47, %s48
    %p57 = scmp.eq.s32.totalorder %s16, 0
    %p58 = por %p56, %p57
    %p59 = scmp.ne.s32.totalorder %s47, %s48
    %p60 = scmp.eq.s32.totalorder %s17, 1
    %p61 = por %p59, %p60
    %p63 = scmp.ne.s32.totalorder %s48, %s62
    %p64 = scmp.eq.s32.totalorder %s17, 0
    %p65 = por %p63, %p64
    %s66 = ssub.s32 %s11, %s18
    %p67 = scmp.eq.s32.totalorder %s66, 0
    %s69 = sadd.s32 %s68, 1
    %s70 = scalar_select %p67, %s68, %s69
    %p73 = pneg %p67
    %p74 = scmp.eq.s32.totalorder %s11, 1
    %p75 = por %p73, %p74
    %p76 = scmp.ne.s32.totalorder %s68, %s71
    %p77 = scmp.eq.s32.totalorder %s11, 0
    %p78 = por %p76, %p77
    %p79 = scmp.ne.s32.totalorder %s68, %s71
    %p80 = scmp.eq.s32.totalorder %s16, 1
    %p81 = por %p79, %p80
    %p82 = scmp.ne.s32.totalorder %s71, %s72
    %p83 = scmp.eq.s32.totalorder %s16, 0
    %p84 = por %p82, %p83
    %p85 = scmp.ne.s32.totalorder %s71, %s72
    %p86 = scmp.eq.s32.totalorder %s17, 1
    %p87 = por %p85, %p86
    %p89 = scmp.ne.s32.totalorder %s72, %s88
    %p90 = scmp.eq.s32.totalorder %s17, 0
    %p91 = por %p89, %p90
    %s92 = ssub.s32 %s11, %s18
    %p93 = scmp.eq.s32.totalorder %s92, 0
    %s95 = sadd.s32 %s94, 1
    %s96 = scalar_select %p93, %s94, %s95
    %p99 = pneg %p93
    %p100 = scmp.eq.s32.totalorder %s11, 1
    %p101 = por %p99, %p100
    %p102 = scmp.ne.s32.totalorder %s94, %s97
    %p103 = scmp.eq.s32.totalorder %s11, 0
    %p104 = por %p102, %p103
    %p105 = scmp.ne.s32.totalorder %s94, %s97
    %p106 = scmp.eq.s32.totalorder %s16, 1
    %p107 = por %p105, %p106
    %p108 = scmp.ne.s32.totalorder %s97, %s98
    %p109 = scmp.eq.s32.totalorder %s16, 0
    %p110 = por %p108, %p109
    %p111 = scmp.ne.s32.totalorder %s97, %s98
    %p112 = scmp.eq.s32.totalorder %s17, 1
    %p113 = por %p111, %p112
    %p115 = scmp.ne.s32.totalorder %s98, %s114
    %p116 = scmp.eq.s32.totalorder %s17, 0
    %p117 = por %p115, %p116
    %s118 = ssub.s32 %s11, %s18
    %p119 = scmp.eq.s32.totalorder %s118, 0
    %s121 = sadd.s32 %s120, 1
    %s122 = scalar_select %p119, %s120, %s121
    %p125 = pneg %p119
    %p126 = scmp.eq.s32.totalorder %s11, 1
    %p127 = por %p125, %p126
    %p128 = scmp.ne.s32.totalorder %s120, %s123
    %p129 = scmp.eq.s32.totalorder %s11, 0
    %p130 = por %p128, %p129
    %p131 = scmp.ne.s32.totalorder %s120, %s123
    %p132 = scmp.eq.s32.totalorder %s16, 1
    %p133 = por %p131, %p132
    %p134 = scmp.ne.s32.totalorder %s123, %s124
    %p135 = scmp.eq.s32.totalorder %s16, 0
    %p136 = por %p134, %p135
    %p137 = scmp.ne.s32.totalorder %s123, %s124
    %p138 = scmp.eq.s32.totalorder %s17, 1
    %p139 = por %p137, %p138
    %p141 = scmp.ne.s32.totalorder %s124, %s140
    %p142 = scmp.eq.s32.totalorder %s17, 0
    %p143 = por %p141, %p142
    %p144 = scmp.le.s32.totalorder 1, %s11
    %p145 = scmp.lt.s32.totalorder %s11, 3
    %p146 = pnand %p144, %p145
    %p147 = pneg %p146
    // Predicated region
    $region9: #{down_forward.3} parent=5 // pred_check
      _
    $region10: #{down_forward.3} parent=5 // pred_check_branch
      %149 = sbr.rel (%p146) target = $region12
    $region11: #{down_forward.3} parent=5 // pred_region
      %s150 = ssub.s32 %s11, 1
      // Predicated region
      $region13: #{down_forward.3} parent=11 // pred_check
        %p151 = pneg %p58
      $region14: #{down_forward.3} parent=11 // pred_check_branch
        %153 = sbr.rel (%p151) target = $region16
      $region15: #{down_forward.3} parent=11 // pred_region
        _
      $region16: #{down_forward.3} parent=11 // pred_fallthru
        _
    $region12: #{down_forward.3} parent=5 // pred_fallthru
      _
    %p154 = scmp.lt.s32.totalorder %s11, 2
    // Predicated region
    $region17: #{down_forward.3} parent=5 // pred_check
      %p155 = pneg %p154
    $region18: #{down_forward.3} parent=5 // pred_check_branch
      %157 = sbr.rel (%p155) target = $region20
    $region19: #{down_forward.3} parent=5 // pred_region
      // Predicated region
      $region21: #{down_forward.3} parent=19 // pred_check
        %p158 = pneg %p31
      $region22: #{down_forward.3} parent=19 // pred_check_branch
        %160 = sbr.rel (%p158) target = $region24
      $region23: #{down_forward.3} parent=19 // pred_region
        %p161 = scmp.lt.s32.totalorder %s11, 1
        %s162 = scalar_select %p161, %s11, 1
        %s163 = smul.addr %s162, 32
        %s164 = smul.addr %s163, 8
        %s165 = scalar_lea.vmem %s0, %s164
      $region24: #{down_forward.3} parent=19 // pred_fallthru
        _
    $region20: #{down_forward.3} parent=5 // pred_fallthru
      _
    %p166 = scmp.le.s32.totalorder 1, %s11
    %p167 = scmp.lt.s32.totalorder %s11, 3
    %p168 = pnand %p166, %p167
    %p169 = pneg %p168
    // Predicated region
    $region25: #{down_forward.3} parent=5 // pred_check
      _
    $region26: #{down_forward.3} parent=5 // pred_check_branch
      %171 = sbr.rel (%p168) target = $region28
    $region27: #{down_forward.3} parent=5 // pred_region
      %s172 = ssub.s32 %s11, 1
      %p173 = scmp.lt.s32.totalorder %s16, 1
      %s174 = scalar_select %p173, %s16, 1
      %s175 = smul.addr %s174, 32
      %s176 = smul.addr %s175, 8
      %s177 = scalar_lea.vmem %s0, %s176
      %p178 = pneg %p37
      %p179 = pneg %p34
      %p180 = pneg %p58
      %p181 = pneg %p55
      %p182 = pneg %p84
      %p183 = pneg %p81
      %p184 = scmp.lt.s32.totalorder %s16, 1
      %s185 = scalar_select %p184, %s16, 1
      %s186 = smul.addr %s185, 8
      %s187 = smul.addr %s186, 8
      %s188 = scalar_lea.vmem %s2, %s187
      %p189 = pneg %p110
      %p190 = pneg %p107
      %p191 = scmp.lt.s32.totalorder %s16, 1
      %s192 = scalar_select %p191, %s16, 1
      %s193 = scalar_lea.vmem %s3, %s192
      %p194 = pneg %p136
      %p195 = pneg %p133
      %p196 = scmp.lt.s32.totalorder %s16, 1
      %s197 = scalar_select %p196, %s16, 1
      %s198 = scalar_lea.vmem %s4, %s197
      %p199 = scmp.lt.s32.totalorder %s16, 1
      %s200 = scalar_select %p199, %s16, 1
      %s201 = smul.addr %s200, 32
      %s202 = smul.addr %s201, 8
      %s203 = scalar_lea.vmem %s0, %s202
      %p204 = scmp.lt.s32.totalorder %s16, 1
      %s205 = scalar_select %p204, %s16, 1
      %s206 = smul.addr %s205, 8
      %s207 = smul.addr %s206, 8
      %s208 = scalar_lea.vmem %s2, %s207
      %p209 = scmp.lt.s32.totalorder %s16, 1
      %s210 = scalar_select %p209, %s16, 1
      %s211 = scalar_lea.vmem %s3, %s210
      %p212 = scmp.lt.s32.totalorder %s16, 1
      %s213 = scalar_select %p212, %s16, 1
      %s214 = scalar_lea.vmem %s4, %s213
      %v216 = vld [vmem:[%s203] ss:$2 sm:$0xff]
      %s217 = scalar_lea.vmem %s203, 32
      %v218 = vld [vmem:[%s217] ss:$2 sm:$0xff]
      %s219 = scalar_lea.vmem %s203, 64
      %v220 = vld [vmem:[%s219] ss:$2 sm:$0xff]
      %s221 = scalar_lea.vmem %s203, 96
      %v222 = vld [vmem:[%s221] ss:$2 sm:$0xff]
      %s223 = scalar_lea.vmem %s203, 128
      %v224 = vld [vmem:[%s223] ss:$2 sm:$0xff]
      %s225 = scalar_lea.vmem %s203, 160
      %v226 = vld [vmem:[%s225] ss:$2 sm:$0xff]
      %s227 = scalar_lea.vmem %s203, 192
      %v228 = vld [vmem:[%s227] ss:$2 sm:$0xff]
      %s229 = scalar_lea.vmem %s203, 224
      %v230 = vld [vmem:[%s229] ss:$2 sm:$0xff]
      %s231 = scalar_lea.vmem %s203, 1
      %v232 = vld [vmem:[%s231] ss:$2 sm:$0xff]
      %s233 = scalar_lea.vmem %s203, 33
      %v234 = vld [vmem:[%s233] ss:$2 sm:$0xff]
      %s235 = scalar_lea.vmem %s203, 65
      %v236 = vld [vmem:[%s235] ss:$2 sm:$0xff]
      %s237 = scalar_lea.vmem %s203, 97
      %v238 = vld [vmem:[%s237] ss:$2 sm:$0xff]
      %s239 = scalar_lea.vmem %s203, 129
      %v240 = vld [vmem:[%s239] ss:$2 sm:$0xff]
      %s241 = scalar_lea.vmem %s203, 161
      %v242 = vld [vmem:[%s241] ss:$2 sm:$0xff]
      %s243 = scalar_lea.vmem %s203, 193
      %v244 = vld [vmem:[%s243] ss:$2 sm:$0xff]
      %s245 = scalar_lea.vmem %s203, 225
      %v246 = vld [vmem:[%s245] ss:$2 sm:$0xff]
      %s247 = scalar_lea.vmem %s203, 16
      %v248 = vld [vmem:[%s247] ss:$2 sm:$0xff]
      %s249 = scalar_lea.vmem %s247, 32
      %v250 = vld [vmem:[%s249] ss:$2 sm:$0xff]
      %s251 = scalar_lea.vmem %s247, 64
      %v252 = vld [vmem:[%s251] ss:$2 sm:$0xff]
      %s253 = scalar_lea.vmem %s247, 96
      %v254 = vld [vmem:[%s253] ss:$2 sm:$0xff]
      %s255 = scalar_lea.vmem %s247, 128
      %v256 = vld [vmem:[%s255] ss:$2 sm:$0xff]
      %s257 = scalar_lea.vmem %s247, 160
      %v258 = vld [vmem:[%s257] ss:$2 sm:$0xff]
      %s259 = scalar_lea.vmem %s247, 192
      %v260 = vld [vmem:[%s259] ss:$2 sm:$0xff]
      %s261 = scalar_lea.vmem %s247, 224
      %v262 = vld [vmem:[%s261] ss:$2 sm:$0xff]
      %s263 = scalar_lea.vmem %s247, 1
      %v264 = vld [vmem:[%s263] ss:$2 sm:$0xff]
      %s265 = scalar_lea.vmem %s247, 33
      %v266 = vld [vmem:[%s265] ss:$2 sm:$0xff]
      %s267 = scalar_lea.vmem %s247, 65
      %v268 = vld [vmem:[%s267] ss:$2 sm:$0xff]
      %s269 = scalar_lea.vmem %s247, 97
      %v270 = vld [vmem:[%s269] ss:$2 sm:$0xff]
      %s271 = scalar_lea.vmem %s247, 129
      %v272 = vld [vmem:[%s271] ss:$2 sm:$0xff]
      %s273 = scalar_lea.vmem %s247, 161
      %v274 = vld [vmem:[%s273] ss:$2 sm:$0xff]
      %s275 = scalar_lea.vmem %s247, 193
      %v276 = vld [vmem:[%s275] ss:$2 sm:$0xff]
      %s277 = scalar_lea.vmem %s247, 225
      %v278 = vld [vmem:[%s277] ss:$2 sm:$0xff]
      %v279 = vmax.f32 %v216, %v232
      %v280 = vmax.f32 %v218, %v234
      %v281 = vmax.f32 %v220, %v236
      %v282 = vmax.f32 %v222, %v238
      %v283 = vmax.f32 %v224, %v240
      %v284 = vmax.f32 %v226, %v242
      %v285 = vmax.f32 %v228, %v244
      %v286 = vmax.f32 %v230, %v246
      %v287 = vmax.f32 %v248, %v264
      %v288 = vmax.f32 %v250, %v266
      %v289 = vmax.f32 %v252, %v268
      %v290 = vmax.f32 %v254, %v270
      %v291 = vmax.f32 %v256, %v272
      %v292 = vmax.f32 %v258, %v274
      %v293 = vmax.f32 %v260, %v276
      %v294 = vmax.f32 %v262, %v278
      %v295 = vmax.f32 %v279, %v287
      %v296 = vmax.f32 %v280, %v288
      %v297 = vmax.f32 %v281, %v289
      %v298 = vmax.f32 %v282, %v290
      %v299 = vmax.f32 %v283, %v291
      %v300 = vmax.f32 %v284, %v292
      %v301 = vmax.f32 %v285, %v293
      %v302 = vmax.f32 %v286, %v294
      %vm303 = vcmask 31744
      %304 = vst.msk [vmem:[#allocation2] sm:$0xff] %vm303, 0.0
      %vm305 = vcmask 25600
      %306 = vst.msk [vmem:[#allocation2 + $0x8] sm:$0x3] %vm305, 0.0
      %307 = vst.msk [vmem:[#allocation2 + $0x10] sm:$0xff] %vm303, 0.0
      %308 = vst.msk [vmem:[#allocation2 + $0x18] sm:$0x3] %vm305, 0.0
      %309 = vst.msk [vmem:[#allocation2 + $0x20] sm:$0xff] %vm303, 0.0
      %310 = vst.msk [vmem:[#allocation2 + $0x28] sm:$0x3] %vm305, 0.0
      %311 = vst.msk [vmem:[#allocation2 + $0x30] sm:$0xff] %vm303, 0.0
      %312 = vst.msk [vmem:[#allocation2 + $0x38] sm:$0x3] %vm305, 0.0
      %313 = vst.msk [vmem:[#allocation2 + $0x40] sm:$0xff] %vm303, 0.0
      %314 = vst.msk [vmem:[#allocation2 + $0x48] sm:$0x3] %vm305, 0.0
      %315 = vst.msk [vmem:[#allocation2 + $0x50] sm:$0xff] %vm303, 0.0
      %316 = vst.msk [vmem:[#allocation2 + $0x58] sm:$0x3] %vm305, 0.0
      %317 = vst.msk [vmem:[#allocation2 + $0x60] sm:$0xff] %vm303, 0.0
      %318 = vst.msk [vmem:[#allocation2 + $0x68] sm:$0x3] %vm305, 0.0
      %319 = vst.msk [vmem:[#allocation2 + $0x70] sm:$0xff] %vm303, 0.0
      %320 = vst.msk [vmem:[#allocation2 + $0x78] sm:$0x3] %vm305, 0.0
      %321 = vst.msk [vmem:[#allocation2 + $0x80] sm:$0xff] %vm303, 0.0
      %322 = vst.msk [vmem:[#allocation2 + $0x88] sm:$0x3] %vm305, 0.0
      %323 = vst.msk [vmem:[#allocation2 + $0x90] sm:$0xff] %vm303, 0.0
      %324 = vst.msk [vmem:[#allocation2 + $0x98] sm:$0x3] %vm305, 0.0
      %s325 = scalar_lea.vmem [#allocation2], 16
      %326 = vst.msk [vmem:[%s325 + $0x1] sm:$0xff] %vm303, %v295
      %327 = vst.msk [vmem:[%s325 + $0x11] sm:$0xff] %vm303, %v296
      %328 = vst.msk [vmem:[%s325 + $0x21] sm:$0xff] %vm303, %v297
      %329 = vst.msk [vmem:[%s325 + $0x31] sm:$0xff] %vm303, %v298
      %330 = vst.msk [vmem:[%s325 + $0x41] sm:$0xff] %vm303, %v299
      %331 = vst.msk [vmem:[%s325 + $0x51] sm:$0xff] %vm303, %v300
      %332 = vst.msk [vmem:[%s325 + $0x61] sm:$0xff] %vm303, %v301
      %333 = vst.msk [vmem:[%s325 + $0x71] sm:$0xff] %vm303, %v302
      %v334 = vld [vmem:[#allocation2] sm:$0xff]
      %v335 = vld [vmem:[#allocation2 + $0x10] sm:$0xff]
      %v336 = vld [vmem:[#allocation2 + $0x20] sm:$0xff]
      %v337 = vld [vmem:[#allocation2 + $0x30] sm:$0xff]
      %v338 = vld [vmem:[#allocation2 + $0x40] sm:$0xff]
      %v339 = vld [vmem:[#allocation2 + $0x50] sm:$0xff]
      %v340 = vld [vmem:[#allocation2 + $0x60] sm:$0xff]
      %v341 = vld [vmem:[#allocation2 + $0x70] sm:$0xff]
      %v342 = vpack.c.bf16 %v335, %v334
      %v343 = vpack.c.bf16 %v337, %v336
      %v344 = vpack.c.bf16 %v339, %v338
      %v345 = vpack.c.bf16 %v341, %v340
      %v346 = vld [vmem:[%s1] sm:$0x3]
      %v347 = vld [vmem:[#allocation2 + $0x1] sm:$0xff]
      %v348 = vld [vmem:[#allocation2 + $0x11] sm:$0xff]
      %v349 = vld [vmem:[#allocation2 + $0x21] sm:$0xff]
      %v350 = vld [vmem:[#allocation2 + $0x31] sm:$0xff]
      %v351 = vld [vmem:[#allocation2 + $0x41] sm:$0xff]
      %v352 = vld [vmem:[#allocation2 + $0x51] sm:$0xff]
      %v353 = vld [vmem:[#allocation2 + $0x61] sm:$0xff]
      %v354 = vld [vmem:[#allocation2 + $0x71] sm:$0xff]
      %v355 = vpack.c.bf16 %v348, %v347
      %v356 = vpack.c.bf16 %v350, %v349
      %v357 = vpack.c.bf16 %v352, %v351
      %v358 = vpack.c.bf16 %v354, %v353
      %s359 = scalar_lea.vmem %s1, 2
      %v360 = vld [vmem:[%s359] sm:$0x3]
      %v362 = vsel %vm303, %v355, 0
      %v365 = vsel %vm303, %v356, 0
      %v368 = vsel %vm303, %v357, 0
      %v371 = vsel %vm303, %v358, 0
      %vm373 = vcmask 1041408
      %v375 = vsel %vm373, %v360, 0
      %377 = vmatpush.bf16.msra.mxu0 0
      %378 = vmatpush.bf16.msra.mxu0 0
      %379 = vmatpush.bf16.msra.mxu0 0
      %380 = vmatpush.bf16.msra.mxu0 0
      %381 = vmatpush.bf16.msra.mxu0 0
      %382 = vmatpush.bf16.msra.mxu0 0
      %383 = vmatpush.bf16.msra.mxu0 0
      %384 = vmatpush.bf16.msra.mxu0 %v375
      %385 = vmatmul.bf16.gmra.mxu0 %v362
      %v386 = vpop.f32.mrf.mxu0
      %v387 = vadd.f32 0.0, %v386
      %v388 = vpop.f32.mrf.mxu0
      %v389 = vadd.f32 0.0, %v388
      %390 = vmatmul.bf16.gmra.mxu0 %v365
      %v391 = vpop.f32.mrf.mxu0
      %v392 = vadd.f32 0.0, %v391
      %v393 = vpop.f32.mrf.mxu0
      %v394 = vadd.f32 0.0, %v393
      %395 = vmatmul.bf16.gmra.mxu0 %v368
      %v396 = vpop.f32.mrf.mxu0
      %v397 = vadd.f32 0.0, %v396
      %v398 = vpop.f32.mrf.mxu0
      %v399 = vadd.f32 0.0, %v398
      %400 = vmatmul.bf16.gmra.mxu0 %v371
      %v401 = vpop.f32.mrf.mxu0
      %v402 = vadd.f32 0.0, %v401
      %v403 = vpop.f32.mrf.mxu0
      %v404 = vadd.f32 0.0, %v403
      %405 = vdwg.mxu0
      %v407 = vsel %vm303, %v342, 0
      %v410 = vsel %vm303, %v343, 0
      %v413 = vsel %vm303, %v344, 0
      %v416 = vsel %vm303, %v345, 0
      %v419 = vsel %vm373, %v346, 0
      %421 = vmatpush.bf16.msra.mxu0 0
      %422 = vmatpush.bf16.msra.mxu0 0
      %423 = vmatpush.bf16.msra.mxu0 0
      %424 = vmatpush.bf16.msra.mxu0 0
      %425 = vmatpush.bf16.msra.mxu0 0
      %426 = vmatpush.bf16.msra.mxu0 0
      %427 = vmatpush.bf16.msra.mxu0 0
      %428 = vmatpush.bf16.msra.mxu0 %v419
      %429 = vmatmul.bf16.gmra.mxu0 %v407
      %v430 = vpop.f32.mrf.mxu0
      %v431 = vadd.f32 %v387, %v430
      %v432 = vpop.f32.mrf.mxu0
      %v433 = vadd.f32 %v389, %v432
      %434 = vmatmul.bf16.gmra.mxu0 %v410
      %v435 = vpop.f32.mrf.mxu0
      %v436 = vadd.f32 %v392, %v435
      %v437 = vpop.f32.mrf.mxu0
      %v438 = vadd.f32 %v394, %v437
      %439 = vmatmul.bf16.gmra.mxu0 %v413
      %v440 = vpop.f32.mrf.mxu0
      %v441 = vadd.f32 %v397, %v440
      %v442 = vpop.f32.mrf.mxu0
      %v443 = vadd.f32 %v399, %v442
      %444 = vmatmul.bf16.gmra.mxu0 %v416
      %v445 = vpop.f32.mrf.mxu0
      %v446 = vadd.f32 %v402, %v445
      %v447 = vpop.f32.mrf.mxu0
      %v448 = vadd.f32 %v404, %v447
      %449 = vdwg.mxu0
      %v450 = vld [vmem:[#allocation2 + $0x2] sm:$0xff]
      %v451 = vld [vmem:[#allocation2 + $0x12] sm:$0xff]
      %v452 = vld [vmem:[#allocation2 + $0x22] sm:$0xff]
      %v453 = vld [vmem:[#allocation2 + $0x32] sm:$0xff]
      %v454 = vld [vmem:[#allocation2 + $0x42] sm:$0xff]
      %v455 = vld [vmem:[#allocation2 + $0x52] sm:$0xff]
      %v456 = vld [vmem:[#allocation2 + $0x62] sm:$0xff]
      %v457 = vld [vmem:[#allocation2 + $0x72] sm:$0xff]
      %v458 = vpack.c.bf16 %v451, %v450
      %v459 = vpack.c.bf16 %v453, %v452
      %v460 = vpack.c.bf16 %v455, %v454
      %v461 = vpack.c.bf16 %v457, %v456
      %s462 = scalar_lea.vmem %s1, 4
      %v463 = vld [vmem:[%s462] sm:$0x3]
      %v465 = vsel %vm303, %v458, 0
      %v468 = vsel %vm303, %v459, 0
      %v471 = vsel %vm303, %v460, 0
      %v474 = vsel %vm303, %v461, 0
      %v477 = vsel %vm373, %v463, 0
      %479 = vmatpush.bf16.msra.mxu0 0
      %480 = vmatpush.bf16.msra.mxu0 0
      %481 = vmatpush.bf16.msra.mxu0 0
      %482 = vmatpush.bf16.msra.mxu0 0
      %483 = vmatpush.bf16.msra.mxu0 0
      %484 = vmatpush.bf16.msra.mxu0 0
      %485 = vmatpush.bf16.msra.mxu0 0
      %486 = vmatpush.bf16.msra.mxu0 %v477
      %487 = vmatmul.bf16.gmra.mxu0 %v465
      %v488 = vpop.f32.mrf.mxu0
      %v489 = vadd.f32 0.0, %v488
      %v490 = vpop.f32.mrf.mxu0
      %v491 = vadd.f32 0.0, %v490
      %492 = vmatmul.bf16.gmra.mxu0 %v468
      %v493 = vpop.f32.mrf.mxu0
      %v494 = vadd.f32 0.0, %v493
      %v495 = vpop.f32.mrf.mxu0
      %v496 = vadd.f32 0.0, %v495
      %497 = vmatmul.bf16.gmra.mxu0 %v471
      %v498 = vpop.f32.mrf.mxu0
      %v499 = vadd.f32 0.0, %v498
      %v500 = vpop.f32.mrf.mxu0
      %v501 = vadd.f32 0.0, %v500
      %502 = vmatmul.bf16.gmra.mxu0 %v474
      %v503 = vpop.f32.mrf.mxu0
      %v504 = vadd.f32 0.0, %v503
      %v505 = vpop.f32.mrf.mxu0
      %v506 = vadd.f32 0.0, %v505
      %507 = vdwg.mxu0
      %v508 = vadd.f32 %v431, %v489
      %v509 = vadd.f32 %v433, %v491
      %v510 = vadd.f32 %v436, %v494
      %v511 = vadd.f32 %v438, %v496
      %v512 = vadd.f32 %v441, %v499
      %v513 = vadd.f32 %v443, %v501
      %v514 = vadd.f32 %v446, %v504
      %v515 = vadd.f32 %v448, %v506
      %v516 = vld [vmem:[%s325] sm:$0xff]
      %v517 = vld [vmem:[%s325 + $0x10] sm:$0xff]
      %v518 = vld [vmem:[%s325 + $0x20] sm:$0xff]
      %v519 = vld [vmem:[%s325 + $0x30] sm:$0xff]
      %v520 = vld [vmem:[%s325 + $0x40] sm:$0xff]
      %v521 = vld [vmem:[%s325 + $0x50] sm:$0xff]
      %v522 = vld [vmem:[%s325 + $0x60] sm:$0xff]
      %v523 = vld [vmem:[%s325 + $0x70] sm:$0xff]
      %v524 = vpack.c.bf16 %v517, %v516
      %v525 = vpack.c.bf16 %v519, %v518
      %v526 = vpack.c.bf16 %v521, %v520
      %v527 = vpack.c.bf16 %v523, %v522
      %s528 = scalar_lea.vmem %s1, 6
      %v529 = vld [vmem:[%s528] sm:$0x3]
      %v531 = vsel %vm303, %v524, 0
      %v534 = vsel %vm303, %v525, 0
      %v537 = vsel %vm303, %v526, 0
      %v540 = vsel %vm303, %v527, 0
      %v543 = vsel %vm373, %v529, 0
      %545 = vmatpush.bf16.msra.mxu0 0
      %546 = vmatpush.bf16.msra.mxu0 0
      %547 = vmatpush.bf16.msra.mxu0 0
      %548 = vmatpush.bf16.msra.mxu0 0
      %549 = vmatpush.bf16.msra.mxu0 0
      %550 = vmatpush.bf16.msra.mxu0 0
      %551 = vmatpush.bf16.msra.mxu0 0
      %552 = vmatpush.bf16.msra.mxu0 %v543
      %553 = vmatmul.bf16.gmra.mxu0 %v531
      %v554 = vpop.f32.mrf.mxu0
      %v555 = vadd.f32 0.0, %v554
      %v556 = vpop.f32.mrf.mxu0
      %v557 = vadd.f32 0.0, %v556
      %558 = vmatmul.bf16.gmra.mxu0 %v534
      %v559 = vpop.f32.mrf.mxu0
      %v560 = vadd.f32 0.0, %v559
      %v561 = vpop.f32.mrf.mxu0
      %v562 = vadd.f32 0.0, %v561
      %563 = vmatmul.bf16.gmra.mxu0 %v537
      %v564 = vpop.f32.mrf.mxu0
      %v565 = vadd.f32 0.0, %v564
      %v566 = vpop.f32.mrf.mxu0
      %v567 = vadd.f32 0.0, %v566
      %568 = vmatmul.bf16.gmra.mxu0 %v540
      %v569 = vpop.f32.mrf.mxu0
      %v570 = vadd.f32 0.0, %v569
      %v571 = vpop.f32.mrf.mxu0
      %v572 = vadd.f32 0.0, %v571
      %573 = vdwg.mxu0
      %v574 = vadd.f32 %v508, %v555
      %v575 = vadd.f32 %v509, %v557
      %v576 = vadd.f32 %v510, %v560
      %v577 = vadd.f32 %v511, %v562
      %v578 = vadd.f32 %v512, %v565
      %v579 = vadd.f32 %v513, %v567
      %v580 = vadd.f32 %v514, %v570
      %v581 = vadd.f32 %v515, %v572
      %v582 = vld [vmem:[%s325 + $0x1] sm:$0xff]
      %v583 = vld [vmem:[%s325 + $0x11] sm:$0xff]
      %v584 = vld [vmem:[%s325 + $0x21] sm:$0xff]
      %v585 = vld [vmem:[%s325 + $0x31] sm:$0xff]
      %v586 = vld [vmem:[%s325 + $0x41] sm:$0xff]
      %v587 = vld [vmem:[%s325 + $0x51] sm:$0xff]
      %v588 = vld [vmem:[%s325 + $0x61] sm:$0xff]
      %v589 = vld [vmem:[%s325 + $0x71] sm:$0xff]
      %v590 = vpack.c.bf16 %v583, %v582
      %v591 = vpack.c.bf16 %v585, %v584
      %v592 = vpack.c.bf16 %v587, %v586
      %v593 = vpack.c.bf16 %v589, %v588
      %s594 = scalar_lea.vmem %s1, 8
      %v595 = vld [vmem:[%s594] sm:$0x3]
      %v597 = vsel %vm303, %v590, 0
      %v600 = vsel %vm303, %v591, 0
      %v603 = vsel %vm303, %v592, 0
      %v606 = vsel %vm303, %v593, 0
      %v609 = vsel %vm373, %v595, 0
      %611 = vmatpush.bf16.msra.mxu0 0
      %612 = vmatpush.bf16.msra.mxu0 0
      %613 = vmatpush.bf16.msra.mxu0 0
      %614 = vmatpush.bf16.msra.mxu0 0
      %615 = vmatpush.bf16.msra.mxu0 0
      %616 = vmatpush.bf16.msra.mxu0 0
      %617 = vmatpush.bf16.msra.mxu0 0
      %618 = vmatpush.bf16.msra.mxu0 %v609
      %619 = vmatmul.bf16.gmra.mxu0 %v597
      %v620 = vpop.f32.mrf.mxu0
      %v621 = vadd.f32 0.0, %v620
      %v622 = vpop.f32.mrf.mxu0
      %v623 = vadd.f32 0.0, %v622
      %624 = vmatmul.bf16.gmra.mxu0 %v600
      %v625 = vpop.f32.mrf.mxu0
      %v626 = vadd.f32 0.0, %v625
      %v627 = vpop.f32.mrf.mxu0
      %v628 = vadd.f32 0.0, %v627
      %629 = vmatmul.bf16.gmra.mxu0 %v603
      %v630 = vpop.f32.mrf.mxu0
      %v631 = vadd.f32 0.0, %v630
      %v632 = vpop.f32.mrf.mxu0
      %v633 = vadd.f32 0.0, %v632
      %634 = vmatmul.bf16.gmra.mxu0 %v606
      %v635 = vpop.f32.mrf.mxu0
      %v636 = vadd.f32 0.0, %v635
      %v637 = vpop.f32.mrf.mxu0
      %v638 = vadd.f32 0.0, %v637
      %639 = vdwg.mxu0
      %v640 = vadd.f32 %v574, %v621
      %v641 = vadd.f32 %v575, %v623
      %v642 = vadd.f32 %v576, %v626
      %v643 = vadd.f32 %v577, %v628
      %v644 = vadd.f32 %v578, %v631
      %v645 = vadd.f32 %v579, %v633
      %v646 = vadd.f32 %v580, %v636
      %v647 = vadd.f32 %v581, %v638
      %v648 = vld [vmem:[%s325 + $0x2] sm:$0xff]
      %v649 = vld [vmem:[%s325 + $0x12] sm:$0xff]
      %v650 = vld [vmem:[%s325 + $0x22] sm:$0xff]
      %v651 = vld [vmem:[%s325 + $0x32] sm:$0xff]
      %v652 = vld [vmem:[%s325 + $0x42] sm:$0xff]
      %v653 = vld [vmem:[%s325 + $0x52] sm:$0xff]
      %v654 = vld [vmem:[%s325 + $0x62] sm:$0xff]
      %v655 = vld [vmem:[%s325 + $0x72] sm:$0xff]
      %v656 = vpack.c.bf16 %v649, %v648
      %v657 = vpack.c.bf16 %v651, %v650
      %v658 = vpack.c.bf16 %v653, %v652
      %v659 = vpack.c.bf16 %v655, %v654
      %s660 = scalar_lea.vmem %s1, 10
      %v661 = vld [vmem:[%s660] sm:$0x3]
      %v663 = vsel %vm303, %v656, 0
      %v666 = vsel %vm303, %v657, 0
      %v669 = vsel %vm303, %v658, 0
      %v672 = vsel %vm303, %v659, 0
      %v675 = vsel %vm373, %v661, 0
      %677 = vmatpush.bf16.msra.mxu0 0
      %678 = vmatpush.bf16.msra.mxu0 0
      %679 = vmatpush.bf16.msra.mxu0 0
      %680 = vmatpush.bf16.msra.mxu0 0
      %681 = vmatpush.bf16.msra.mxu0 0
      %682 = vmatpush.bf16.msra.mxu0 0
      %683 = vmatpush.bf16.msra.mxu0 0
      %684 = vmatpush.bf16.msra.mxu0 %v675
      %685 = vmatmul.bf16.gmra.mxu0 %v663
      %v686 = vpop.f32.mrf.mxu0
      %v687 = vadd.f32 0.0, %v686
      %v688 = vpop.f32.mrf.mxu0
      %v689 = vadd.f32 0.0, %v688
      %690 = vmatmul.bf16.gmra.mxu0 %v666
      %v691 = vpop.f32.mrf.mxu0
      %v692 = vadd.f32 0.0, %v691
      %v693 = vpop.f32.mrf.mxu0
      %v694 = vadd.f32 0.0, %v693
      %695 = vmatmul.bf16.gmra.mxu0 %v669
      %v696 = vpop.f32.mrf.mxu0
      %v697 = vadd.f32 0.0, %v696
      %v698 = vpop.f32.mrf.mxu0
      %v699 = vadd.f32 0.0, %v698
      %700 = vmatmul.bf16.gmra.mxu0 %v672
      %v701 = vpop.f32.mrf.mxu0
      %v702 = vadd.f32 0.0, %v701
      %v703 = vpop.f32.mrf.mxu0
      %v704 = vadd.f32 0.0, %v703
      %705 = vdwg.mxu0
      %v706 = vadd.f32 %v640, %v687
      %v707 = vadd.f32 %v641, %v689
      %v708 = vadd.f32 %v642, %v692
      %v709 = vadd.f32 %v643, %v694
      %v710 = vadd.f32 %v644, %v697
      %v711 = vadd.f32 %v645, %v699
      %v712 = vadd.f32 %v646, %v702
      %v713 = vadd.f32 %v647, %v704
      %s714 = scalar_lea.vmem [#allocation2], 32
      %v715 = vld [vmem:[%s714] sm:$0xff]
      %v716 = vld [vmem:[%s714 + $0x10] sm:$0xff]
      %v717 = vld [vmem:[%s714 + $0x20] sm:$0xff]
      %v718 = vld [vmem:[%s714 + $0x30] sm:$0xff]
      %v719 = vld [vmem:[%s714 + $0x40] sm:$0xff]
      %v720 = vld [vmem:[%s714 + $0x50] sm:$0xff]
      %v721 = vld [vmem:[%s714 + $0x60] sm:$0xff]
      %v722 = vld [vmem:[%s714 + $0x70] sm:$0xff]
      %v723 = vpack.c.bf16 %v716, %v715
      %v724 = vpack.c.bf16 %v718, %v717
      %v725 = vpack.c.bf16 %v720, %v719
      %v726 = vpack.c.bf16 %v722, %v721
      %s727 = scalar_lea.vmem %s1, 12
      %v728 = vld [vmem:[%s727] sm:$0x3]
      %v730 = vsel %vm303, %v723, 0
      %v733 = vsel %vm303, %v724, 0
      %v736 = vsel %vm303, %v725, 0
      %v739 = vsel %vm303, %v726, 0
      %v742 = vsel %vm373, %v728, 0
      %744 = vmatpush.bf16.msra.mxu0 0
      %745 = vmatpush.bf16.msra.mxu0 0
      %746 = vmatpush.bf16.msra.mxu0 0
      %747 = vmatpush.bf16.msra.mxu0 0
      %748 = vmatpush.bf16.msra.mxu0 0
      %749 = vmatpush.bf16.msra.mxu0 0
      %750 = vmatpush.bf16.msra.mxu0 0
      %751 = vmatpush.bf16.msra.mxu0 %v742
      %752 = vmatmul.bf16.gmra.mxu0 %v730
      %v753 = vpop.f32.mrf.mxu0
      %v754 = vadd.f32 0.0, %v753
      %v755 = vpop.f32.mrf.mxu0
      %v756 = vadd.f32 0.0, %v755
      %757 = vmatmul.bf16.gmra.mxu0 %v733
      %v758 = vpop.f32.mrf.mxu0
      %v759 = vadd.f32 0.0, %v758
      %v760 = vpop.f32.mrf.mxu0
      %v761 = vadd.f32 0.0, %v760
      %762 = vmatmul.bf16.gmra.mxu0 %v736
      %v763 = vpop.f32.mrf.mxu0
      %v764 = vadd.f32 0.0, %v763
      %v765 = vpop.f32.mrf.mxu0
      %v766 = vadd.f32 0.0, %v765
      %767 = vmatmul.bf16.gmra.mxu0 %v739
      %v768 = vpop.f32.mrf.mxu0
      %v769 = vadd.f32 0.0, %v768
      %v770 = vpop.f32.mrf.mxu0
      %v771 = vadd.f32 0.0, %v770
      %772 = vdwg.mxu0
      %v773 = vadd.f32 %v706, %v754
      %v774 = vadd.f32 %v707, %v756
      %v775 = vadd.f32 %v708, %v759
      %v776 = vadd.f32 %v709, %v761
      %v777 = vadd.f32 %v710, %v764
      %v778 = vadd.f32 %v711, %v766
      %v779 = vadd.f32 %v712, %v769
      %v780 = vadd.f32 %v713, %v771
      %v781 = vld [vmem:[%s714 + $0x1] sm:$0xff]
      %v782 = vld [vmem:[%s714 + $0x11] sm:$0xff]
      %v783 = vld [vmem:[%s714 + $0x21] sm:$0xff]
      %v784 = vld [vmem:[%s714 + $0x31] sm:$0xff]
      %v785 = vld [vmem:[%s714 + $0x41] sm:$0xff]
      %v786 = vld [vmem:[%s714 + $0x51] sm:$0xff]
      %v787 = vld [vmem:[%s714 + $0x61] sm:$0xff]
      %v788 = vld [vmem:[%s714 + $0x71] sm:$0xff]
      %v789 = vpack.c.bf16 %v782, %v781
      %v790 = vpack.c.bf16 %v784, %v783
      %v791 = vpack.c.bf16 %v786, %v785
      %v792 = vpack.c.bf16 %v788, %v787
      %s793 = scalar_lea.vmem %s1, 14
      %v794 = vld [vmem:[%s793] sm:$0x3]
      %v796 = vsel %vm303, %v789, 0
      %v799 = vsel %vm303, %v790, 0
      %v802 = vsel %vm303, %v791, 0
      %v805 = vsel %vm303, %v792, 0
      %v808 = vsel %vm373, %v794, 0
      %810 = vmatpush.bf16.msra.mxu0 0
      %811 = vmatpush.bf16.msra.mxu0 0
      %812 = vmatpush.bf16.msra.mxu0 0
      %813 = vmatpush.bf16.msra.mxu0 0
      %814 = vmatpush.bf16.msra.mxu0 0
      %815 = vmatpush.bf16.msra.mxu0 0
      %816 = vmatpush.bf16.msra.mxu0 0
      %817 = vmatpush.bf16.msra.mxu0 %v808
      %818 = vmatmul.bf16.gmra.mxu0 %v796
      %v819 = vpop.f32.mrf.mxu0
      %v820 = vadd.f32 0.0, %v819
      %v821 = vpop.f32.mrf.mxu0
      %v822 = vadd.f32 0.0, %v821
      %823 = vmatmul.bf16.gmra.mxu0 %v799
      %v824 = vpop.f32.mrf.mxu0
      %v825 = vadd.f32 0.0, %v824
      %v826 = vpop.f32.mrf.mxu0
      %v827 = vadd.f32 0.0, %v826
      %828 = vmatmul.bf16.gmra.mxu0 %v802
      %v829 = vpop.f32.mrf.mxu0
      %v830 = vadd.f32 0.0, %v829
      %v831 = vpop.f32.mrf.mxu0
      %v832 = vadd.f32 0.0, %v831
      %833 = vmatmul.bf16.gmra.mxu0 %v805
      %v834 = vpop.f32.mrf.mxu0
      %v835 = vadd.f32 0.0, %v834
      %v836 = vpop.f32.mrf.mxu0
      %v837 = vadd.f32 0.0, %v836
      %838 = vdwg.mxu0
      %v839 = vadd.f32 %v773, %v820
      %v840 = vadd.f32 %v774, %v822
      %v841 = vadd.f32 %v775, %v825
      %v842 = vadd.f32 %v776, %v827
      %v843 = vadd.f32 %v777, %v830
      %v844 = vadd.f32 %v778, %v832
      %v845 = vadd.f32 %v779, %v835
      %v846 = vadd.f32 %v780, %v837
      %v847 = vld [vmem:[%s714 + $0x2] sm:$0xff]
      %v848 = vld [vmem:[%s714 + $0x12] sm:$0xff]
      %v849 = vld [vmem:[%s714 + $0x22] sm:$0xff]
      %v850 = vld [vmem:[%s714 + $0x32] sm:$0xff]
      %v851 = vld [vmem:[%s714 + $0x42] sm:$0xff]
      %v852 = vld [vmem:[%s714 + $0x52] sm:$0xff]
      %v853 = vld [vmem:[%s714 + $0x62] sm:$0xff]
      %v854 = vld [vmem:[%s714 + $0x72] sm:$0xff]
      %v855 = vpack.c.bf16 %v848, %v847
      %v856 = vpack.c.bf16 %v850, %v849
      %v857 = vpack.c.bf16 %v852, %v851
      %v858 = vpack.c.bf16 %v854, %v853
      %s859 = scalar_lea.vmem %s1, 16
      %v860 = vld [vmem:[%s859] sm:$0x3]
      %v862 = vsel %vm303, %v855, 0
      %v865 = vsel %vm303, %v856, 0
      %v868 = vsel %vm303, %v857, 0
      %v871 = vsel %vm303, %v858, 0
      %v874 = vsel %vm373, %v860, 0
      %876 = vmatpush.bf16.msra.mxu0 0
      %877 = vmatpush.bf16.msra.mxu0 0
      %878 = vmatpush.bf16.msra.mxu0 0
      %879 = vmatpush.bf16.msra.mxu0 0
      %880 = vmatpush.bf16.msra.mxu0 0
      %881 = vmatpush.bf16.msra.mxu0 0
      %882 = vmatpush.bf16.msra.mxu0 0
      %883 = vmatpush.bf16.msra.mxu0 %v874
      %884 = vmatmul.bf16.gmra.mxu0 %v862
      %v885 = vpop.f32.mrf.mxu0
      %v886 = vadd.f32 0.0, %v885
      %v887 = vpop.f32.mrf.mxu0
      %v888 = vadd.f32 0.0, %v887
      %889 = vmatmul.bf16.gmra.mxu0 %v865
      %v890 = vpop.f32.mrf.mxu0
      %v891 = vadd.f32 0.0, %v890
      %v892 = vpop.f32.mrf.mxu0
      %v893 = vadd.f32 0.0, %v892
      %894 = vmatmul.bf16.gmra.mxu0 %v868
      %v895 = vpop.f32.mrf.mxu0
      %v896 = vadd.f32 0.0, %v895
      %v897 = vpop.f32.mrf.mxu0
      %v898 = vadd.f32 0.0, %v897
      %899 = vmatmul.bf16.gmra.mxu0 %v871
      %v900 = vpop.f32.mrf.mxu0
      %v901 = vadd.f32 0.0, %v900
      %v902 = vpop.f32.mrf.mxu0
      %v903 = vadd.f32 0.0, %v902
      %904 = vdwg.mxu0
      %v905 = vadd.f32 %v839, %v886
      %v906 = vadd.f32 %v840, %v888
      %v907 = vadd.f32 %v841, %v891
      %v908 = vadd.f32 %v842, %v893
      %v909 = vadd.f32 %v843, %v896
      %v910 = vadd.f32 %v844, %v898
      %v911 = vadd.f32 %v845, %v901
      %v912 = vadd.f32 %v846, %v903
      %vm913 = vcmask 64512
      %914 = vst.msk [vmem:[%s208] sm:$0xff] %vm913, %v905
      %915 = vst.msk [vmem:[%s208 + $0x8] sm:$0xff] %vm913, %v906
      %916 = vst.msk [vmem:[%s208 + $0x10] sm:$0xff] %vm913, %v907
      %917 = vst.msk [vmem:[%s208 + $0x18] sm:$0xff] %vm913, %v908
      %918 = vst.msk [vmem:[%s208 + $0x20] sm:$0xff] %vm913, %v909
      %919 = vst.msk [vmem:[%s208 + $0x28] sm:$0xff] %vm913, %v910
      %920 = vst.msk [vmem:[%s208 + $0x30] sm:$0xff] %vm913, %v911
      %921 = vst.msk [vmem:[%s208 + $0x38] sm:$0xff] %vm913, %v912
      %v922 = vsel %vm913, %v905, 0.0
      %v923 = vsel %vm913, %v906, 0.0
      %v924 = vadd.f32 %v922, %v923
      %v925 = vsel %vm913, %v907, 0.0
      %v926 = vadd.f32 %v924, %v925
      %v927 = vsel %vm913, %v908, 0.0
      %v928 = vadd.f32 %v926, %v927
      %v929 = vsel %vm913, %v909, 0.0
      %v930 = vadd.f32 %v928, %v929
      %v931 = vsel %vm913, %v910, 0.0
      %v932 = vadd.f32 %v930, %v931
      %v933 = vsel %vm913, %v911, 0.0
      %v934 = vadd.f32 %v932, %v933
      %v935 = vsel %vm913, %v912, 0.0
      %v936 = vadd.f32 %v934, %v935
      %v937 = vrot.slane %v936, 4
      %v938 = vadd.f32 %v936, %v937
      %v939 = vrot.slane %v938, 2
      %v940 = vadd.f32 %v938, %v939
      %v941 = vrot.slane %v940, 1
      %v942 = vadd.f32 %v940, %v941
      %vm943 = vcmask 57344
      %944 = vst.msk [vmem:[%s211] sm:$0x1] %vm943, %v942
      %v945 = vmul.f32 %v905, %v905
      %v946 = vmul.f32 %v906, %v906
      %v947 = vmul.f32 %v907, %v907
      %v948 = vmul.f32 %v908, %v908
      %v949 = vmul.f32 %v909, %v909
      %v950 = vmul.f32 %v910, %v910
      %v951 = vmul.f32 %v911, %v911
      %v952 = vmul.f32 %v912, %v912
      %v953 = vsel %vm913, %v945, 0.0
      %v954 = vsel %vm913, %v946, 0.0
      %v955 = vadd.f32 %v953, %v954
      %v956 = vsel %vm913, %v947, 0.0
      %v957 = vadd.f32 %v955, %v956
      %v958 = vsel %vm913, %v948, 0.0
      %v959 = vadd.f32 %v957, %v958
      %v960 = vsel %vm913, %v949, 0.0
      %v961 = vadd.f32 %v959, %v960
      %v962 = vsel %vm913, %v950, 0.0
      %v963 = vadd.f32 %v961, %v962
      %v964 = vsel %vm913, %v951, 0.0
      %v965 = vadd.f32 %v963, %v964
      %v966 = vsel %vm913, %v952, 0.0
      %v967 = vadd.f32 %v965, %v966
      %v968 = vrot.slane %v967, 4
      %v969 = vadd.f32 %v967, %v968
      %v970 = vrot.slane %v969, 2
      %v971 = vadd.f32 %v969, %v970
      %v972 = vrot.slane %v971, 1
      %v973 = vadd.f32 %v971, %v972
      %974 = vst.msk [vmem:[%s214] sm:$0x1] %vm943, %v973
      %p975 = scmp.lt.s32.totalorder %s16, 1
      %s976 = scalar_select %p975, %s16, 1
      %s977 = smul.addr %s976, 8
      %s978 = smul.addr %s977, 8
      %s979 = scalar_lea.vmem %s2, %s978
      %p980 = scmp.lt.s32.totalorder %s16, 1
      %s981 = scalar_select %p980, %s16, 1
      %s982 = scalar_lea.vmem %s3, %s981
      %p983 = scmp.lt.s32.totalorder %s16, 1
      %s984 = scalar_select %p983, %s16, 1
      %s985 = scalar_lea.vmem %s4, %s984
      // Predicated region
      $region29: #{down_forward.3} parent=27 // pred_check
        %p986 = pneg %p81
      $region30: #{down_forward.3} parent=27 // pred_check_branch
        %988 = sbr.rel (%p986) target = $region32
      $region31: #{down_forward.3} parent=27 // pred_region
        _
      $region32: #{down_forward.3} parent=27 // pred_fallthru
        _
      // Predicated region
      $region33: #{down_forward.3} parent=27 // pred_check
        %p989 = pneg %p107
      $region34: #{down_forward.3} parent=27 // pred_check_branch
        %991 = sbr.rel (%p989) target = $region36
      $region35: #{down_forward.3} parent=27 // pred_region
        _
      $region36: #{down_forward.3} parent=27 // pred_fallthru
        _
      // Predicated region
      $region37: #{down_forward.3} parent=27 // pred_check
        %p992 = pneg %p133
      $region38: #{down_forward.3} parent=27 // pred_check_branch
        %994 = sbr.rel (%p992) target = $region40
      $region39: #{down_forward.3} parent=27 // pred_region
        _
      $region40: #{down_forward.3} parent=27 // pred_fallthru
        _
    $region28: #{down_forward.3} parent=5 // pred_fallthru
      _
    %p995 = scmp.le.s32.totalorder 2, %s11
    // Predicated region
    $region41: #{down_forward.3} parent=5 // pred_check
      %p996 = pneg %p995
    $region42: #{down_forward.3} parent=5 // pred_check_branch
      %998 = sbr.rel (%p996) target = $region44
    $region43: #{down_forward.3} parent=5 // pred_region
      %s999 = ssub.s32 %s11, 2
      // Predicated region
      $region45: #{down_forward.3} parent=43 // pred_check
        %p1000 = pneg %p87
      $region46: #{down_forward.3} parent=43 // pred_check_branch
        %1002 = sbr.rel (%p1000) target = $region48
      $region47: #{down_forward.3} parent=43 // pred_region
        %p1003 = scmp.lt.s32.totalorder %s17, 1
        %s1004 = scalar_select %p1003, %s17, 1
        %s1005 = smul.addr %s1004, 8
        %s1006 = smul.addr %s1005, 8
        %s1007 = scalar_lea.vmem %s2, %s1006
      $region48: #{down_forward.3} parent=43 // pred_fallthru
        _
      // Predicated region
      $region49: #{down_forward.3} parent=43 // pred_check
        %p1008 = pneg %p113
      $region50: #{down_forward.3} parent=43 // pred_check_branch
        %1010 = sbr.rel (%p1008) target = $region52
      $region51: #{down_forward.3} parent=43 // pred_region
        %p1011 = scmp.lt.s32.totalorder %s17, 1
        %s1012 = scalar_select %p1011, %s17, 1
        %s1013 = scalar_lea.vmem %s3, %s1012
      $region52: #{down_forward.3} parent=43 // pred_fallthru
        _
      // Predicated region
      $region53: #{down_forward.3} parent=43 // pred_check
        %p1014 = pneg %p139
      $region54: #{down_forward.3} parent=43 // pred_check_branch
        %1016 = sbr.rel (%p1014) target = $region56
      $region55: #{down_forward.3} parent=43 // pred_region
        %p1017 = scmp.lt.s32.totalorder %s17, 1
        %s1018 = scalar_select %p1017, %s17, 1
        %s1019 = scalar_lea.vmem %s4, %s1018
      $region56: #{down_forward.3} parent=43 // pred_fallthru
        _
    $region44: #{down_forward.3} parent=5 // pred_fallthru
      _
  $region6: #{down_forward.3} parent=0 // loop_footer
    %s15 = sadd.s32 1, %s11
  $region7: #{down_forward.3} parent=0 // loop_footer_branch
    %10 = sbr.rel target = $region3
  $region8: #{down_forward.3} parent=0 // loop_exit
    _

// kernel: down_forward.4
$region0: #{down_forward.4}
  #allocation0 [shape = 'u32[]', space=smem, size = 0x4, offset = 0x4, fixed_abs, tag = 'smem constant byte address 0x4 - core index']
  #allocation1 [shape = 'u32[72,128]{1,0:T(1,128)}', space=vmem, size = 0x9000, scoped, tag = 'internal scratch']
  #allocation2 [shape = 'f32[1,10,10,8]{3,2,1,0:T(8,128)}', space=vmem, size = 0x14000, scoped, tag = 'scratch operand']
  %s0 = inlined_call_operand.vmem [shape: f32[2,8,8,8], index: 0, kind: input, shape index: {}]
  %s1 = inlined_call_operand.vmem [shape: f32[2,1,8], index: 1, kind: input, shape index: {}]
  %s2 = inlined_call_operand.vmem [shape: f32[2,1,8], index: 2, kind: input, shape index: {}]
  %s3 = inlined_call_operand.vmem [shape: f32[1,8], index: 3, kind: input, shape index: {}]
  %s4 = inlined_call_operand.vmem [shape: f32[1,8], index: 4, kind: input, shape index: {}]
  %s5 = inlined_call_operand.vmem [shape: bf16[9,8,8], index: 5, kind: input, shape index: {}]
  %s6 = inlined_call_operand.vmem [shape: f32[2,8,8,8], index: 6, kind: output, shape index: {0}]
  %s7 = inlined_call_operand.vmem [shape: f32[2,1,8], index: 7, kind: output, shape index: {1}]
  %s8 = inlined_call_operand.vmem [shape: f32[2,1,8], index: 8, kind: output, shape index: {2}]
  %9 = xla_tuple %s6, %s7, %s8
  %s10 = sld [smem:[#allocation0]]
  $region73: #{down_forward.4} parent=0
    _
  %s12 = ssub.s32 1, %s10
  %s13 = scalar_select 0, %s12, %s10
  loop: start=0, step=1, limit=4
  $region2: #{down_forward.4} parent=0 // loop_pre_header
    _
  $region3: #{down_forward.4} parent=0 // loop_header
    %s15 = sphi 0, %s19
    %p16 = scmp.ge.s32.totalorder %s15, 4
    %s25 = sphi 0, %s27
    %s28 = sphi 0, %s25
    %s29 = sphi 0, %s28
    %s45 = sphi 0, %s29
    %s49 = sphi 0, %s49
    %s51 = sphi 0, %s49
    %s52 = sphi 0, %s51
    %s66 = sphi 0, %s52
    %s70 = sphi 0, %s70
    %s72 = sphi 0, %s70
    %s73 = sphi 0, %s72
    %s87 = sphi 0, %s73
    %s91 = sphi 0, %s91
    %s93 = sphi 0, %s91
    %s94 = sphi 0, %s93
    %s108 = sphi 0, %s94
    %s112 = sphi 0, %s112
    %s114 = sphi 0, %s112
    %s115 = sphi 0, %s114
    %s129 = sphi 0, %s115
    %s133 = sphi 0, %s133
    %s135 = sphi 0, %s133
    %s136 = sphi 0, %s135
    %s150 = sphi 0, %s136
    %s156 = sphi 0, %s158
    %s159 = sphi 0, %s156
    %s160 = sphi 0, %s159
    %s176 = sphi 0, %s160
    %s182 = sphi 0, %s184
    %s185 = sphi 0, %s182
    %s186 = sphi 0, %s185
    %s202 = sphi 0, %s186
    %s208 = sphi 0, %s210
    %s211 = sphi 0, %s208
    %s212 = sphi 0, %s211
    %s228 = sphi 0, %s212
  $region4: #{down_forward.4} parent=0 // loop_header_branch
    %18 = sbr.rel (%p16) target = $region8
  $region5: #{down_forward.4} parent=0 // loop_body
    %s20 = ssub.s32 %s15, 1
    %s21 = ssub.s32 %s15, 2
    %s22 = sadd.s32 %s15, 1
    %s23 = ssub.s32 %s15, %s22
    %p24 = scmp.eq.s32.totalorder %s23, 0
    %s26 = sadd.s32 %s25, 1
    %s27 = scalar_select %p24, %s25, %s26
    %p30 = pneg %p24
    %p31 = scmp.eq.s32.totalorder %s15, 1
    %p32 = por %p30, %p31
    %p33 = scmp.ne.s32.totalorder %s25, %s28
    %p34 = scmp.eq.s32.totalorder %s15, 0
    %p35 = por %p33, %p34
    %p36 = scmp.ne.s32.totalorder %s25, %s28
    %p37 = scmp.eq.s32.totalorder %s20, 1
    %p38 = por %p36, %p37
    %p39 = scmp.ne.s32.totalorder %s28, %s29
    %p40 = scmp.eq.s32.totalorder %s20, 0
    %p41 = por %p39, %p40
    %p42 = scmp.ne.s32.totalorder %s28, %s29
    %p43 = scmp.eq.s32.totalorder %s21, 1
    %p44 = por %p42, %p43
    %p46 = scmp.ne.s32.totalorder %s29, %s45
    %p47 = scmp.eq.s32.totalorder %s21, 0
    %p48 = por %p46, %p47
    %s50 = sadd.s32 %s49, 1
    %p53 = scmp.eq.s32.totalorder %s15, 1
    %p54 = scmp.ne.s32.totalorder %s49, %s51
    %p55 = scmp.eq.s32.totalorder %s15, 0
    %p56 = por %p54, %p55
    %p57 = scmp.ne.s32.totalorder %s49, %s51
    %p58 = scmp.eq.s32.totalorder %s20, 1
    %p59 = por %p57, %p58
    %p60 = scmp.ne.s32.totalorder %s51, %s52
    %p61 = scmp.eq.s32.totalorder %s20, 0
    %p62 = por %p60, %p61
    %p63 = scmp.ne.s32.totalorder %s51, %s52
    %p64 = scmp.eq.s32.totalorder %s21, 1
    %p65 = por %p63, %p64
    %p67 = scmp.ne.s32.totalorder %s52, %s66
    %p68 = scmp.eq.s32.totalorder %s21, 0
    %p69 = por %p67, %p68
    %s71 = sadd.s32 %s70, 1
    %p74 = scmp.eq.s32.totalorder %s15, 1
    %p75 = scmp.ne.s32.totalorder %s70, %s72
    %p76 = scmp.eq.s32.totalorder %s15, 0
    %p77 = por %p75, %p76
    %p78 = scmp.ne.s32.totalorder %s70, %s72
    %p79 = scmp.eq.s32.totalorder %s20, 1
    %p80 = por %p78, %p79
    %p81 = scmp.ne.s32.totalorder %s72, %s73
    %p82 = scmp.eq.s32.totalorder %s20, 0
    %p83 = por %p81, %p82
    %p84 = scmp.ne.s32.totalorder %s72, %s73
    %p85 = scmp.eq.s32.totalorder %s21, 1
    %p86 = por %p84, %p85
    %p88 = scmp.ne.s32.totalorder %s73, %s87
    %p89 = scmp.eq.s32.totalorder %s21, 0
    %p90 = por %p88, %p89
    %s92 = sadd.s32 %s91, 1
    %p95 = scmp.eq.s32.totalorder %s15, 1
    %p96 = scmp.ne.s32.totalorder %s91, %s93
    %p97 = scmp.eq.s32.totalorder %s15, 0
    %p98 = por %p96, %p97
    %p99 = scmp.ne.s32.totalorder %s91, %s93
    %p100 = scmp.eq.s32.totalorder %s20, 1
    %p101 = por %p99, %p100
    %p102 = scmp.ne.s32.totalorder %s93, %s94
    %p103 = scmp.eq.s32.totalorder %s20, 0
    %p104 = por %p102, %p103
    %p105 = scmp.ne.s32.totalorder %s93, %s94
    %p106 = scmp.eq.s32.totalorder %s21, 1
    %p107 = por %p105, %p106
    %p109 = scmp.ne.s32.totalorder %s94, %s108
    %p110 = scmp.eq.s32.totalorder %s21, 0
    %p111 = por %p109, %p110
    %s113 = sadd.s32 %s112, 1
    %p116 = scmp.eq.s32.totalorder %s15, 1
    %p117 = scmp.ne.s32.totalorder %s112, %s114
    %p118 = scmp.eq.s32.totalorder %s15, 0
    %p119 = por %p117, %p118
    %p120 = scmp.ne.s32.totalorder %s112, %s114
    %p121 = scmp.eq.s32.totalorder %s20, 1
    %p122 = por %p120, %p121
    %p123 = scmp.ne.s32.totalorder %s114, %s115
    %p124 = scmp.eq.s32.totalorder %s20, 0
    %p125 = por %p123, %p124
    %p126 = scmp.ne.s32.totalorder %s114, %s115
    %p127 = scmp.eq.s32.totalorder %s21, 1
    %p128 = por %p126, %p127
    %p130 = scmp.ne.s32.totalorder %s115, %s129
    %p131 = scmp.eq.s32.totalorder %s21, 0
    %p132 = por %p130, %p131
    %s134 = sadd.s32 %s133, 1
    %p137 = scmp.eq.s32.totalorder %s15, 1
    %p138 = scmp.ne.s32.totalorder %s133, %s135
    %p139 = scmp.eq.s32.totalorder %s15, 0
    %p140 = por %p138, %p139
    %p141 = scmp.ne.s32.totalorder %s133, %s135
    %p142 = scmp.eq.s32.totalorder %s20, 1
    %p143 = por %p141, %p142
    %p144 = scmp.ne.s32.totalorder %s135, %s136
    %p145 = scmp.eq.s32.totalorder %s20, 0
    %p146 = por %p144, %p145
    %p147 = scmp.ne.s32.totalorder %s135, %s136
    %p148 = scmp.eq.s32.totalorder %s21, 1
    %p149 = por %p147, %p148
    %p151 = scmp.ne.s32.totalorder %s136, %s150
    %p152 = scmp.eq.s32.totalorder %s21, 0
    %p153 = por %p151, %p152
    %s154 = ssub.s32 %s15, %s22
    %p155 = scmp.eq.s32.totalorder %s154, 0
    %s157 = sadd.s32 %s156, 1
    %s158 = scalar_select %p155, %s156, %s157
    %p161 = pneg %p155
    %p162 = scmp.eq.s32.totalorder %s15, 1
    %p163 = por %p161, %p162
    %p164 = scmp.ne.s32.totalorder %s156, %s159
    %p165 = scmp.eq.s32.totalorder %s15, 0
    %p166 = por %p164, %p165
    %p167 = scmp.ne.s32.totalorder %s156, %s159
    %p168 = scmp.eq.s32.totalorder %s20, 1
    %p169 = por %p167, %p168
    %p170 = scmp.ne.s32.totalorder %s159, %s160
    %p171 = scmp.eq.s32.totalorder %s20, 0
    %p172 = por %p170, %p171
    %p173 = scmp.ne.s32.totalorder %s159, %s160
    %p174 = scmp.eq.s32.totalorder %s21, 1
    %p175 = por %p173, %p174
    %p177 = scmp.ne.s32.totalorder %s160, %s176
    %p178 = scmp.eq.s32.totalorder %s21, 0
    %p179 = por %p177, %p178
    %s180 = ssub.s32 %s15, %s22
    %p181 = scmp.eq.s32.totalorder %s180, 0
    %s183 = sadd.s32 %s182, 1
    %s184 = scalar_select %p181, %s182, %s183
    %p187 = pneg %p181
    %p188 = scmp.eq.s32.totalorder %s15, 1
    %p189 = por %p187, %p188
    %p190 = scmp.ne.s32.totalorder %s182, %s185
    %p191 = scmp.eq.s32.totalorder %s15, 0
    %p192 = por %p190, %p191
    %p193 = scmp.ne.s32.totalorder %s182, %s185
    %p194 = scmp.eq.s32.totalorder %s20, 1
    %p195 = por %p193, %p194
    %p196 = scmp.ne.s32.totalorder %s185, %s186
    %p197 = scmp.eq.s32.totalorder %s20, 0
    %p198 = por %p196, %p197
    %p199 = scmp.ne.s32.totalorder %s185, %s186
    %p200 = scmp.eq.s32.totalorder %s21, 1
    %p201 = por %p199, %p200
    %p203 = scmp.ne.s32.totalorder %s186, %s202
    %p204 = scmp.eq.s32.totalorder %s21, 0
    %p205 = por %p203, %p204
    %s206 = ssub.s32 %s15, %s22
    %p207 = scmp.eq.s32.totalorder %s206, 0
    %s209 = sadd.s32 %s208, 1
    %s210 = scalar_select %p207, %s208, %s209
    %p213 = pneg %p207
    %p214 = scmp.eq.s32.totalorder %s15, 1
    %p215 = por %p213, %p214
    %p216 = scmp.ne.s32.totalorder %s208, %s211
    %p217 = scmp.eq.s32.totalorder %s15, 0
    %p218 = por %p216, %p217
    %p219 = scmp.ne.s32.totalorder %s208, %s211
    %p220 = scmp.eq.s32.totalorder %s20, 1
    %p221 = por %p219, %p220
    %p222 = scmp.ne.s32.totalorder %s211, %s212
    %p223 = scmp.eq.s32.totalorder %s20, 0
    %p224 = por %p222, %p223
    %p225 = scmp.ne.s32.totalorder %s211, %s212
    %p226 = scmp.eq.s32.totalorder %s21, 1
    %p227 = por %p225, %p226
    %p229 = scmp.ne.s32.totalorder %s212, %s228
    %p230 = scmp.eq.s32.totalorder %s21, 0
    %p231 = por %p229, %p230
    %p232 = scmp.le.s32.totalorder 1, %s15
    %p233 = scmp.lt.s32.totalorder %s15, 3
    %p234 = pnand %p232, %p233
    %p235 = pneg %p234
    // Predicated region
    $region9: #{down_forward.4} parent=5 // pred_check
      _
    $region10: #{down_forward.4} parent=5 // pred_check_branch
      %237 = sbr.rel (%p234) target = $region12
    $region11: #{down_forward.4} parent=5 // pred_region
      %s238 = ssub.s32 %s15, 1
      // Predicated region
      $region13: #{down_forward.4} parent=11 // pred_check
        %p239 = pneg %p62
      $region14: #{down_forward.4} parent=11 // pred_check_branch
        %241 = sbr.rel (%p239) target = $region16
      $region15: #{down_forward.4} parent=11 // pred_region
        _
      $region16: #{down_forward.4} parent=11 // pred_fallthru
        _
      // Predicated region
      $region17: #{down_forward.4} parent=11 // pred_check
        %p242 = pneg %p83
      $region18: #{down_forward.4} parent=11 // pred_check_branch
        %244 = sbr.rel (%p242) target = $region20
      $region19: #{down_forward.4} parent=11 // pred_region
        _
      $region20: #{down_forward.4} parent=11 // pred_fallthru
        _
      // Predicated region
      $region21: #{down_forward.4} parent=11 // pred_check
        %p245 = pneg %p104
      $region22: #{down_forward.4} parent=11 // pred_check_branch
        %247 = sbr.rel (%p245) target = $region24
      $region23: #{down_forward.4} parent=11 // pred_region
        _
      $region24: #{down_forward.4} parent=11 // pred_fallthru
        _
      // Predicated region
      $region25: #{down_forward.4} parent=11 // pred_check
        %p248 = pneg %p125
      $region26: #{down_forward.4} parent=11 // pred_check_branch
        %250 = sbr.rel (%p248) target = $region28
      $region27: #{down_forward.4} parent=11 // pred_region
        _
      $region28: #{down_forward.4} parent=11 // pred_fallthru
        _
      // Predicated region
      $region29: #{down_forward.4} parent=11 // pred_check
        %p251 = pneg %p146
      $region30: #{down_forward.4} parent=11 // pred_check_branch
        %253 = sbr.rel (%p251) target = $region32
      $region31: #{down_forward.4} parent=11 // pred_region
        _
      $region32: #{down_forward.4} parent=11 // pred_fallthru
        _
    $region12: #{down_forward.4} parent=5 // pred_fallthru
      _
    %p254 = scmp.lt.s32.totalorder %s15, 2
    // Predicated region
    $region33: #{down_forward.4} parent=5 // pred_check
      %p255 = pneg %p254
    $region34: #{down_forward.4} parent=5 // pred_check_branch
      %257 = sbr.rel (%p255) target = $region36
    $region35: #{down_forward.4} parent=5 // pred_region
      // Predicated region
      $region37: #{down_forward.4} parent=35 // pred_check
        %p258 = pneg %p35
      $region38: #{down_forward.4} parent=35 // pred_check_branch
        %260 = sbr.rel (%p258) target = $region40
      $region39: #{down_forward.4} parent=35 // pred_region
        %p261 = scmp.lt.s32.totalorder %s15, 1
        %s262 = scalar_select %p261, %s15, 1
        %s263 = smul.addr %s262, 8
        %s264 = smul.addr %s263, 8
        %s265 = scalar_lea.vmem %s0, %s264
      $region40: #{down_forward.4} parent=35 // pred_fallthru
        _
    $region36: #{down_forward.4} parent=5 // pred_fallthru
      _
    %p266 = scmp.le.s32.totalorder 1, %s15
    %p267 = scmp.lt.s32.totalorder %s15, 3
    %p268 = pnand %p266, %p267
    %p269 = pneg %p268
    // Predicated region
    $region41: #{down_forward.4} parent=5 // pred_check
      _
    $region42: #{down_forward.4} parent=5 // pred_check_branch
      %271 = sbr.rel (%p268) target = $region44
    $region43: #{down_forward.4} parent=5 // pred_region
      %s272 = ssub.s32 %s15, 1
      %p273 = scmp.lt.s32.totalorder %s20, 1
      %s274 = scalar_select %p273, %s20, 1
      %s275 = smul.addr %s274, 8
      %s276 = smul.addr %s275, 8
      %s277 = scalar_lea.vmem %s0, %s276
      %p278 = pneg %p41
      %p279 = pneg %p38
      %p280 = pneg %p62
      %p281 = pneg %p59
      %p282 = pneg %p83
      %p283 = pneg %p80
      %p284 = pneg %p104
      %p285 = pneg %p101
      %p286 = pneg %p125
      %p287 = pneg %p122
      %p288 = pneg %p146
      %p289 = pneg %p143
      %p290 = pneg %p172
      %p291 = pneg %p169
      %p292 = scmp.lt.s32.totalorder %s20, 1
      %s293 = scalar_select %p292, %s20, 1
      %s294 = smul.addr %s293, 8
      %s295 = smul.addr %s294, 8
      %s296 = scalar_lea.vmem %s6, %s295
      %p297 = pneg %p198
      %p298 = pneg %p195
      %p299 = scmp.lt.s32.totalorder %s20, 1
      %s300 = scalar_select %p299, %s20, 1
      %s301 = scalar_lea.vmem %s7, %s300
      %p302 = pneg %p224
      %p303 = pneg %p221
      %p304 = scmp.lt.s32.totalorder %s20, 1
      %s305 = scalar_select %p304, %s20, 1
      %s306 = scalar_lea.vmem %s8, %s305
      %p307 = scmp.lt.s32.totalorder %s20, 1
      %s308 = scalar_select %p307, %s20, 1
      %s309 = smul.addr %s308, 8
      %s310 = smul.addr %s309, 8
      %s311 = scalar_lea.vmem %s0, %s310
      %p312 = scmp.lt.s32.totalorder %s20, 1
      %s313 = scalar_select %p312, %s20, 1
      %s314 = smul.addr %s313, 8
      %s315 = smul.addr %s314, 8
      %s316 = scalar_lea.vmem %s6, %s315
      %p317 = scmp.lt.s32.totalorder %s20, 1
      %s318 = scalar_select %p317, %s20, 1
      %s319 = scalar_lea.vmem %s7, %s318
      %p320 = scmp.lt.s32.totalorder %s20, 1
      %s321 = scalar_select %p320, %s20, 1
      %s322 = scalar_lea.vmem %s8, %s321
      %v324 = vld [vmem:[%s1] sm:$0x1]
      %v325 = vld [vmem:[%s1 + $0x1] sm:$0x1]
      %vm326 = vcmask 57344
      %v327 = vsel %vm326, %v324, 0.0
      %v328 = vsel %vm326, %v325, 0.0
      %v329 = vadd.f32 %v327, %v328
      %v330 = vmul.f32 %v329, 0.0078125
      %v331 = vld [vmem:[%s2] sm:$0x1]
      %v332 = vld [vmem:[%s2 + $0x1] sm:$0x1]
      %v333 = vsel %vm326, %v331, 0.0
      %v334 = vsel %vm326, %v332, 0.0
      %v335 = vadd.f32 %v333, %v334
      %v336 = vmul.f32 %v335, 0.0078125
      %v337 = vmul.f32 %v330, %v330
      %v338 = vsub.f32 %v336, %v337
      %v339 = vmax.f32 %v338, 0.0
      %v340 = vld [vmem:[%s3] sm:$0x1]
      %v341 = vadd.f32 %v339, 1e-05
      %v342 = vrsqrt.pop %v341
      %v343 = vmul.f32 %v342, %v341
      %v344 = vmul.f32 %v343, %v342
      %v345 = vmul.f32 0.5, %v344
      %v346 = vsub.f32 1.5, %v345
      %v347 = vmul.f32 %v342, %v346
      %vm348 = vweird.f32 %v341
      %vm349 = vweird.f32 %v342
      %vm350 = vmor %vm348, %vm349
      %v351 = vsel %vm350, %v342, %v347
      %v352 = vmul.f32 %v340, %v351
      %v353 = vld [vmem:[%s4] sm:$0x1]
      %v354 = vmul.f32 %v330, %v352
      %v355 = vsub.f32 %v353, %v354
      %v356 = vld [vmem:[%s311] sm:$0xff]
      %v357 = vld [vmem:[%s311 + $0x8] sm:$0xff]
      %v358 = vld [vmem:[%s311 + $0x10] sm:$0xff]
      %v359 = vld [vmem:[%s311 + $0x18] sm:$0xff]
      %v360 = vld [vmem:[%s311 + $0x20] sm:$0xff]
      %v361 = vld [vmem:[%s311 + $0x28] sm:$0xff]
      %v362 = vld [vmem:[%s311 + $0x30] sm:$0xff]
      %v363 = vld [vmem:[%s311 + $0x38] sm:$0xff]
      %v365 = vperm.slane %v352, 0
      %v367 = vmul.f32 %v356, %v365
      %v368 = vmul.f32 %v357, %v365
      %v369 = vmul.f32 %v358, %v365
      %v370 = vmul.f32 %v359, %v365
      %v371 = vmul.f32 %v360, %v365
      %v372 = vmul.f32 %v361, %v365
      %v373 = vmul.f32 %v362, %v365
      %v374 = vmul.f32 %v363, %v365
      %v376 = vperm.slane %v355, 0
      %v378 = vadd.f32 %v367, %v376
      %v379 = vadd.f32 %v368, %v376
      %v380 = vadd.f32 %v369, %v376
      %v381 = vadd.f32 %v370, %v376
      %v382 = vadd.f32 %v371, %v376
      %v383 = vadd.f32 %v372, %v376
      %v384 = vadd.f32 %v373, %v376
      %v385 = vadd.f32 %v374, %v376
      %v386 = vmax.f32 %v378, 0.0
      %v387 = vmax.f32 %v379, 0.0
      %v388 = vmax.f32 %v380, 0.0
      %v389 = vmax.f32 %v381, 0.0
      %v390 = vmax.f32 %v382, 0.0
      %v391 = vmax.f32 %v383, 0.0
      %v392 = vmax.f32 %v384, 0.0
      %v393 = vmax.f32 %v385, 0.0
      %vm394 = vcmask 64512
      %395 = vst.msk [vmem:[#allocation2] sm:$0xff] %vm394, 0.0
      %vm396 = vcmask 58368
      %397 = vst.msk [vmem:[#allocation2 + $0x8] sm:$0x3] %vm396, 0.0
      %398 = vst.msk [vmem:[#allocation2 + $0x10] sm:$0xff] %vm394, 0.0
      %399 = vst.msk [vmem:[#allocation2 + $0x18] sm:$0x3] %vm396, 0.0
      %400 = vst.msk [vmem:[#allocation2 + $0x20] sm:$0xff] %vm394, 0.0
      %401 = vst.msk [vmem:[#allocation2 + $0x28] sm:$0x3] %vm396, 0.0
      %402 = vst.msk [vmem:[#allocation2 + $0x30] sm:$0xff] %vm394, 0.0
      %403 = vst.msk [vmem:[#allocation2 + $0x38] sm:$0x3] %vm396, 0.0
      %404 = vst.msk [vmem:[#allocation2 + $0x40] sm:$0xff] %vm394, 0.0
      %405 = vst.msk [vmem:[#allocation2 + $0x48] sm:$0x3] %vm396, 0.0
      %406 = vst.msk [vmem:[#allocation2 + $0x50] sm:$0xff] %vm394, 0.0
      %407 = vst.msk [vmem:[#allocation2 + $0x58] sm:$0x3] %vm396, 0.0
      %408 = vst.msk [vmem:[#allocation2 + $0x60] sm:$0xff] %vm394, 0.0
      %409 = vst.msk [vmem:[#allocation2 + $0x68] sm:$0x3] %vm396, 0.0
      %410 = vst.msk [vmem:[#allocation2 + $0x70] sm:$0xff] %vm394, 0.0
      %411 = vst.msk [vmem:[#allocation2 + $0x78] sm:$0x3] %vm396, 0.0
      %412 = vst.msk [vmem:[#allocation2 + $0x80] sm:$0xff] %vm394, 0.0
      %413 = vst.msk [vmem:[#allocation2 + $0x88] sm:$0x3] %vm396, 0.0
      %414 = vst.msk [vmem:[#allocation2 + $0x90] sm:$0xff] %vm394, 0.0
      %415 = vst.msk [vmem:[#allocation2 + $0x98] sm:$0x3] %vm396, 0.0
      %s416 = scalar_lea.vmem [#allocation2], 16
      %417 = vst.msk [vmem:[%s416 + $0x1] sm:$0xff] %vm394, %v386
      %418 = vst.msk [vmem:[%s416 + $0x11] sm:$0xff] %vm394, %v387
      %419 = vst.msk [vmem:[%s416 + $0x21] sm:$0xff] %vm394, %v388
      %420 = vst.msk [vmem:[%s416 + $0x31] sm:$0xff] %vm394, %v389
      %421 = vst.msk [vmem:[%s416 + $0x41] sm:$0xff] %vm394, %v390
      %422 = vst.msk [vmem:[%s416 + $0x51] sm:$0xff] %vm394, %v391
      %423 = vst.msk [vmem:[%s416 + $0x61] sm:$0xff] %vm394, %v392
      %424 = vst.msk [vmem:[%s416 + $0x71] sm:$0xff] %vm394, %v393
      %v425 = vld [vmem:[#allocation2] sm:$0xff]
      %v426 = vld [vmem:[#allocation2 + $0x10] sm:$0xff]
      %v427 = vld [vmem:[#allocation2 + $0x20] sm:$0xff]
      %v428 = vld [vmem:[#allocation2 + $0x30] sm:$0xff]
      %v429 = vld [vmem:[#allocation2 + $0x40] sm:$0xff]
      %v430 = vld [vmem:[#allocation2 + $0x50] sm:$0xff]
      %v431 = vld [vmem:[#allocation2 + $0x60] sm:$0xff]
      %v432 = vld [vmem:[#allocation2 + $0x70] sm:$0xff]
      %v433 = vpack.c.bf16 %v426, %v425
      %v434 = vpack.c.bf16 %v428, %v427
      %v435 = vpack.c.bf16 %v430, %v429
      %v436 = vpack.c.bf16 %v432, %v431
      %v437 = vld [vmem:[%s5] sm:$0xf]
      %v438 = vld [vmem:[#allocation2 + $0x1] sm:$0xff]
      %v439 = vld [vmem:[#allocation2 + $0x11] sm:$0xff]
      %v440 = vld [vmem:[#allocation2 + $0x21] sm:$0xff]
      %v441 = vld [vmem:[#allocation2 + $0x31] sm:$0xff]
      %v442 = vld [vmem:[#allocation2 + $0x41] sm:$0xff]
      %v443 = vld [vmem:[#allocation2 + $0x51] sm:$0xff]
      %v444 = vld [vmem:[#allocation2 + $0x61] sm:$0xff]
      %v445 = vld [vmem:[#allocation2 + $0x71] sm:$0xff]
      %v446 = vpack.c.bf16 %v439, %v438
      %v447 = vpack.c.bf16 %v441, %v440
      %v448 = vpack.c.bf16 %v443, %v442
      %v449 = vpack.c.bf16 %v445, %v444
      %s450 = scalar_lea.vmem %s5, 4
      %v451 = vld [vmem:[%s450] sm:$0xf]
      %v453 = vsel %vm394, %v446, 0
      %v456 = vsel %vm394, %v447, 0
      %v459 = vsel %vm394, %v448, 0
      %v462 = vsel %vm394, %v449, 0
      %vm464 = vcmask 1043456
      %v466 = vsel %vm464, %v451, 0
      %468 = vmatpush.bf16.msra.mxu0 0
      %469 = vmatpush.bf16.msra.mxu0 0
      %470 = vmatpush.bf16.msra.mxu0 0
      %471 = vmatpush.bf16.msra.mxu0 0
      %472 = vmatpush.bf16.msra.mxu0 0
      %473 = vmatpush.bf16.msra.mxu0 0
      %474 = vmatpush.bf16.msra.mxu0 0
      %475 = vmatpush.bf16.msra.mxu0 %v466
      %476 = vmatmul.bf16.gmra.mxu0 %v453
      %v477 = vpop.f32.mrf.mxu0
      %v478 = vadd.f32 0.0, %v477
      %v479 = vpop.f32.mrf.mxu0
      %v480 = vadd.f32 0.0, %v479
      %481 = vmatmul.bf16.gmra.mxu0 %v456
      %v482 = vpop.f32.mrf.mxu0
      %v483 = vadd.f32 0.0, %v482
      %v484 = vpop.f32.mrf.mxu0
      %v485 = vadd.f32 0.0, %v484
      %486 = vmatmul.bf16.gmra.mxu0 %v459
      %v487 = vpop.f32.mrf.mxu0
      %v488 = vadd.f32 0.0, %v487
      %v489 = vpop.f32.mrf.mxu0
      %v490 = vadd.f32 0.0, %v489
      %491 = vmatmul.bf16.gmra.mxu0 %v462
      %v492 = vpop.f32.mrf.mxu0
      %v493 = vadd.f32 0.0, %v492
      %v494 = vpop.f32.mrf.mxu0
      %v495 = vadd.f32 0.0, %v494
      %496 = vdwg.mxu0
      %v498 = vsel %vm394, %v433, 0
      %v501 = vsel %vm394, %v434, 0
      %v504 = vsel %vm394, %v435, 0
      %v507 = vsel %vm394, %v436, 0
      %v510 = vsel %vm464, %v437, 0
      %512 = vmatpush.bf16.msra.mxu0 0
      %513 = vmatpush.bf16.msra.mxu0 0
      %514 = vmatpush.bf16.msra.mxu0 0
      %515 = vmatpush.bf16.msra.mxu0 0
      %516 = vmatpush.bf16.msra.mxu0 0
      %517 = vmatpush.bf16.msra.mxu0 0
      %518 = vmatpush.bf16.msra.mxu0 0
      %519 = vmatpush.bf16.msra.mxu0 %v510
      %520 = vmatmul.bf16.gmra.mxu0 %v498
      %v521 = vpop.f32.mrf.mxu0
      %v522 = vadd.f32 %v478, %v521
      %v523 = vpop.f32.mrf.mxu0
      %v524 = vadd.f32 %v480, %v523
      %525 = vmatmul.bf16.gmra.mxu0 %v501
      %v526 = vpop.f32.mrf.mxu0
      %v527 = vadd.f32 %v483, %v526
      %v528 = vpop.f32.mrf.mxu0
      %v529 = vadd.f32 %v485, %v528
      %530 = vmatmul.bf16.gmra.mxu0 %v504
      %v531 = vpop.f32.mrf.mxu0
      %v532 = vadd.f32 %v488, %v531
      %v533 = vpop.f32.mrf.mxu0
      %v534 = vadd.f32 %v490, %v533
      %535 = vmatmul.bf16.gmra.mxu0 %v507
      %v536 = vpop.f32.mrf.mxu0
      %v537 = vadd.f32 %v493, %v536
      %v538 = vpop.f32.mrf.mxu0
      %v539 = vadd.f32 %v495, %v538
      %540 = vdwg.mxu0
      %v541 = vld [vmem:[#allocation2 + $0x2] sm:$0xff]
      %v542 = vld [vmem:[#allocation2 + $0x12] sm:$0xff]
      %v543 = vld [vmem:[#allocation2 + $0x22] sm:$0xff]
      %v544 = vld [vmem:[#allocation2 + $0x32] sm:$0xff]
      %v545 = vld [vmem:[#allocation2 + $0x42] sm:$0xff]
      %v546 = vld [vmem:[#allocation2 + $0x52] sm:$0xff]
      %v547 = vld [vmem:[#allocation2 + $0x62] sm:$0xff]
      %v548 = vld [vmem:[#allocation2 + $0x72] sm:$0xff]
      %v549 = vpack.c.bf16 %v542, %v541
      %v550 = vpack.c.bf16 %v544, %v543
      %v551 = vpack.c.bf16 %v546, %v545
      %v552 = vpack.c.bf16 %v548, %v547
      %s553 = scalar_lea.vmem %s5, 8
      %v554 = vld [vmem:[%s553] sm:$0xf]
      %v556 = vsel %vm394, %v549, 0
      %v559 = vsel %vm394, %v550, 0
      %v562 = vsel %vm394, %v551, 0
      %v565 = vsel %vm394, %v552, 0
      %v568 = vsel %vm464, %v554, 0
      %570 = vmatpush.bf16.msra.mxu0 0
      %571 = vmatpush.bf16.msra.mxu0 0
      %572 = vmatpush.bf16.msra.mxu0 0
      %573 = vmatpush.bf16.msra.mxu0 0
      %574 = vmatpush.bf16.msra.mxu0 0
      %575 = vmatpush.bf16.msra.mxu0 0
      %576 = vmatpush.bf16.msra.mxu0 0
      %577 = vmatpush.bf16.msra.mxu0 %v568
      %578 = vmatmul.bf16.gmra.mxu0 %v556
      %v579 = vpop.f32.mrf.mxu0
      %v580 = vadd.f32 0.0, %v579
      %v581 = vpop.f32.mrf.mxu0
      %v582 = vadd.f32 0.0, %v581
      %583 = vmatmul.bf16.gmra.mxu0 %v559
      %v584 = vpop.f32.mrf.mxu0
      %v585 = vadd.f32 0.0, %v584
      %v586 = vpop.f32.mrf.mxu0
      %v587 = vadd.f32 0.0, %v586
      %588 = vmatmul.bf16.gmra.mxu0 %v562
      %v589 = vpop.f32.mrf.mxu0
      %v590 = vadd.f32 0.0, %v589
      %v591 = vpop.f32.mrf.mxu0
      %v592 = vadd.f32 0.0, %v591
      %593 = vmatmul.bf16.gmra.mxu0 %v565
      %v594 = vpop.f32.mrf.mxu0
      %v595 = vadd.f32 0.0, %v594
      %v596 = vpop.f32.mrf.mxu0
      %v597 = vadd.f32 0.0, %v596
      %598 = vdwg.mxu0
      %v599 = vadd.f32 %v522, %v580
      %v600 = vadd.f32 %v524, %v582
      %v601 = vadd.f32 %v527, %v585
      %v602 = vadd.f32 %v529, %v587
      %v603 = vadd.f32 %v532, %v590
      %v604 = vadd.f32 %v534, %v592
      %v605 = vadd.f32 %v537, %v595
      %v606 = vadd.f32 %v539, %v597
      %v607 = vld [vmem:[%s416] sm:$0xff]
      %v608 = vld [vmem:[%s416 + $0x10] sm:$0xff]
      %v609 = vld [vmem:[%s416 + $0x20] sm:$0xff]
      %v610 = vld [vmem:[%s416 + $0x30] sm:$0xff]
      %v611 = vld [vmem:[%s416 + $0x40] sm:$0xff]
      %v612 = vld [vmem:[%s416 + $0x50] sm:$0xff]
      %v613 = vld [vmem:[%s416 + $0x60] sm:$0xff]
      %v614 = vld [vmem:[%s416 + $0x70] sm:$0xff]
      %v615 = vpack.c.bf16 %v608, %v607
      %v616 = vpack.c.bf16 %v610, %v609
      %v617 = vpack.c.bf16 %v612, %v611
      %v618 = vpack.c.bf16 %v614, %v613
      %s619 = scalar_lea.vmem %s5, 12
      %v620 = vld [vmem:[%s619] sm:$0xf]
      %v622 = vsel %vm394, %v615, 0
      %v625 = vsel %vm394, %v616, 0
      %v628 = vsel %vm394, %v617, 0
      %v631 = vsel %vm394, %v618, 0
      %v634 = vsel %vm464, %v620, 0
      %636 = vmatpush.bf16.msra.mxu0 0
      %637 = vmatpush.bf16.msra.mxu0 0
      %638 = vmatpush.bf16.msra.mxu0 0
      %639 = vmatpush.bf16.msra.mxu0 0
      %640 = vmatpush.bf16.msra.mxu0 0
      %641 = vmatpush.bf16.msra.mxu0 0
      %642 = vmatpush.bf16.msra.mxu0 0
      %643 = vmatpush.bf16.msra.mxu0 %v634
      %644 = vmatmul.bf16.gmra.mxu0 %v622
      %v645 = vpop.f32.mrf.mxu0
      %v646 = vadd.f32 0.0, %v645
      %v647 = vpop.f32.mrf.mxu0
      %v648 = vadd.f32 0.0, %v647
      %649 = vmatmul.bf16.gmra.mxu0 %v625
      %v650 = vpop.f32.mrf.mxu0
      %v651 = vadd.f32 0.0, %v650
      %v652 = vpop.f32.mrf.mxu0
      %v653 = vadd.f32 0.0, %v652
      %654 = vmatmul.bf16.gmra.mxu0 %v628
      %v655 = vpop.f32.mrf.mxu0
      %v656 = vadd.f32 0.0, %v655
      %v657 = vpop.f32.mrf.mxu0
      %v658 = vadd.f32 0.0, %v657
      %659 = vmatmul.bf16.gmra.mxu0 %v631
      %v660 = vpop.f32.mrf.mxu0
      %v661 = vadd.f32 0.0, %v660
      %v662 = vpop.f32.mrf.mxu0
      %v663 = vadd.f32 0.0, %v662
      %664 = vdwg.mxu0
      %v665 = vadd.f32 %v599, %v646
      %v666 = vadd.f32 %v600, %v648
      %v667 = vadd.f32 %v601, %v651
      %v668 = vadd.f32 %v602, %v653
      %v669 = vadd.f32 %v603, %v656
      %v670 = vadd.f32 %v604, %v658
      %v671 = vadd.f32 %v605, %v661
      %v672 = vadd.f32 %v606, %v663
      %v673 = vld [vmem:[%s416 + $0x1] sm:$0xff]
      %v674 = vld [vmem:[%s416 + $0x11] sm:$0xff]
      %v675 = vld [vmem:[%s416 + $0x21] sm:$0xff]
      %v676 = vld [vmem:[%s416 + $0x31] sm:$0xff]
      %v677 = vld [vmem:[%s416 + $0x41] sm:$0xff]
      %v678 = vld [vmem:[%s416 + $0x51] sm:$0xff]
      %v679 = vld [vmem:[%s416 + $0x61] sm:$0xff]
      %v680 = vld [vmem:[%s416 + $0x71] sm:$0xff]
      %v681 = vpack.c.bf16 %v674, %v673
      %v682 = vpack.c.bf16 %v676, %v675
      %v683 = vpack.c.bf16 %v678, %v677
      %v684 = vpack.c.bf16 %v680, %v679
      %s685 = scalar_lea.vmem %s5, 16
      %v686 = vld [vmem:[%s685] sm:$0xf]
      %v688 = vsel %vm394, %v681, 0
      %v691 = vsel %vm394, %v682, 0
      %v694 = vsel %vm394, %v683, 0
      %v697 = vsel %vm394, %v684, 0
      %v700 = vsel %vm464, %v686, 0
      %702 = vmatpush.bf16.msra.mxu0 0
      %703 = vmatpush.bf16.msra.mxu0 0
      %704 = vmatpush.bf16.msra.mxu0 0
      %705 = vmatpush.bf16.msra.mxu0 0
      %706 = vmatpush.bf16.msra.mxu0 0
      %707 = vmatpush.bf16.msra.mxu0 0
      %708 = vmatpush.bf16.msra.mxu0 0
      %709 = vmatpush.bf16.msra.mxu0 %v700
      %710 = vmatmul.bf16.gmra.mxu0 %v688
      %v711 = vpop.f32.mrf.mxu0
      %v712 = vadd.f32 0.0, %v711
      %v713 = vpop.f32.mrf.mxu0
      %v714 = vadd.f32 0.0, %v713
      %715 = vmatmul.bf16.gmra.mxu0 %v691
      %v716 = vpop.f32.mrf.mxu0
      %v717 = vadd.f32 0.0, %v716
      %v718 = vpop.f32.mrf.mxu0
      %v719 = vadd.f32 0.0, %v718
      %720 = vmatmul.bf16.gmra.mxu0 %v694
      %v721 = vpop.f32.mrf.mxu0
      %v722 = vadd.f32 0.0, %v721
      %v723 = vpop.f32.mrf.mxu0
      %v724 = vadd.f32 0.0, %v723
      %725 = vmatmul.bf16.gmra.mxu0 %v697
      %v726 = vpop.f32.mrf.mxu0
      %v727 = vadd.f32 0.0, %v726
      %v728 = vpop.f32.mrf.mxu0
      %v729 = vadd.f32 0.0, %v728
      %730 = vdwg.mxu0
      %v731 = vadd.f32 %v665, %v712
      %v732 = vadd.f32 %v666, %v714
      %v733 = vadd.f32 %v667, %v717
      %v734 = vadd.f32 %v668, %v719
      %v735 = vadd.f32 %v669, %v722
      %v736 = vadd.f32 %v670, %v724
      %v737 = vadd.f32 %v671, %v727
      %v738 = vadd.f32 %v672, %v729
      %v739 = vld [vmem:[%s416 + $0x2] sm:$0xff]
      %v740 = vld [vmem:[%s416 + $0x12] sm:$0xff]
      %v741 = vld [vmem:[%s416 + $0x22] sm:$0xff]
      %v742 = vld [vmem:[%s416 + $0x32] sm:$0xff]
      %v743 = vld [vmem:[%s416 + $0x42] sm:$0xff]
      %v744 = vld [vmem:[%s416 + $0x52] sm:$0xff]
      %v745 = vld [vmem:[%s416 + $0x62] sm:$0xff]
      %v746 = vld [vmem:[%s416 + $0x72] sm:$0xff]
      %v747 = vpack.c.bf16 %v740, %v739
      %v748 = vpack.c.bf16 %v742, %v741
      %v749 = vpack.c.bf16 %v744, %v743
      %v750 = vpack.c.bf16 %v746, %v745
      %s751 = scalar_lea.vmem %s5, 20
      %v752 = vld [vmem:[%s751] sm:$0xf]
      %v754 = vsel %vm394, %v747, 0
      %v757 = vsel %vm394, %v748, 0
      %v760 = vsel %vm394, %v749, 0
      %v763 = vsel %vm394, %v750, 0
      %v766 = vsel %vm464, %v752, 0
      %768 = vmatpush.bf16.msra.mxu0 0
      %769 = vmatpush.bf16.msra.mxu0 0
      %770 = vmatpush.bf16.msra.mxu0 0
      %771 = vmatpush.bf16.msra.mxu0 0
      %772 = vmatpush.bf16.msra.mxu0 0
      %773 = vmatpush.bf16.msra.mxu0 0
      %774 = vmatpush.bf16.msra.mxu0 0
      %775 = vmatpush.bf16.msra.mxu0 %v766
      %776 = vmatmul.bf16.gmra.mxu0 %v754
      %v777 = vpop.f32.mrf.mxu0
      %v778 = vadd.f32 0.0, %v777
      %v779 = vpop.f32.mrf.mxu0
      %v780 = vadd.f32 0.0, %v779
      %781 = vmatmul.bf16.gmra.mxu0 %v757
      %v782 = vpop.f32.mrf.mxu0
      %v783 = vadd.f32 0.0, %v782
      %v784 = vpop.f32.mrf.mxu0
      %v785 = vadd.f32 0.0, %v784
      %786 = vmatmul.bf16.gmra.mxu0 %v760
      %v787 = vpop.f32.mrf.mxu0
      %v788 = vadd.f32 0.0, %v787
      %v789 = vpop.f32.mrf.mxu0
      %v790 = vadd.f32 0.0, %v789
      %791 = vmatmul.bf16.gmra.mxu0 %v763
      %v792 = vpop.f32.mrf.mxu0
      %v793 = vadd.f32 0.0, %v792
      %v794 = vpop.f32.mrf.mxu0
      %v795 = vadd.f32 0.0, %v794
      %796 = vdwg.mxu0
      %v797 = vadd.f32 %v731, %v778
      %v798 = vadd.f32 %v732, %v780
      %v799 = vadd.f32 %v733, %v783
      %v800 = vadd.f32 %v734, %v785
      %v801 = vadd.f32 %v735, %v788
      %v802 = vadd.f32 %v736, %v790
      %v803 = vadd.f32 %v737, %v793
      %v804 = vadd.f32 %v738, %v795
      %s805 = scalar_lea.vmem [#allocation2], 32
      %v806 = vld [vmem:[%s805] sm:$0xff]
      %v807 = vld [vmem:[%s805 + $0x10] sm:$0xff]
      %v808 = vld [vmem:[%s805 + $0x20] sm:$0xff]
      %v809 = vld [vmem:[%s805 + $0x30] sm:$0xff]
      %v810 = vld [vmem:[%s805 + $0x40] sm:$0xff]
      %v811 = vld [vmem:[%s805 + $0x50] sm:$0xff]
      %v812 = vld [vmem:[%s805 + $0x60] sm:$0xff]
      %v813 = vld [vmem:[%s805 + $0x70] sm:$0xff]
      %v814 = vpack.c.bf16 %v807, %v806
      %v815 = vpack.c.bf16 %v809, %v808
      %v816 = vpack.c.bf16 %v811, %v810
      %v817 = vpack.c.bf16 %v813, %v812
      %s818 = scalar_lea.vmem %s5, 24
      %v819 = vld [vmem:[%s818] sm:$0xf]
      %v821 = vsel %vm394, %v814, 0
      %v824 = vsel %vm394, %v815, 0
      %v827 = vsel %vm394, %v816, 0
      %v830 = vsel %vm394, %v817, 0
      %v833 = vsel %vm464, %v819, 0
      %835 = vmatpush.bf16.msra.mxu0 0
      %836 = vmatpush.bf16.msra.mxu0 0
      %837 = vmatpush.bf16.msra.mxu0 0
      %838 = vmatpush.bf16.msra.mxu0 0
      %839 = vmatpush.bf16.msra.mxu0 0
      %840 = vmatpush.bf16.msra.mxu0 0
      %841 = vmatpush.bf16.msra.mxu0 0
      %842 = vmatpush.bf16.msra.mxu0 %v833
      %843 = vmatmul.bf16.gmra.mxu0 %v821
      %v844 = vpop.f32.mrf.mxu0
      %v845 = vadd.f32 0.0, %v844
      %v846 = vpop.f32.mrf.mxu0
      %v847 = vadd.f32 0.0, %v846
      %848 = vmatmul.bf16.gmra.mxu0 %v824
      %v849 = vpop.f32.mrf.mxu0
      %v850 = vadd.f32 0.0, %v849
      %v851 = vpop.f32.mrf.mxu0
      %v852 = vadd.f32 0.0, %v851
      %853 = vmatmul.bf16.gmra.mxu0 %v827
      %v854 = vpop.f32.mrf.mxu0
      %v855 = vadd.f32 0.0, %v854
      %v856 = vpop.f32.mrf.mxu0
      %v857 = vadd.f32 0.0, %v856
      %858 = vmatmul.bf16.gmra.mxu0 %v830
      %v859 = vpop.f32.mrf.mxu0
      %v860 = vadd.f32 0.0, %v859
      %v861 = vpop.f32.mrf.mxu0
      %v862 = vadd.f32 0.0, %v861
      %863 = vdwg.mxu0
      %v864 = vadd.f32 %v797, %v845
      %v865 = vadd.f32 %v798, %v847
      %v866 = vadd.f32 %v799, %v850
      %v867 = vadd.f32 %v800, %v852
      %v868 = vadd.f32 %v801, %v855
      %v869 = vadd.f32 %v802, %v857
      %v870 = vadd.f32 %v803, %v860
      %v871 = vadd.f32 %v804, %v862
      %v872 = vld [vmem:[%s805 + $0x1] sm:$0xff]
      %v873 = vld [vmem:[%s805 + $0x11] sm:$0xff]
      %v874 = vld [vmem:[%s805 + $0x21] sm:$0xff]
      %v875 = vld [vmem:[%s805 + $0x31] sm:$0xff]
      %v876 = vld [vmem:[%s805 + $0x41] sm:$0xff]
      %v877 = vld [vmem:[%s805 + $0x51] sm:$0xff]
      %v878 = vld [vmem:[%s805 + $0x61] sm:$0xff]
      %v879 = vld [vmem:[%s805 + $0x71] sm:$0xff]
      %v880 = vpack.c.bf16 %v873, %v872
      %v881 = vpack.c.bf16 %v875, %v874
      %v882 = vpack.c.bf16 %v877, %v876
      %v883 = vpack.c.bf16 %v879, %v878
      %s884 = scalar_lea.vmem %s5, 28
      %v885 = vld [vmem:[%s884] sm:$0xf]
      %v887 = vsel %vm394, %v880, 0
      %v890 = vsel %vm394, %v881, 0
      %v893 = vsel %vm394, %v882, 0
      %v896 = vsel %vm394, %v883, 0
      %v899 = vsel %vm464, %v885, 0
      %901 = vmatpush.bf16.msra.mxu0 0
      %902 = vmatpush.bf16.msra.mxu0 0
      %903 = vmatpush.bf16.msra.mxu0 0
      %904 = vmatpush.bf16.msra.mxu0 0
      %905 = vmatpush.bf16.msra.mxu0 0
      %906 = vmatpush.bf16.msra.mxu0 0
      %907 = vmatpush.bf16.msra.mxu0 0
      %908 = vmatpush.bf16.msra.mxu0 %v899
      %909 = vmatmul.bf16.gmra.mxu0 %v887
      %v910 = vpop.f32.mrf.mxu0
      %v911 = vadd.f32 0.0, %v910
      %v912 = vpop.f32.mrf.mxu0
      %v913 = vadd.f32 0.0, %v912
      %914 = vmatmul.bf16.gmra.mxu0 %v890
      %v915 = vpop.f32.mrf.mxu0
      %v916 = vadd.f32 0.0, %v915
      %v917 = vpop.f32.mrf.mxu0
      %v918 = vadd.f32 0.0, %v917
      %919 = vmatmul.bf16.gmra.mxu0 %v893
      %v920 = vpop.f32.mrf.mxu0
      %v921 = vadd.f32 0.0, %v920
      %v922 = vpop.f32.mrf.mxu0
      %v923 = vadd.f32 0.0, %v922
      %924 = vmatmul.bf16.gmra.mxu0 %v896
      %v925 = vpop.f32.mrf.mxu0
      %v926 = vadd.f32 0.0, %v925
      %v927 = vpop.f32.mrf.mxu0
      %v928 = vadd.f32 0.0, %v927
      %929 = vdwg.mxu0
      %v930 = vadd.f32 %v864, %v911
      %v931 = vadd.f32 %v865, %v913
      %v932 = vadd.f32 %v866, %v916
      %v933 = vadd.f32 %v867, %v918
      %v934 = vadd.f32 %v868, %v921
      %v935 = vadd.f32 %v869, %v923
      %v936 = vadd.f32 %v870, %v926
      %v937 = vadd.f32 %v871, %v928
      %v938 = vld [vmem:[%s805 + $0x2] sm:$0xff]
      %v939 = vld [vmem:[%s805 + $0x12] sm:$0xff]
      %v940 = vld [vmem:[%s805 + $0x22] sm:$0xff]
      %v941 = vld [vmem:[%s805 + $0x32] sm:$0xff]
      %v942 = vld [vmem:[%s805 + $0x42] sm:$0xff]
      %v943 = vld [vmem:[%s805 + $0x52] sm:$0xff]
      %v944 = vld [vmem:[%s805 + $0x62] sm:$0xff]
      %v945 = vld [vmem:[%s805 + $0x72] sm:$0xff]
      %v946 = vpack.c.bf16 %v939, %v938
      %v947 = vpack.c.bf16 %v941, %v940
      %v948 = vpack.c.bf16 %v943, %v942
      %v949 = vpack.c.bf16 %v945, %v944
      %s950 = scalar_lea.vmem %s5, 32
      %v951 = vld [vmem:[%s950] sm:$0xf]
      %v953 = vsel %vm394, %v946, 0
      %v956 = vsel %vm394, %v947, 0
      %v959 = vsel %vm394, %v948, 0
      %v962 = vsel %vm394, %v949, 0
      %v965 = vsel %vm464, %v951, 0
      %967 = vmatpush.bf16.msra.mxu0 0
      %968 = vmatpush.bf16.msra.mxu0 0
      %969 = vmatpush.bf16.msra.mxu0 0
      %970 = vmatpush.bf16.msra.mxu0 0
      %971 = vmatpush.bf16.msra.mxu0 0
      %972 = vmatpush.bf16.msra.mxu0 0
      %973 = vmatpush.bf16.msra.mxu0 0
      %974 = vmatpush.bf16.msra.mxu0 %v965
      %975 = vmatmul.bf16.gmra.mxu0 %v953
      %v976 = vpop.f32.mrf.mxu0
      %v977 = vadd.f32 0.0, %v976
      %v978 = vpop.f32.mrf.mxu0
      %v979 = vadd.f32 0.0, %v978
      %980 = vmatmul.bf16.gmra.mxu0 %v956
      %v981 = vpop.f32.mrf.mxu0
      %v982 = vadd.f32 0.0, %v981
      %v983 = vpop.f32.mrf.mxu0
      %v984 = vadd.f32 0.0, %v983
      %985 = vmatmul.bf16.gmra.mxu0 %v959
      %v986 = vpop.f32.mrf.mxu0
      %v987 = vadd.f32 0.0, %v986
      %v988 = vpop.f32.mrf.mxu0
      %v989 = vadd.f32 0.0, %v988
      %990 = vmatmul.bf16.gmra.mxu0 %v962
      %v991 = vpop.f32.mrf.mxu0
      %v992 = vadd.f32 0.0, %v991
      %v993 = vpop.f32.mrf.mxu0
      %v994 = vadd.f32 0.0, %v993
      %995 = vdwg.mxu0
      %v996 = vadd.f32 %v930, %v977
      %v997 = vadd.f32 %v931, %v979
      %v998 = vadd.f32 %v932, %v982
      %v999 = vadd.f32 %v933, %v984
      %v1000 = vadd.f32 %v934, %v987
      %v1001 = vadd.f32 %v935, %v989
      %v1002 = vadd.f32 %v936, %v992
      %v1003 = vadd.f32 %v937, %v994
      %1004 = vst.msk [vmem:[%s316] sm:$0xff] %vm394, %v996
      %1005 = vst.msk [vmem:[%s316 + $0x8] sm:$0xff] %vm394, %v997
      %1006 = vst.msk [vmem:[%s316 + $0x10] sm:$0xff] %vm394, %v998
      %1007 = vst.msk [vmem:[%s316 + $0x18] sm:$0xff] %vm394, %v999
      %1008 = vst.msk [vmem:[%s316 + $0x20] sm:$0xff] %vm394, %v1000
      %1009 = vst.msk [vmem:[%s316 + $0x28] sm:$0xff] %vm394, %v1001
      %1010 = vst.msk [vmem:[%s316 + $0x30] sm:$0xff] %vm394, %v1002
      %1011 = vst.msk [vmem:[%s316 + $0x38] sm:$0xff] %vm394, %v1003
      %v1012 = vsel %vm394, %v996, 0.0
      %v1013 = vsel %vm394, %v997, 0.0
      %v1014 = vadd.f32 %v1012, %v1013
      %v1015 = vsel %vm394, %v998, 0.0
      %v1016 = vadd.f32 %v1014, %v1015
      %v1017 = vsel %vm394, %v999, 0.0
      %v1018 = vadd.f32 %v1016, %v1017
      %v1019 = vsel %vm394, %v1000, 0.0
      %v1020 = vadd.f32 %v1018, %v1019
      %v1021 = vsel %vm394, %v1001, 0.0
      %v1022 = vadd.f32 %v1020, %v1021
      %v1023 = vsel %vm394, %v1002, 0.0
      %v1024 = vadd.f32 %v1022, %v1023
      %v1025 = vsel %vm394, %v1003, 0.0
      %v1026 = vadd.f32 %v1024, %v1025
      %v1027 = vrot.slane %v1026, 4
      %v1028 = vadd.f32 %v1026, %v1027
      %v1029 = vrot.slane %v1028, 2
      %v1030 = vadd.f32 %v1028, %v1029
      %v1031 = vrot.slane %v1030, 1
      %v1032 = vadd.f32 %v1030, %v1031
      %1033 = vst.msk [vmem:[%s319] sm:$0x1] %vm326, %v1032
      %v1034 = vmul.f32 %v996, %v996
      %v1035 = vmul.f32 %v997, %v997
      %v1036 = vmul.f32 %v998, %v998
      %v1037 = vmul.f32 %v999, %v999
      %v1038 = vmul.f32 %v1000, %v1000
      %v1039 = vmul.f32 %v1001, %v1001
      %v1040 = vmul.f32 %v1002, %v1002
      %v1041 = vmul.f32 %v1003, %v1003
      %v1042 = vsel %vm394, %v1034, 0.0
      %v1043 = vsel %vm394, %v1035, 0.0
      %v1044 = vadd.f32 %v1042, %v1043
      %v1045 = vsel %vm394, %v1036, 0.0
      %v1046 = vadd.f32 %v1044, %v1045
      %v1047 = vsel %vm394, %v1037, 0.0
      %v1048 = vadd.f32 %v1046, %v1047
      %v1049 = vsel %vm394, %v1038, 0.0
      %v1050 = vadd.f32 %v1048, %v1049
      %v1051 = vsel %vm394, %v1039, 0.0
      %v1052 = vadd.f32 %v1050, %v1051
      %v1053 = vsel %vm394, %v1040, 0.0
      %v1054 = vadd.f32 %v1052, %v1053
      %v1055 = vsel %vm394, %v1041, 0.0
      %v1056 = vadd.f32 %v1054, %v1055
      %v1057 = vrot.slane %v1056, 4
      %v1058 = vadd.f32 %v1056, %v1057
      %v1059 = vrot.slane %v1058, 2
      %v1060 = vadd.f32 %v1058, %v1059
      %v1061 = vrot.slane %v1060, 1
      %v1062 = vadd.f32 %v1060, %v1061
      %1063 = vst.msk [vmem:[%s322] sm:$0x1] %vm326, %v1062
      %p1064 = scmp.lt.s32.totalorder %s20, 1
      %s1065 = scalar_select %p1064, %s20, 1
      %s1066 = smul.addr %s1065, 8
      %s1067 = smul.addr %s1066, 8
      %s1068 = scalar_lea.vmem %s6, %s1067
      %p1069 = scmp.lt.s32.totalorder %s20, 1
      %s1070 = scalar_select %p1069, %s20, 1
      %s1071 = scalar_lea.vmem %s7, %s1070
      %p1072 = scmp.lt.s32.totalorder %s20, 1
      %s1073 = scalar_select %p1072, %s20, 1
      %s1074 = scalar_lea.vmem %s8, %s1073
      // Predicated region
      $region45: #{down_forward.4} parent=43 // pred_check
        %p1075 = pneg %p169
      $region46: #{down_forward.4} parent=43 // pred_check_branch
        %1077 = sbr.rel (%p1075) target = $region48
      $region47: #{down_forward.4} parent=43 // pred_region
        _
      $region48: #{down_forward.4} parent=43 // pred_fallthru
        _
      // Predicated region
      $region49: #{down_forward.4} parent=43 // pred_check
        %p1078 = pneg %p195
      $region50: #{down_forward.4} parent=43 // pred_check_branch
        %1080 = sbr.rel (%p1078) target = $region52
      $region51: #{down_forward.4} parent=43 // pred_region
        _
      $region52: #{down_forward.4} parent=43 // pred_fallthru
        _
      // Predicated region
      $region53: #{down_forward.4} parent=43 // pred_check
        %p1081 = pneg %p221
      $region54: #{down_forward.4} parent=43 // pred_check_branch
        %1083 = sbr.rel (%p1081) target = $region56
      $region55: #{down_forward.4} parent=43 // pred_region
        _
      $region56: #{down_forward.4} parent=43 // pred_fallthru
        _
    $region44: #{down_forward.4} parent=5 // pred_fallthru
      _
    %p1084 = scmp.le.s32.totalorder 2, %s15
    // Predicated region
    $region57: #{down_forward.4} parent=5 // pred_check
      %p1085 = pneg %p1084
    $region58: #{down_forward.4} parent=5 // pred_check_branch
      %1087 = sbr.rel (%p1085) target = $region60
    $region59: #{down_forward.4} parent=5 // pred_region
      %s1088 = ssub.s32 %s15, 2
      // Predicated region
      $region61: #{down_forward.4} parent=59 // pred_check
        %p1089 = pneg %p175
      $region62: #{down_forward.4} parent=59 // pred_check_branch
        %1091 = sbr.rel (%p1089) target = $region64
      $region63: #{down_forward.4} parent=59 // pred_region
        %p1092 = scmp.lt.s32.totalorder %s21, 1
        %s1093 = scalar_select %p1092, %s21, 1
        %s1094 = smul.addr %s1093, 8
        %s1095 = smul.addr %s1094, 8
        %s1096 = scalar_lea.vmem %s6, %s1095
      $region64: #{down_forward.4} parent=59 // pred_fallthru
        _
      // Predicated region
      $region65: #{down_forward.4} parent=59 // pred_check
        %p1097 = pneg %p201
      $region66: #{down_forward.4} parent=59 // pred_check_branch
        %1099 = sbr.rel (%p1097) target = $region68
      $region67: #{down_forward.4} parent=59 // pred_region
        %p1100 = scmp.lt.s32.totalorder %s21, 1
        %s1101 = scalar_select %p1100, %s21, 1
        %s1102 = scalar_lea.vmem %s7, %s1101
      $region68: #{down_forward.4} parent=59 // pred_fallthru
        _
      // Predicated region
      $region69: #{down_forward.4} parent=59 // pred_check
        %p1103 = pneg %p227
      $region70: #{down_forward.4} parent=59 // pred_check_branch
        %1105 = sbr.rel (%p1103) target = $region72
      $region71: #{down_forward.4} parent=59 // pred_region
        %p1106 = scmp.lt.s32.totalorder %s21, 1
        %s1107 = scalar_select %p1106, %s21, 1
        %s1108 = scalar_lea.vmem %s8, %s1107
      $region72: #{down_forward.4} parent=59 // pred_fallthru
        _
    $region60: #{down_forward.4} parent=5 // pred_fallthru
      _
  $region6: #{down_forward.4} parent=0 // loop_footer
    %s19 = sadd.s32 1, %s15
  $region7: #{down_forward.4} parent=0 // loop_footer_branch
    %14 = sbr.rel target = $region3
  $region8: #{down_forward.4} parent=0 // loop_exit
    _

</llo_original>
